<compile_context>
chip_gen: v6e
topology: v6e:2x2x1
jax: 0.10.0
libtpu: 0.0.40
codegen_flags: <defaults>
</compile_context>

<pallas_src>
import math
from functools import partial

import jax
import jax.numpy as jnp
import numpy as np
from jax import lax
from jax.experimental import pallas as pl
from jax.experimental.pallas import tpu as pltpu


# ----------------------------- in-kernel math helpers -----------------------------------

def _erf_approx(z):
    # Abramowitz & Stegun 7.1.26 (max abs error ~1.5e-7).
    a1, a2, a3, a4, a5 = 0.254829592, -0.284496736, 1.421413741, -1.453152027, 1.061405429
    p = 0.3275911
    az = jnp.abs(z)
    t = 1.0 / (1.0 + p * az)
    poly = ((((a5 * t + a4) * t + a3) * t + a2) * t + a1) * t
    e = 1.0 - poly * jnp.exp(-az * az)
    return jnp.where(z >= 0, e, -e)


def _gelu_exact(x):
    return 0.5 * x * (1.0 + _erf_approx(x * (1.0 / math.sqrt(2.0))))


def _layer_norm(x, g, b, eps=1e-5):
    mean = jnp.mean(x, axis=-1, keepdims=True)
    var = jnp.mean((x - mean) ** 2, axis=-1, keepdims=True)
    return (x - mean) * lax.rsqrt(var + eps) * g + b


# ----------------------------- the fused kernel ------------------------------------------

def _fused_style_encoder_kernel(
    lengths_ref,   # SMEM (bs_pad,) int32  -- scalar prefetch
    x_ref,         # (BT, S, NF)  bf16     zero token/pad rows + motion frames, one batch tile
    prefix_ref,    # (BT*S, D)    f32      tok+pos for token rows, skel_b+pos elsewhere (pre-tiled)
    skel_w_ref,    # (NF, D)      bf16
    ipw_ref,       # (L, D, 3D)   bf16     fused in_proj weights, stacked over layers
    ow_ref,        # (L, D, D)    bf16     attention out-proj
    w1_ref,        # (L, D, F)    bf16     FFN
    w2_ref,        # (L, F, D)    bf16
    vec_ref,       # (L+1, 8, W)  f32      rows: ipb, ob, g1, b1, bf1, bf2, g2, b2; layer L = gn, bn
    o_ref,         # (1, BT, D)   f32
    *, num_heads, num_layers, num_tokens, b_tile):

    f32, bf16 = jnp.float32, jnp.bfloat16
    BT = b_tile
    S, NF = x_ref.shape[1], x_ref.shape[2]
    D = skel_w_ref.shape[1]
    F = w1_ref.shape[2]
    H = num_heads
    Hd = D // H
    T = num_tokens
    L = num_layers
    R = BT * S
    scale = 1.0 / math.sqrt(Hd)

    # ---- key-padding bias per batch element, built in-kernel from prefetched lengths ----
    # tokens (pos < T) are always valid; frames valid while pos < T + length; seq padding masked.
    base = pl.program_id(0) * BT
    kpos = lax.broadcasted_iota(jnp.int32, (1, S), 1)
    biases = []
    for be in range(BT):
        n_valid = T + lengths_ref[base + be]
        biases.append(jnp.where(kpos < n_valid, 0.0, -1e30).astype(f32))

    # ---- skel embedding + global-motion token + learned positional embedding ----
    # token/pad rows of x are zero -> matmul contributes 0 there; tok values / skel bias /
    # positional embedding are pre-folded into `prefix` (already tiled over the batch tile).
    x = x_ref[...].reshape(R, NF)                                           # bf16 [R, NF]
    xseq = jnp.dot(x, skel_w_ref[...], preferred_element_type=f32) + prefix_ref[...]   # [R, D] f32

    for l in range(L):                            # static unroll (num_layers small)
        vec = vec_ref[l]                          # [8, W] f32
        ipb = vec[0:1, :3 * D]
        ob = vec[1:2, :D]
        g1, b1 = vec[2:3, :D], vec[3:4, :D]
        bf1 = vec[4:5, :F]
        bf2 = vec[5:6, :D]
        g2, b2 = vec[6:7, :D], vec[7:8, :D]

        # ---- fused QKV projection for the whole batch tile (one lane-dense GEMM) ----
        qkv = jnp.dot(xseq.astype(bf16), ipw_ref[l], preferred_element_type=f32) + ipb  # [R, 3D]

        # split heads once per layer (lane slices amortized over the whole tile)
        q_h = [qkv[:, h * Hd:(h + 1) * Hd] for h in range(H)]
        k_h = [qkv[:, D + h * Hd:D + (h + 1) * Hd] for h in range(H)]
        v_h = [qkv[:, 2 * D + h * Hd:2 * D + (h + 1) * Hd] for h in range(H)]

        # ---- attention scores / softmax / PV per batch element (must not mix elements) ----
        ctx_rows = []
        for be in range(BT):
            r0 = be * S
            bias_b = biases[be]                   # [1, S]
            heads = []
            for h in range(H):
                qh = q_h[h][r0:r0 + S, :]         # [S, Hd]  (aligned sublane slice)
                kh = k_h[h][r0:r0 + S, :]
                vh = v_h[h][r0:r0 + S, :]
                s = lax.dot_general(qh, kh, (((1,), (1,)), ((), ())),
                                    preferred_element_type=f32) * scale + bias_b        # [S, S]
                m = jnp.max(s, axis=-1, keepdims=True)
                p = jnp.exp(s - m)
                p = p * pl.reciprocal(jnp.sum(p, axis=-1, keepdims=True), approx=True)
                heads.append(jnp.dot(p, vh, preferred_element_type=f32))                # [S, Hd]
            ctx_rows.append(jnp.concatenate(heads, axis=1))                             # [S, D]
        ctx = jnp.concatenate(ctx_rows, axis=0)                                         # [R, D]

        # ---- single out-projection GEMM over the whole tile ----
        attn = jnp.dot(ctx.astype(bf16), ow_ref[l], preferred_element_type=f32) + ob
        src = _layer_norm(xseq + attn, g1, b1)                                # norm1(src + attn)

        # ---- feed-forward (exact GELU), batched over the tile ----
        ffh = _gelu_exact(jnp.dot(src.astype(bf16), w1_ref[l], preferred_element_type=f32) + bf1)
        ffo = jnp.dot(ffh.astype(bf16), w2_ref[l], preferred_element_type=f32) + bf2
        xseq = _layer_norm(src + ffo, g2, b2)                                 # norm2(src + ff)

    # only dist[0] of each element is returned -> final LayerNorm on those rows only
    rows0 = jnp.concatenate([xseq[be * S:be * S + 1, :] for be in range(BT)], axis=0)    # [BT, D]
    gn, bn = vec_ref[L, 0:1, :D], vec_ref[L, 1:2, :D]
    o_ref[0] = _layer_norm(rows0, gn, bn)


# ----------------------------- forward (one pallas_call) --------------------------------

def style_classification_forward(features, lengths, params, num_heads=4, b_tile=None):
    f32, bf16 = jnp.float32, jnp.bfloat16
    bs, nfeats, njoints, nframes = features.shape
    skel_w = params['skel_w']                            # [nfeats, D]
    D = skel_w.shape[1]
    tok = params['global_motion_token']                  # [T, D]
    T = tok.shape[0]
    L = params['in_proj_w'].shape[0]
    F = params['w1'].shape[-1]

    S = T + nframes * njoints
    S_pad = -(-S // 8) * 8            # pad sequence to a sublane multiple; padded keys get -1e30
    NF_pad = -(-nfeats // 8) * 8

    if b_tile is None:
        b_tile = max(1, min(8, (bs + 1) // 2))   # keep >= 2 grid steps when bs >= 2 (v7x megacore)
    steps = -(-bs // b_tile)
    bs_pad = steps * b_tile

    # ---- wrapper-side layout prep (tiny XLA ops; all math is in-kernel) ----
    x = jnp.transpose(features.astype(f32), (0, 3, 2, 1)).reshape(bs, nframes * njoints, nfeats)
    x = jnp.pad(x, ((0, bs_pad - bs), (T, S_pad - S), (0, NF_pad - nfeats))).astype(bf16)

    lengths_i = jnp.pad(jnp.asarray(lengths, dtype=jnp.int32), (0, bs_pad - bs))

    # prefix rows: tok + pos for token rows, skel bias + pos elsewhere; pre-tiled over the tile
    prefix = jnp.concatenate(
        [tok.astype(f32),
         jnp.broadcast_to(params['skel_b'][None, :], (S_pad - T, D)).astype(f32)], axis=0)
    prefix = prefix + params['query_pos'][:S_pad].astype(f32)
    prefix_tiled = jnp.tile(prefix, (b_tile, 1))                     # [b_tile*S_pad, D]

    # pack the ten tiny per-layer vectors + final norm into one resident f32 slab
    W = max(3 * D, F)

    def row(v):
        v = v.reshape(1, -1).astype(f32)
        return jnp.pad(v, ((0, 0), (0, W - v.shape[-1])))

    slabs = []
    for l in range(L):
        slabs.append(jnp.concatenate(
            [row(params['in_proj_b'][l]), row(params['out_b'][l]),
             row(params['g1'][l]), row(params['b1'][l]),
             row(params['bf1'][l]), row(params['bf2'][l]),
             row(params['g2'][l]), row(params['b2'][l])], axis=0)[None])
    slabs.append(jnp.concatenate(
        [row(params['gn']), row(params['bn'])] + [jnp.zeros((1, W), f32)] * 6, axis=0)[None])
    vec_slab = jnp.concatenate(slabs, axis=0)                        # [L+1, 8, W]

    # weights as bf16 matmul operands (f32 accumulation in-kernel)
    skel_w_b = jnp.pad(skel_w, ((0, NF_pad - nfeats), (0, 0))).astype(bf16)
    ipw_b = params['in_proj_w'].astype(bf16)
    ow_b = params['out_w'].astype(bf16)
    w1_b = params['w1'].astype(bf16)
    w2_b = params['w2'].astype(bf16)

    def resident(shape):   # full-block, constant index map -> fetched once, stays in VMEM
        if len(shape) == 2:
            return pl.BlockSpec(shape, lambda b, lens: (0, 0))
        return pl.BlockSpec(shape, lambda b, lens: (0, 0, 0))

    grid_spec = pltpu.PrefetchScalarGridSpec(
        num_scalar_prefetch=1,                 # lengths -> SMEM, used for the in-kernel key mask
        grid=(steps,),
        in_specs=[
            pl.BlockSpec((b_tile, S_pad, NF_pad), lambda b, lens: (b, 0, 0)),   # x (per-tile)
            resident((b_tile * S_pad, D)),                                      # prefix (tiled)
            resident((NF_pad, D)),                                              # skel_w
            resident((L, D, 3 * D)),                                            # in_proj
            resident((L, D, D)),                                                # out proj
            resident((L, D, F)),                                                # ffn w1
            resident((L, F, D)),                                                # ffn w2
            resident((L + 1, 8, W)),                                            # packed vectors
        ],
        out_specs=pl.BlockSpec((1, b_tile, D), lambda b, lens: (b, 0, 0)),
    )

    out = pl.pallas_call(
        partial(_fused_style_encoder_kernel, num_heads=num_heads, num_layers=L,
                num_tokens=T, b_tile=b_tile),
        grid_spec=grid_spec,
        out_shape=jax.ShapeDtypeStruct((steps, b_tile, D), f32),
        compiler_params=pltpu.CompilerParams(
            dimension_semantics=("parallel",)),                # v7x: batch tiles split across 2 TCs
    )(lengths_i, x, prefix_tiled, skel_w_b, ipw_b, ow_b, w1_b, w2_b, vec_slab)
    return out.reshape(bs_pad, D)[:bs]


# ----------------------------- deterministic parameter init -----------------------------

def init_params(key, latent_dim=64, ff_size=128, num_layers=2, latent_size=1, max_len=64):
    D, F, L = latent_dim, ff_size, num_layers
    ks = jax.random.split(key, 18)

    def w(k, shape, scale=0.05):
        return jax.random.normal(k, shape, jnp.float32) * scale

    return {
        'skel_w': w(ks[0], (263, D)),
        'skel_b': w(ks[1], (D,)),
        'global_motion_token': jax.random.normal(ks[2], (latent_size * 2, D), jnp.float32),
        'query_pos': jax.random.uniform(ks[3], (max_len, D), jnp.float32),
        # per-layer parameters stacked over the layer axis
        'in_proj_w': w(ks[4], (L, D, 3 * D)),
        'in_proj_b': w(ks[5], (L, 1, 3 * D)),
        'out_w': w(ks[6], (L, D, D)),
        'out_b': w(ks[7], (L, 1, D)),
        'g1': 1.0 + w(ks[8], (L, 1, D)), 'b1': w(ks[9], (L, 1, D)),
        'w1': w(ks[10], (L, D, F)),
        'bf1': w(ks[11], (L, 1, F)),
        'w2': w(ks[12], (L, F, D)),
        'bf2': w(ks[13], (L, 1, D)),
        'g2': 1.0 + w(ks[14], (L, 1, D)), 'b2': w(ks[15], (L, 1, D)),
        'gn': 1.0 + w(ks[16], (1, D)), 'bn': w(ks[17], (1, D)),
    }


# ----------------------------- pure-JAX reference (for validation) ----------------------

def ref_forward(features, lengths, params, num_heads=4):
    bs, nfeats, njoints, nframes = features.shape
    x = jnp.transpose(features.astype(jnp.float32), (0, 3, 2, 1)).reshape(bs * nframes, nfeats)
    x = x @ params['skel_w'] + params['skel_b']
    D = x.shape[-1]
    x = jnp.transpose(x.reshape(bs, nframes, D), (1, 0, 2))
    tok = params['global_motion_token']
    T = tok.shape[0]
    dist = jnp.tile(tok[:, None, :], (1, bs, 1))
    mask = jnp.arange(nframes)[None, :] < lengths[:, None]
    aug_mask = jnp.concatenate([jnp.ones((bs, T), dtype=jnp.bool_), mask], 1)
    xseq = jnp.concatenate([dist, x], 0)
    S = xseq.shape[0]
    xseq = xseq + params['query_pos'][:S][:, None, :]
    bias = jnp.where(aug_mask, 0.0, -1e30)
    H = num_heads
    Hd = D // H

    def ln(t, g, b):
        m = t.mean(-1, keepdims=True)
        v = ((t - m) ** 2).mean(-1, keepdims=True)
        return (t - m) / jnp.sqrt(v + 1e-5) * g + b

    L = params['in_proj_w'].shape[0]
    for l in range(L):
        flat = xseq.reshape(S * bs, D)
        qkv = (flat @ params['in_proj_w'][l] + params['in_proj_b'][l]).reshape(S, bs, 3, H, Hd)
        q = jnp.transpose(qkv[:, :, 0], (1, 2, 0, 3))
        k = jnp.transpose(qkv[:, :, 1], (1, 2, 0, 3))
        v = jnp.transpose(qkv[:, :, 2], (1, 2, 0, 3))
        s = jnp.einsum('bhqd,bhkd->bhqk', q, k) / math.sqrt(Hd)
        s = s + bias[:, None, None, :]
        a = jax.nn.softmax(s, axis=-1)
        o = jnp.einsum('bhqk,bhkd->bhqd', a, v)
        o = jnp.transpose(o, (2, 0, 1, 3)).reshape(S * bs, D)
        o = o @ params['out_w'][l] + params['out_b'][l]
        src = ln(flat + o, params['g1'][l], params['b1'][l])
        ff = jax.nn.gelu(src @ params['w1'][l] + params['bf1'][l], approximate=False)
        ff = ff @ params['w2'][l] + params['bf2'][l]
        src = ln(src + ff, params['g2'][l], params['b2'][l])
        xseq = src.reshape(S, bs, D)
    out = ln(xseq.reshape(S * bs, D), params['gn'], params['bn']).reshape(S, bs, D)
    return out[0]


# ----------------------------- main ------------------------------------------------------

if __name__ == "__main__":
    key = jax.random.PRNGKey(0)
    k_feat, k_param = jax.random.split(key)

    # small shapes consistent with the module: features [bs, 263, 1, nframes]
    bs, nfeats, njoints, nframes = 2, 263, 1, 8
    latent_dim, ff_size, num_layers, num_heads = 64, 128, 2, 4

    features = jax.random.normal(k_feat, (bs, nfeats, njoints, nframes), jnp.float32)
    lengths = jnp.array([8, 5], dtype=jnp.int32)
    params = init_params(k_param, latent_dim=latent_dim, ff_size=ff_size,
                         num_layers=num_layers)

    fwd = jax.jit(partial(style_classification_forward, num_heads=num_heads))
    out = jax.block_until_ready(fwd(features, lengths, params))
    assert out.shape == (bs, latent_dim)

    ref = jax.block_until_ready(ref_forward(features, lengths, params, num_heads=num_heads))
    np.testing.assert_allclose(np.asarray(out), np.asarray(ref), atol=2e-2, rtol=2e-2)

    print("KERNEL_OK")
</pallas_src>

<mosaic_0001>
module attributes {stable_mosaic.version = 11 : i64} {
  func.func @_fused_style_encoder_kernel(%arg0: i32, %arg1: memref<2xi32, #tpu.memory_space<smem>>, %arg2: memref<1x16x264xbf16, #tpu.memory_space<vmem>>, %arg3: memref<16x64xf32, #tpu.memory_space<vmem>>, %arg4: memref<264x64xbf16, #tpu.memory_space<vmem>>, %arg5: memref<2x64x192xbf16, #tpu.memory_space<vmem>>, %arg6: memref<2x64x64xbf16, #tpu.memory_space<vmem>>, %arg7: memref<2x64x128xbf16, #tpu.memory_space<vmem>>, %arg8: memref<2x128x64xbf16, #tpu.memory_space<vmem>>, %arg9: memref<3x8x192xf32, #tpu.memory_space<vmem>>, %arg10: memref<1x1x64xf32, #tpu.memory_space<vmem>>) attributes {dimension_semantics = [#tpu.dimension_semantics<parallel>], iteration_bounds = array<i64: 2>, scalar_prefetch = 1 : i64, scratch_operands = 0 : i64, tpu.core_type = #tpu.core_type<tc>, window_params = [{transform_indices = @transform_0, window_bounds = array<i64: 1, 16, 264>}, {pipeline_mode = #tpu.pipeline_mode<synchronous>, transform_indices = @transform_1, window_bounds = array<i64: 16, 64>}, {pipeline_mode = #tpu.pipeline_mode<synchronous>, transform_indices = @transform_2, window_bounds = array<i64: 264, 64>}, {pipeline_mode = #tpu.pipeline_mode<synchronous>, transform_indices = @transform_3, window_bounds = array<i64: 2, 64, 192>}, {pipeline_mode = #tpu.pipeline_mode<synchronous>, transform_indices = @transform_4, window_bounds = array<i64: 2, 64, 64>}, {pipeline_mode = #tpu.pipeline_mode<synchronous>, transform_indices = @transform_5, window_bounds = array<i64: 2, 64, 128>}, {pipeline_mode = #tpu.pipeline_mode<synchronous>, transform_indices = @transform_6, window_bounds = array<i64: 2, 128, 64>}, {pipeline_mode = #tpu.pipeline_mode<synchronous>, transform_indices = @transform_7, window_bounds = array<i64: 3, 8, 192>}, {transform_indices = @transform_8, window_bounds = array<i64: 1, 1, 64>}]} {
    %c1_i32 = arith.constant 1 : i32
    %0 = arith.muli %arg0, %c1_i32 : i32
    %1 = tpu.iota {dimensions = array<i32: 1>} : vector<1x16xi32>
    %c0_i32 = arith.constant 0 : i32
    %2 = arith.addi %0, %c0_i32 : i32
    %3 = arith.index_cast %2 : i32 to index
    %4 = memref.load %arg1[%3] : memref<2xi32, #tpu.memory_space<smem>>
    %c2_i32 = arith.constant 2 : i32
    %5 = arith.addi %c2_i32, %4 : i32
    %6 = vector.broadcast %5 : i32 to vector<1x16xi32>
    %7 = arith.cmpi slt, %1, %6 : vector<1x16xi32>
    %cst = arith.constant 0.000000e+00 : f32
    %cst_0 = arith.constant -1.000000e+30 : f32
    %8 = vector.broadcast %cst : f32 to vector<1x16xf32>
    %9 = vector.broadcast %cst_0 : f32 to vector<1x16xf32>
    %10 = arith.select %7, %8, %9 : vector<1x16xi1>, vector<1x16xf32>
    %c0 = arith.constant 0 : index
    %c0_1 = arith.constant 0 : index
    %c0_2 = arith.constant 0 : index
    %11 = vector.load %arg2[%c0, %c0_1, %c0_2] : memref<1x16x264xbf16, #tpu.memory_space<vmem>>, vector<1x16x264xbf16>
    %12 = vector.shape_cast %11 : vector<1x16x264xbf16> to vector<16x264xbf16>
    %c0_3 = arith.constant 0 : index
    %c0_4 = arith.constant 0 : index
    %13 = vector.load %arg4[%c0_3, %c0_4] : memref<264x64xbf16, #tpu.memory_space<vmem>>, vector<264x64xbf16>
    %cst_5 = arith.constant dense<0.000000e+00> : vector<16x64xf32>
    %14 = tpu.matmul %12, %13, %cst_5 {dimension_numbers = #tpu.dot_dimension_numbers<[1], [0], [0], [1], [0, 0, 1, 1], [], []>} : vector<16x264xbf16>, vector<264x64xbf16>, vector<16x64xf32> -> vector<16x64xf32>
    %c0_6 = arith.constant 0 : index
    %c0_7 = arith.constant 0 : index
    %15 = vector.load %arg3[%c0_6, %c0_7] : memref<16x64xf32, #tpu.memory_space<vmem>>, vector<16x64xf32>
    %16 = arith.addf %14, %15 : vector<16x64xf32>
    %c0_8 = arith.constant 0 : index
    %c0_9 = arith.constant 0 : index
    %c0_10 = arith.constant 0 : index
    %17 = vector.load %arg9[%c0_8, %c0_9, %c0_10] : memref<3x8x192xf32, #tpu.memory_space<vmem>>, vector<1x8x192xf32>
    %18 = vector.shape_cast %17 : vector<1x8x192xf32> to vector<8x192xf32>
    %19 = vector.extract_strided_slice %18 {offsets = [0, 0], sizes = [1, 192], strides = [1, 1]} : vector<8x192xf32> to vector<1x192xf32>
    %20 = vector.extract_strided_slice %18 {offsets = [1, 0], sizes = [1, 64], strides = [1, 1]} : vector<8x192xf32> to vector<1x64xf32>
    %21 = vector.extract_strided_slice %18 {offsets = [2, 0], sizes = [1, 64], strides = [1, 1]} : vector<8x192xf32> to vector<1x64xf32>
    %22 = vector.extract_strided_slice %18 {offsets = [3, 0], sizes = [1, 64], strides = [1, 1]} : vector<8x192xf32> to vector<1x64xf32>
    %23 = vector.extract_strided_slice %18 {offsets = [4, 0], sizes = [1, 128], strides = [1, 1]} : vector<8x192xf32> to vector<1x128xf32>
    %24 = vector.extract_strided_slice %18 {offsets = [5, 0], sizes = [1, 64], strides = [1, 1]} : vector<8x192xf32> to vector<1x64xf32>
    %25 = vector.extract_strided_slice %18 {offsets = [6, 0], sizes = [1, 64], strides = [1, 1]} : vector<8x192xf32> to vector<1x64xf32>
    %26 = vector.extract_strided_slice %18 {offsets = [7, 0], sizes = [1, 64], strides = [1, 1]} : vector<8x192xf32> to vector<1x64xf32>
    %27 = arith.truncf %16 : vector<16x64xf32> to vector<16x64xbf16>
    %c0_11 = arith.constant 0 : index
    %c0_12 = arith.constant 0 : index
    %c0_13 = arith.constant 0 : index
    %28 = vector.load %arg5[%c0_11, %c0_12, %c0_13] : memref<2x64x192xbf16, #tpu.memory_space<vmem>>, vector<1x64x192xbf16>
    %29 = vector.shape_cast %28 : vector<1x64x192xbf16> to vector<64x192xbf16>
    %cst_14 = arith.constant dense<0.000000e+00> : vector<16x192xf32>
    %30 = tpu.matmul %27, %29, %cst_14 {dimension_numbers = #tpu.dot_dimension_numbers<[1], [0], [0], [1], [0, 0, 1, 1], [], []>} : vector<16x64xbf16>, vector<64x192xbf16>, vector<16x192xf32> -> vector<16x192xf32>
    %31 = vector.broadcast %19 : vector<1x192xf32> to vector<16x192xf32>
    %32 = arith.addf %30, %31 : vector<16x192xf32>
    %33 = vector.extract_strided_slice %32 {offsets = [0, 0], sizes = [16, 16], strides = [1, 1]} : vector<16x192xf32> to vector<16x16xf32>
    %34 = vector.extract_strided_slice %32 {offsets = [0, 16], sizes = [16, 16], strides = [1, 1]} : vector<16x192xf32> to vector<16x16xf32>
    %35 = vector.extract_strided_slice %32 {offsets = [0, 32], sizes = [16, 16], strides = [1, 1]} : vector<16x192xf32> to vector<16x16xf32>
    %36 = vector.extract_strided_slice %32 {offsets = [0, 48], sizes = [16, 16], strides = [1, 1]} : vector<16x192xf32> to vector<16x16xf32>
    %37 = vector.extract_strided_slice %32 {offsets = [0, 64], sizes = [16, 16], strides = [1, 1]} : vector<16x192xf32> to vector<16x16xf32>
    %38 = vector.extract_strided_slice %32 {offsets = [0, 80], sizes = [16, 16], strides = [1, 1]} : vector<16x192xf32> to vector<16x16xf32>
    %39 = vector.extract_strided_slice %32 {offsets = [0, 96], sizes = [16, 16], strides = [1, 1]} : vector<16x192xf32> to vector<16x16xf32>
    %40 = vector.extract_strided_slice %32 {offsets = [0, 112], sizes = [16, 16], strides = [1, 1]} : vector<16x192xf32> to vector<16x16xf32>
    %41 = vector.extract_strided_slice %32 {offsets = [0, 128], sizes = [16, 16], strides = [1, 1]} : vector<16x192xf32> to vector<16x16xf32>
    %42 = vector.extract_strided_slice %32 {offsets = [0, 144], sizes = [16, 16], strides = [1, 1]} : vector<16x192xf32> to vector<16x16xf32>
    %43 = vector.extract_strided_slice %32 {offsets = [0, 160], sizes = [16, 16], strides = [1, 1]} : vector<16x192xf32> to vector<16x16xf32>
    %44 = vector.extract_strided_slice %32 {offsets = [0, 176], sizes = [16, 16], strides = [1, 1]} : vector<16x192xf32> to vector<16x16xf32>
    %cst_15 = arith.constant dense<0.000000e+00> : vector<16x16xf32>
    %45 = tpu.matmul %33, %37, %cst_15 {dimension_numbers = #tpu.dot_dimension_numbers<[1], [1], [0], [0], [0, 0, 1, 0], [], []>} : vector<16x16xf32>, vector<16x16xf32>, vector<16x16xf32> -> vector<16x16xf32>
    %cst_16 = arith.constant 2.500000e-01 : f32
    %46 = vector.broadcast %cst_16 : f32 to vector<16x16xf32>
    %47 = arith.mulf %45, %46 : vector<16x16xf32>
    %48 = vector.broadcast %10 : vector<1x16xf32> to vector<16x16xf32>
    %49 = arith.addf %47, %48 : vector<16x16xf32>
    %cst_17 = arith.constant dense<0xFF800000> : vector<16xf32>
    %50 = vector.multi_reduction <maximumf>, %49, %cst_17 [1] : vector<16x16xf32> to vector<16xf32>
    %51 = vector.shape_cast %50 : vector<16xf32> to vector<16x1xf32>
    %52 = vector.broadcast %51 : vector<16x1xf32> to vector<16x16xf32>
    %53 = arith.subf %49, %52 : vector<16x16xf32>
    %54 = math.exp %53 : vector<16x16xf32>
    %cst_18 = arith.constant dense<0.000000e+00> : vector<16xf32>
    %55 = vector.multi_reduction <add>, %54, %cst_18 [1] : vector<16x16xf32> to vector<16xf32>
    %56 = vector.shape_cast %55 : vector<16xf32> to vector<16x1xf32>
    %57 = tpu.reciprocal %56 {approx = true} : vector<16x1xf32> -> vector<16x1xf32>
    %58 = vector.broadcast %57 : vector<16x1xf32> to vector<16x16xf32>
    %59 = arith.mulf %54, %58 : vector<16x16xf32>
    %cst_19 = arith.constant dense<0.000000e+00> : vector<16x16xf32>
    %60 = tpu.matmul %59, %41, %cst_19 {dimension_numbers = #tpu.dot_dimension_numbers<[1], [0], [0], [1], [0, 0, 1, 1], [], []>} : vector<16x16xf32>, vector<16x16xf32>, vector<16x16xf32> -> vector<16x16xf32>
    %cst_20 = arith.constant dense<0.000000e+00> : vector<16x16xf32>
    %61 = tpu.matmul %34, %38, %cst_20 {dimension_numbers = #tpu.dot_dimension_numbers<[1], [1], [0], [0], [0, 0, 1, 0], [], []>} : vector<16x16xf32>, vector<16x16xf32>, vector<16x16xf32> -> vector<16x16xf32>
    %cst_21 = arith.constant 2.500000e-01 : f32
    %62 = vector.broadcast %cst_21 : f32 to vector<16x16xf32>
    %63 = arith.mulf %61, %62 : vector<16x16xf32>
    %64 = vector.broadcast %10 : vector<1x16xf32> to vector<16x16xf32>
    %65 = arith.addf %63, %64 : vector<16x16xf32>
    %cst_22 = arith.constant dense<0xFF800000> : vector<16xf32>
    %66 = vector.multi_reduction <maximumf>, %65, %cst_22 [1] : vector<16x16xf32> to vector<16xf32>
    %67 = vector.shape_cast %66 : vector<16xf32> to vector<16x1xf32>
    %68 = vector.broadcast %67 : vector<16x1xf32> to vector<16x16xf32>
    %69 = arith.subf %65, %68 : vector<16x16xf32>
    %70 = math.exp %69 : vector<16x16xf32>
    %cst_23 = arith.constant dense<0.000000e+00> : vector<16xf32>
    %71 = vector.multi_reduction <add>, %70, %cst_23 [1] : vector<16x16xf32> to vector<16xf32>
    %72 = vector.shape_cast %71 : vector<16xf32> to vector<16x1xf32>
    %73 = tpu.reciprocal %72 {approx = true} : vector<16x1xf32> -> vector<16x1xf32>
    %74 = vector.broadcast %73 : vector<16x1xf32> to vector<16x16xf32>
    %75 = arith.mulf %70, %74 : vector<16x16xf32>
    %cst_24 = arith.constant dense<0.000000e+00> : vector<16x16xf32>
    %76 = tpu.matmul %75, %42, %cst_24 {dimension_numbers = #tpu.dot_dimension_numbers<[1], [0], [0], [1], [0, 0, 1, 1], [], []>} : vector<16x16xf32>, vector<16x16xf32>, vector<16x16xf32> -> vector<16x16xf32>
    %cst_25 = arith.constant dense<0.000000e+00> : vector<16x16xf32>
    %77 = tpu.matmul %35, %39, %cst_25 {dimension_numbers = #tpu.dot_dimension_numbers<[1], [1], [0], [0], [0, 0, 1, 0], [], []>} : vector<16x16xf32>, vector<16x16xf32>, vector<16x16xf32> -> vector<16x16xf32>
    %cst_26 = arith.constant 2.500000e-01 : f32
    %78 = vector.broadcast %cst_26 : f32 to vector<16x16xf32>
    %79 = arith.mulf %77, %78 : vector<16x16xf32>
    %80 = vector.broadcast %10 : vector<1x16xf32> to vector<16x16xf32>
    %81 = arith.addf %79, %80 : vector<16x16xf32>
    %cst_27 = arith.constant dense<0xFF800000> : vector<16xf32>
    %82 = vector.multi_reduction <maximumf>, %81, %cst_27 [1] : vector<16x16xf32> to vector<16xf32>
    %83 = vector.shape_cast %82 : vector<16xf32> to vector<16x1xf32>
    %84 = vector.broadcast %83 : vector<16x1xf32> to vector<16x16xf32>
    %85 = arith.subf %81, %84 : vector<16x16xf32>
    %86 = math.exp %85 : vector<16x16xf32>
    %cst_28 = arith.constant dense<0.000000e+00> : vector<16xf32>
    %87 = vector.multi_reduction <add>, %86, %cst_28 [1] : vector<16x16xf32> to vector<16xf32>
    %88 = vector.shape_cast %87 : vector<16xf32> to vector<16x1xf32>
    %89 = tpu.reciprocal %88 {approx = true} : vector<16x1xf32> -> vector<16x1xf32>
    %90 = vector.broadcast %89 : vector<16x1xf32> to vector<16x16xf32>
    %91 = arith.mulf %86, %90 : vector<16x16xf32>
    %cst_29 = arith.constant dense<0.000000e+00> : vector<16x16xf32>
    %92 = tpu.matmul %91, %43, %cst_29 {dimension_numbers = #tpu.dot_dimension_numbers<[1], [0], [0], [1], [0, 0, 1, 1], [], []>} : vector<16x16xf32>, vector<16x16xf32>, vector<16x16xf32> -> vector<16x16xf32>
    %cst_30 = arith.constant dense<0.000000e+00> : vector<16x16xf32>
    %93 = tpu.matmul %36, %40, %cst_30 {dimension_numbers = #tpu.dot_dimension_numbers<[1], [1], [0], [0], [0, 0, 1, 0], [], []>} : vector<16x16xf32>, vector<16x16xf32>, vector<16x16xf32> -> vector<16x16xf32>
    %cst_31 = arith.constant 2.500000e-01 : f32
    %94 = vector.broadcast %cst_31 : f32 to vector<16x16xf32>
    %95 = arith.mulf %93, %94 : vector<16x16xf32>
    %96 = vector.broadcast %10 : vector<1x16xf32> to vector<16x16xf32>
    %97 = arith.addf %95, %96 : vector<16x16xf32>
    %cst_32 = arith.constant dense<0xFF800000> : vector<16xf32>
    %98 = vector.multi_reduction <maximumf>, %97, %cst_32 [1] : vector<16x16xf32> to vector<16xf32>
    %99 = vector.shape_cast %98 : vector<16xf32> to vector<16x1xf32>
    %100 = vector.broadcast %99 : vector<16x1xf32> to vector<16x16xf32>
    %101 = arith.subf %97, %100 : vector<16x16xf32>
    %102 = math.exp %101 : vector<16x16xf32>
    %cst_33 = arith.constant dense<0.000000e+00> : vector<16xf32>
    %103 = vector.multi_reduction <add>, %102, %cst_33 [1] : vector<16x16xf32> to vector<16xf32>
    %104 = vector.shape_cast %103 : vector<16xf32> to vector<16x1xf32>
    %105 = tpu.reciprocal %104 {approx = true} : vector<16x1xf32> -> vector<16x1xf32>
    %106 = vector.broadcast %105 : vector<16x1xf32> to vector<16x16xf32>
    %107 = arith.mulf %102, %106 : vector<16x16xf32>
    %cst_34 = arith.constant dense<0.000000e+00> : vector<16x16xf32>
    %108 = tpu.matmul %107, %44, %cst_34 {dimension_numbers = #tpu.dot_dimension_numbers<[1], [0], [0], [1], [0, 0, 1, 1], [], []>} : vector<16x16xf32>, vector<16x16xf32>, vector<16x16xf32> -> vector<16x16xf32>
    %109 = tpu.concatenate %60, %76, %92, %108 in 1 : vector<16x16xf32>, vector<16x16xf32>, vector<16x16xf32>, vector<16x16xf32> -> vector<16x64xf32>
    %110 = arith.truncf %109 : vector<16x64xf32> to vector<16x64xbf16>
    %c0_35 = arith.constant 0 : index
    %c0_36 = arith.constant 0 : index
    %c0_37 = arith.constant 0 : index
    %111 = vector.load %arg6[%c0_35, %c0_36, %c0_37] : memref<2x64x64xbf16, #tpu.memory_space<vmem>>, vector<1x64x64xbf16>
    %112 = vector.shape_cast %111 : vector<1x64x64xbf16> to vector<64x64xbf16>
    %cst_38 = arith.constant dense<0.000000e+00> : vector<16x64xf32>
    %113 = tpu.matmul %110, %112, %cst_38 {dimension_numbers = #tpu.dot_dimension_numbers<[1], [0], [0], [1], [0, 0, 1, 1], [], []>} : vector<16x64xbf16>, vector<64x64xbf16>, vector<16x64xf32> -> vector<16x64xf32>
    %114 = vector.broadcast %20 : vector<1x64xf32> to vector<16x64xf32>
    %115 = arith.addf %113, %114 : vector<16x64xf32>
    %116 = arith.addf %16, %115 : vector<16x64xf32>
    %cst_39 = arith.constant dense<0.000000e+00> : vector<16xf32>
    %117 = vector.multi_reduction <add>, %116, %cst_39 [1] : vector<16x64xf32> to vector<16xf32>
    %118 = vector.shape_cast %117 : vector<16xf32> to vector<16x1xf32>
    %cst_40 = arith.constant 6.400000e+01 : f32
    %119 = vector.broadcast %cst_40 : f32 to vector<16x1xf32>
    %120 = arith.divf %118, %119 : vector<16x1xf32>
    %121 = vector.broadcast %120 : vector<16x1xf32> to vector<16x64xf32>
    %122 = arith.subf %116, %121 : vector<16x64xf32>
    %123 = arith.mulf %122, %122 : vector<16x64xf32>
    %cst_41 = arith.constant dense<0.000000e+00> : vector<16xf32>
    %124 = vector.multi_reduction <add>, %123, %cst_41 [1] : vector<16x64xf32> to vector<16xf32>
    %125 = vector.shape_cast %124 : vector<16xf32> to vector<16x1xf32>
    %cst_42 = arith.constant 6.400000e+01 : f32
    %126 = vector.broadcast %cst_42 : f32 to vector<16x1xf32>
    %127 = arith.divf %125, %126 : vector<16x1xf32>
    %128 = vector.broadcast %120 : vector<16x1xf32> to vector<16x64xf32>
    %129 = arith.subf %116, %128 : vector<16x64xf32>
    %cst_43 = arith.constant 9.99999974E-6 : f32
    %130 = vector.broadcast %cst_43 : f32 to vector<16x1xf32>
    %131 = arith.addf %127, %130 : vector<16x1xf32>
    %132 = math.rsqrt %131 : vector<16x1xf32>
    %133 = vector.broadcast %132 : vector<16x1xf32> to vector<16x64xf32>
    %134 = arith.mulf %129, %133 : vector<16x64xf32>
    %135 = vector.broadcast %21 : vector<1x64xf32> to vector<16x64xf32>
    %136 = arith.mulf %134, %135 : vector<16x64xf32>
    %137 = vector.broadcast %22 : vector<1x64xf32> to vector<16x64xf32>
    %138 = arith.addf %136, %137 : vector<16x64xf32>
    %139 = arith.truncf %138 : vector<16x64xf32> to vector<16x64xbf16>
    %c0_44 = arith.constant 0 : index
    %c0_45 = arith.constant 0 : index
    %c0_46 = arith.constant 0 : index
    %140 = vector.load %arg7[%c0_44, %c0_45, %c0_46] : memref<2x64x128xbf16, #tpu.memory_space<vmem>>, vector<1x64x128xbf16>
    %141 = vector.shape_cast %140 : vector<1x64x128xbf16> to vector<64x128xbf16>
    %cst_47 = arith.constant dense<0.000000e+00> : vector<16x128xf32>
    %142 = tpu.matmul %139, %141, %cst_47 {dimension_numbers = #tpu.dot_dimension_numbers<[1], [0], [0], [1], [0, 0, 1, 1], [], []>} : vector<16x64xbf16>, vector<64x128xbf16>, vector<16x128xf32> -> vector<16x128xf32>
    %143 = vector.broadcast %23 : vector<1x128xf32> to vector<16x128xf32>
    %144 = arith.addf %142, %143 : vector<16x128xf32>
    %cst_48 = arith.constant 5.000000e-01 : f32
    %145 = vector.broadcast %cst_48 : f32 to vector<16x128xf32>
    %146 = arith.mulf %145, %144 : vector<16x128xf32>
    %cst_49 = arith.constant 0.707106769 : f32
    %147 = vector.broadcast %cst_49 : f32 to vector<16x128xf32>
    %148 = arith.mulf %144, %147 : vector<16x128xf32>
    %149 = math.absf %148 : vector<16x128xf32>
    %cst_50 = arith.constant 0.327591091 : f32
    %150 = vector.broadcast %cst_50 : f32 to vector<16x128xf32>
    %151 = arith.mulf %150, %149 : vector<16x128xf32>
    %cst_51 = arith.constant 1.000000e+00 : f32
    %152 = vector.broadcast %cst_51 : f32 to vector<16x128xf32>
    %153 = arith.addf %152, %151 : vector<16x128xf32>
    %cst_52 = arith.constant 1.000000e+00 : f32
    %154 = vector.broadcast %cst_52 : f32 to vector<16x128xf32>
    %155 = arith.divf %154, %153 : vector<16x128xf32>
    %cst_53 = arith.constant 1.06140542 : f32
    %156 = vector.broadcast %cst_53 : f32 to vector<16x128xf32>
    %157 = arith.mulf %156, %155 : vector<16x128xf32>
    %cst_54 = arith.constant -1.45315206 : f32
    %158 = vector.broadcast %cst_54 : f32 to vector<16x128xf32>
    %159 = arith.addf %157, %158 : vector<16x128xf32>
    %160 = arith.mulf %159, %155 : vector<16x128xf32>
    %cst_55 = arith.constant 1.42141378 : f32
    %161 = vector.broadcast %cst_55 : f32 to vector<16x128xf32>
    %162 = arith.addf %160, %161 : vector<16x128xf32>
    %163 = arith.mulf %162, %155 : vector<16x128xf32>
    %cst_56 = arith.constant -0.284496725 : f32
    %164 = vector.broadcast %cst_56 : f32 to vector<16x128xf32>
    %165 = arith.addf %163, %164 : vector<16x128xf32>
    %166 = arith.mulf %165, %155 : vector<16x128xf32>
    %cst_57 = arith.constant 0.254829586 : f32
    %167 = vector.broadcast %cst_57 : f32 to vector<16x128xf32>
    %168 = arith.addf %166, %167 : vector<16x128xf32>
    %169 = arith.mulf %168, %155 : vector<16x128xf32>
    %cst_58 = arith.constant 0.000000e+00 : f32
    %170 = vector.broadcast %cst_58 : f32 to vector<16x128xf32>
    %171 = arith.subf %170, %149 : vector<16x128xf32>
    %172 = arith.mulf %171, %149 : vector<16x128xf32>
    %173 = math.exp %172 : vector<16x128xf32>
    %174 = arith.mulf %169, %173 : vector<16x128xf32>
    %cst_59 = arith.constant 1.000000e+00 : f32
    %175 = vector.broadcast %cst_59 : f32 to vector<16x128xf32>
    %176 = arith.subf %175, %174 : vector<16x128xf32>
    %cst_60 = arith.constant 0.000000e+00 : f32
    %177 = vector.broadcast %cst_60 : f32 to vector<16x128xf32>
    %178 = arith.cmpf oge, %148, %177 : vector<16x128xf32>
    %cst_61 = arith.constant 0.000000e+00 : f32
    %179 = vector.broadcast %cst_61 : f32 to vector<16x128xf32>
    %180 = arith.subf %179, %176 : vector<16x128xf32>
    %181 = arith.select %178, %176, %180 : vector<16x128xi1>, vector<16x128xf32>
    %cst_62 = arith.constant 1.000000e+00 : f32
    %182 = vector.broadcast %cst_62 : f32 to vector<16x128xf32>
    %183 = arith.addf %182, %181 : vector<16x128xf32>
    %184 = arith.mulf %146, %183 : vector<16x128xf32>
    %185 = arith.truncf %184 : vector<16x128xf32> to vector<16x128xbf16>
    %c0_63 = arith.constant 0 : index
    %c0_64 = arith.constant 0 : index
    %c0_65 = arith.constant 0 : index
    %186 = vector.load %arg8[%c0_63, %c0_64, %c0_65] : memref<2x128x64xbf16, #tpu.memory_space<vmem>>, vector<1x128x64xbf16>
    %187 = vector.shape_cast %186 : vector<1x128x64xbf16> to vector<128x64xbf16>
    %cst_66 = arith.constant dense<0.000000e+00> : vector<16x64xf32>
    %188 = tpu.matmul %185, %187, %cst_66 {dimension_numbers = #tpu.dot_dimension_numbers<[1], [0], [0], [1], [0, 0, 1, 1], [], []>} : vector<16x128xbf16>, vector<128x64xbf16>, vector<16x64xf32> -> vector<16x64xf32>
    %189 = vector.broadcast %24 : vector<1x64xf32> to vector<16x64xf32>
    %190 = arith.addf %188, %189 : vector<16x64xf32>
    %191 = arith.addf %138, %190 : vector<16x64xf32>
    %cst_67 = arith.constant dense<0.000000e+00> : vector<16xf32>
    %192 = vector.multi_reduction <add>, %191, %cst_67 [1] : vector<16x64xf32> to vector<16xf32>
    %193 = vector.shape_cast %192 : vector<16xf32> to vector<16x1xf32>
    %cst_68 = arith.constant 6.400000e+01 : f32
    %194 = vector.broadcast %cst_68 : f32 to vector<16x1xf32>
    %195 = arith.divf %193, %194 : vector<16x1xf32>
    %196 = vector.broadcast %195 : vector<16x1xf32> to vector<16x64xf32>
    %197 = arith.subf %191, %196 : vector<16x64xf32>
    %198 = arith.mulf %197, %197 : vector<16x64xf32>
    %cst_69 = arith.constant dense<0.000000e+00> : vector<16xf32>
    %199 = vector.multi_reduction <add>, %198, %cst_69 [1] : vector<16x64xf32> to vector<16xf32>
    %200 = vector.shape_cast %199 : vector<16xf32> to vector<16x1xf32>
    %cst_70 = arith.constant 6.400000e+01 : f32
    %201 = vector.broadcast %cst_70 : f32 to vector<16x1xf32>
    %202 = arith.divf %200, %201 : vector<16x1xf32>
    %203 = vector.broadcast %195 : vector<16x1xf32> to vector<16x64xf32>
    %204 = arith.subf %191, %203 : vector<16x64xf32>
    %cst_71 = arith.constant 9.99999974E-6 : f32
    %205 = vector.broadcast %cst_71 : f32 to vector<16x1xf32>
    %206 = arith.addf %202, %205 : vector<16x1xf32>
    %207 = math.rsqrt %206 : vector<16x1xf32>
    %208 = vector.broadcast %207 : vector<16x1xf32> to vector<16x64xf32>
    %209 = arith.mulf %204, %208 : vector<16x64xf32>
    %210 = vector.broadcast %25 : vector<1x64xf32> to vector<16x64xf32>
    %211 = arith.mulf %209, %210 : vector<16x64xf32>
    %212 = vector.broadcast %26 : vector<1x64xf32> to vector<16x64xf32>
    %213 = arith.addf %211, %212 : vector<16x64xf32>
    %c1 = arith.constant 1 : index
    %c0_72 = arith.constant 0 : index
    %c0_73 = arith.constant 0 : index
    %214 = vector.load %arg9[%c1, %c0_72, %c0_73] : memref<3x8x192xf32, #tpu.memory_space<vmem>>, vector<1x8x192xf32>
    %215 = vector.shape_cast %214 : vector<1x8x192xf32> to vector<8x192xf32>
    %216 = vector.extract_strided_slice %215 {offsets = [0, 0], sizes = [1, 192], strides = [1, 1]} : vector<8x192xf32> to vector<1x192xf32>
    %217 = vector.extract_strided_slice %215 {offsets = [1, 0], sizes = [1, 64], strides = [1, 1]} : vector<8x192xf32> to vector<1x64xf32>
    %218 = vector.extract_strided_slice %215 {offsets = [2, 0], sizes = [1, 64], strides = [1, 1]} : vector<8x192xf32> to vector<1x64xf32>
    %219 = vector.extract_strided_slice %215 {offsets = [3, 0], sizes = [1, 64], strides = [1, 1]} : vector<8x192xf32> to vector<1x64xf32>
    %220 = vector.extract_strided_slice %215 {offsets = [4, 0], sizes = [1, 128], strides = [1, 1]} : vector<8x192xf32> to vector<1x128xf32>
    %221 = vector.extract_strided_slice %215 {offsets = [5, 0], sizes = [1, 64], strides = [1, 1]} : vector<8x192xf32> to vector<1x64xf32>
    %222 = vector.extract_strided_slice %215 {offsets = [6, 0], sizes = [1, 64], strides = [1, 1]} : vector<8x192xf32> to vector<1x64xf32>
    %223 = vector.extract_strided_slice %215 {offsets = [7, 0], sizes = [1, 64], strides = [1, 1]} : vector<8x192xf32> to vector<1x64xf32>
    %224 = arith.truncf %213 : vector<16x64xf32> to vector<16x64xbf16>
    %c1_74 = arith.constant 1 : index
    %c0_75 = arith.constant 0 : index
    %c0_76 = arith.constant 0 : index
    %225 = vector.load %arg5[%c1_74, %c0_75, %c0_76] : memref<2x64x192xbf16, #tpu.memory_space<vmem>>, vector<1x64x192xbf16>
    %226 = vector.shape_cast %225 : vector<1x64x192xbf16> to vector<64x192xbf16>
    %cst_77 = arith.constant dense<0.000000e+00> : vector<16x192xf32>
    %227 = tpu.matmul %224, %226, %cst_77 {dimension_numbers = #tpu.dot_dimension_numbers<[1], [0], [0], [1], [0, 0, 1, 1], [], []>} : vector<16x64xbf16>, vector<64x192xbf16>, vector<16x192xf32> -> vector<16x192xf32>
    %228 = vector.broadcast %216 : vector<1x192xf32> to vector<16x192xf32>
    %229 = arith.addf %227, %228 : vector<16x192xf32>
    %230 = vector.extract_strided_slice %229 {offsets = [0, 0], sizes = [16, 16], strides = [1, 1]} : vector<16x192xf32> to vector<16x16xf32>
    %231 = vector.extract_strided_slice %229 {offsets = [0, 16], sizes = [16, 16], strides = [1, 1]} : vector<16x192xf32> to vector<16x16xf32>
    %232 = vector.extract_strided_slice %229 {offsets = [0, 32], sizes = [16, 16], strides = [1, 1]} : vector<16x192xf32> to vector<16x16xf32>
    %233 = vector.extract_strided_slice %229 {offsets = [0, 48], sizes = [16, 16], strides = [1, 1]} : vector<16x192xf32> to vector<16x16xf32>
    %234 = vector.extract_strided_slice %229 {offsets = [0, 64], sizes = [16, 16], strides = [1, 1]} : vector<16x192xf32> to vector<16x16xf32>
    %235 = vector.extract_strided_slice %229 {offsets = [0, 80], sizes = [16, 16], strides = [1, 1]} : vector<16x192xf32> to vector<16x16xf32>
    %236 = vector.extract_strided_slice %229 {offsets = [0, 96], sizes = [16, 16], strides = [1, 1]} : vector<16x192xf32> to vector<16x16xf32>
    %237 = vector.extract_strided_slice %229 {offsets = [0, 112], sizes = [16, 16], strides = [1, 1]} : vector<16x192xf32> to vector<16x16xf32>
    %238 = vector.extract_strided_slice %229 {offsets = [0, 128], sizes = [16, 16], strides = [1, 1]} : vector<16x192xf32> to vector<16x16xf32>
    %239 = vector.extract_strided_slice %229 {offsets = [0, 144], sizes = [16, 16], strides = [1, 1]} : vector<16x192xf32> to vector<16x16xf32>
    %240 = vector.extract_strided_slice %229 {offsets = [0, 160], sizes = [16, 16], strides = [1, 1]} : vector<16x192xf32> to vector<16x16xf32>
    %241 = vector.extract_strided_slice %229 {offsets = [0, 176], sizes = [16, 16], strides = [1, 1]} : vector<16x192xf32> to vector<16x16xf32>
    %cst_78 = arith.constant dense<0.000000e+00> : vector<16x16xf32>
    %242 = tpu.matmul %230, %234, %cst_78 {dimension_numbers = #tpu.dot_dimension_numbers<[1], [1], [0], [0], [0, 0, 1, 0], [], []>} : vector<16x16xf32>, vector<16x16xf32>, vector<16x16xf32> -> vector<16x16xf32>
    %cst_79 = arith.constant 2.500000e-01 : f32
    %243 = vector.broadcast %cst_79 : f32 to vector<16x16xf32>
    %244 = arith.mulf %242, %243 : vector<16x16xf32>
    %245 = vector.broadcast %10 : vector<1x16xf32> to vector<16x16xf32>
    %246 = arith.addf %244, %245 : vector<16x16xf32>
    %cst_80 = arith.constant dense<0xFF800000> : vector<16xf32>
    %247 = vector.multi_reduction <maximumf>, %246, %cst_80 [1] : vector<16x16xf32> to vector<16xf32>
    %248 = vector.shape_cast %247 : vector<16xf32> to vector<16x1xf32>
    %249 = vector.broadcast %248 : vector<16x1xf32> to vector<16x16xf32>
    %250 = arith.subf %246, %249 : vector<16x16xf32>
    %251 = math.exp %250 : vector<16x16xf32>
    %cst_81 = arith.constant dense<0.000000e+00> : vector<16xf32>
    %252 = vector.multi_reduction <add>, %251, %cst_81 [1] : vector<16x16xf32> to vector<16xf32>
    %253 = vector.shape_cast %252 : vector<16xf32> to vector<16x1xf32>
    %254 = tpu.reciprocal %253 {approx = true} : vector<16x1xf32> -> vector<16x1xf32>
    %255 = vector.broadcast %254 : vector<16x1xf32> to vector<16x16xf32>
    %256 = arith.mulf %251, %255 : vector<16x16xf32>
    %cst_82 = arith.constant dense<0.000000e+00> : vector<16x16xf32>
    %257 = tpu.matmul %256, %238, %cst_82 {dimension_numbers = #tpu.dot_dimension_numbers<[1], [0], [0], [1], [0, 0, 1, 1], [], []>} : vector<16x16xf32>, vector<16x16xf32>, vector<16x16xf32> -> vector<16x16xf32>
    %cst_83 = arith.constant dense<0.000000e+00> : vector<16x16xf32>
    %258 = tpu.matmul %231, %235, %cst_83 {dimension_numbers = #tpu.dot_dimension_numbers<[1], [1], [0], [0], [0, 0, 1, 0], [], []>} : vector<16x16xf32>, vector<16x16xf32>, vector<16x16xf32> -> vector<16x16xf32>
    %cst_84 = arith.constant 2.500000e-01 : f32
    %259 = vector.broadcast %cst_84 : f32 to vector<16x16xf32>
    %260 = arith.mulf %258, %259 : vector<16x16xf32>
    %261 = vector.broadcast %10 : vector<1x16xf32> to vector<16x16xf32>
    %262 = arith.addf %260, %261 : vector<16x16xf32>
    %cst_85 = arith.constant dense<0xFF800000> : vector<16xf32>
    %263 = vector.multi_reduction <maximumf>, %262, %cst_85 [1] : vector<16x16xf32> to vector<16xf32>
    %264 = vector.shape_cast %263 : vector<16xf32> to vector<16x1xf32>
    %265 = vector.broadcast %264 : vector<16x1xf32> to vector<16x16xf32>
    %266 = arith.subf %262, %265 : vector<16x16xf32>
    %267 = math.exp %266 : vector<16x16xf32>
    %cst_86 = arith.constant dense<0.000000e+00> : vector<16xf32>
    %268 = vector.multi_reduction <add>, %267, %cst_86 [1] : vector<16x16xf32> to vector<16xf32>
    %269 = vector.shape_cast %268 : vector<16xf32> to vector<16x1xf32>
    %270 = tpu.reciprocal %269 {approx = true} : vector<16x1xf32> -> vector<16x1xf32>
    %271 = vector.broadcast %270 : vector<16x1xf32> to vector<16x16xf32>
    %272 = arith.mulf %267, %271 : vector<16x16xf32>
    %cst_87 = arith.constant dense<0.000000e+00> : vector<16x16xf32>
    %273 = tpu.matmul %272, %239, %cst_87 {dimension_numbers = #tpu.dot_dimension_numbers<[1], [0], [0], [1], [0, 0, 1, 1], [], []>} : vector<16x16xf32>, vector<16x16xf32>, vector<16x16xf32> -> vector<16x16xf32>
    %cst_88 = arith.constant dense<0.000000e+00> : vector<16x16xf32>
    %274 = tpu.matmul %232, %236, %cst_88 {dimension_numbers = #tpu.dot_dimension_numbers<[1], [1], [0], [0], [0, 0, 1, 0], [], []>} : vector<16x16xf32>, vector<16x16xf32>, vector<16x16xf32> -> vector<16x16xf32>
    %cst_89 = arith.constant 2.500000e-01 : f32
    %275 = vector.broadcast %cst_89 : f32 to vector<16x16xf32>
    %276 = arith.mulf %274, %275 : vector<16x16xf32>
    %277 = vector.broadcast %10 : vector<1x16xf32> to vector<16x16xf32>
    %278 = arith.addf %276, %277 : vector<16x16xf32>
    %cst_90 = arith.constant dense<0xFF800000> : vector<16xf32>
    %279 = vector.multi_reduction <maximumf>, %278, %cst_90 [1] : vector<16x16xf32> to vector<16xf32>
    %280 = vector.shape_cast %279 : vector<16xf32> to vector<16x1xf32>
    %281 = vector.broadcast %280 : vector<16x1xf32> to vector<16x16xf32>
    %282 = arith.subf %278, %281 : vector<16x16xf32>
    %283 = math.exp %282 : vector<16x16xf32>
    %cst_91 = arith.constant dense<0.000000e+00> : vector<16xf32>
    %284 = vector.multi_reduction <add>, %283, %cst_91 [1] : vector<16x16xf32> to vector<16xf32>
    %285 = vector.shape_cast %284 : vector<16xf32> to vector<16x1xf32>
    %286 = tpu.reciprocal %285 {approx = true} : vector<16x1xf32> -> vector<16x1xf32>
    %287 = vector.broadcast %286 : vector<16x1xf32> to vector<16x16xf32>
    %288 = arith.mulf %283, %287 : vector<16x16xf32>
    %cst_92 = arith.constant dense<0.000000e+00> : vector<16x16xf32>
    %289 = tpu.matmul %288, %240, %cst_92 {dimension_numbers = #tpu.dot_dimension_numbers<[1], [0], [0], [1], [0, 0, 1, 1], [], []>} : vector<16x16xf32>, vector<16x16xf32>, vector<16x16xf32> -> vector<16x16xf32>
    %cst_93 = arith.constant dense<0.000000e+00> : vector<16x16xf32>
    %290 = tpu.matmul %233, %237, %cst_93 {dimension_numbers = #tpu.dot_dimension_numbers<[1], [1], [0], [0], [0, 0, 1, 0], [], []>} : vector<16x16xf32>, vector<16x16xf32>, vector<16x16xf32> -> vector<16x16xf32>
    %cst_94 = arith.constant 2.500000e-01 : f32
    %291 = vector.broadcast %cst_94 : f32 to vector<16x16xf32>
    %292 = arith.mulf %290, %291 : vector<16x16xf32>
    %293 = vector.broadcast %10 : vector<1x16xf32> to vector<16x16xf32>
    %294 = arith.addf %292, %293 : vector<16x16xf32>
    %cst_95 = arith.constant dense<0xFF800000> : vector<16xf32>
    %295 = vector.multi_reduction <maximumf>, %294, %cst_95 [1] : vector<16x16xf32> to vector<16xf32>
    %296 = vector.shape_cast %295 : vector<16xf32> to vector<16x1xf32>
    %297 = vector.broadcast %296 : vector<16x1xf32> to vector<16x16xf32>
    %298 = arith.subf %294, %297 : vector<16x16xf32>
    %299 = math.exp %298 : vector<16x16xf32>
    %cst_96 = arith.constant dense<0.000000e+00> : vector<16xf32>
    %300 = vector.multi_reduction <add>, %299, %cst_96 [1] : vector<16x16xf32> to vector<16xf32>
    %301 = vector.shape_cast %300 : vector<16xf32> to vector<16x1xf32>
    %302 = tpu.reciprocal %301 {approx = true} : vector<16x1xf32> -> vector<16x1xf32>
    %303 = vector.broadcast %302 : vector<16x1xf32> to vector<16x16xf32>
    %304 = arith.mulf %299, %303 : vector<16x16xf32>
    %cst_97 = arith.constant dense<0.000000e+00> : vector<16x16xf32>
    %305 = tpu.matmul %304, %241, %cst_97 {dimension_numbers = #tpu.dot_dimension_numbers<[1], [0], [0], [1], [0, 0, 1, 1], [], []>} : vector<16x16xf32>, vector<16x16xf32>, vector<16x16xf32> -> vector<16x16xf32>
    %306 = tpu.concatenate %257, %273, %289, %305 in 1 : vector<16x16xf32>, vector<16x16xf32>, vector<16x16xf32>, vector<16x16xf32> -> vector<16x64xf32>
    %307 = arith.truncf %306 : vector<16x64xf32> to vector<16x64xbf16>
    %c1_98 = arith.constant 1 : index
    %c0_99 = arith.constant 0 : index
    %c0_100 = arith.constant 0 : index
    %308 = vector.load %arg6[%c1_98, %c0_99, %c0_100] : memref<2x64x64xbf16, #tpu.memory_space<vmem>>, vector<1x64x64xbf16>
    %309 = vector.shape_cast %308 : vector<1x64x64xbf16> to vector<64x64xbf16>
    %cst_101 = arith.constant dense<0.000000e+00> : vector<16x64xf32>
    %310 = tpu.matmul %307, %309, %cst_101 {dimension_numbers = #tpu.dot_dimension_numbers<[1], [0], [0], [1], [0, 0, 1, 1], [], []>} : vector<16x64xbf16>, vector<64x64xbf16>, vector<16x64xf32> -> vector<16x64xf32>
    %311 = vector.broadcast %217 : vector<1x64xf32> to vector<16x64xf32>
    %312 = arith.addf %310, %311 : vector<16x64xf32>
    %313 = arith.addf %213, %312 : vector<16x64xf32>
    %cst_102 = arith.constant dense<0.000000e+00> : vector<16xf32>
    %314 = vector.multi_reduction <add>, %313, %cst_102 [1] : vector<16x64xf32> to vector<16xf32>
    %315 = vector.shape_cast %314 : vector<16xf32> to vector<16x1xf32>
    %cst_103 = arith.constant 6.400000e+01 : f32
    %316 = vector.broadcast %cst_103 : f32 to vector<16x1xf32>
    %317 = arith.divf %315, %316 : vector<16x1xf32>
    %318 = vector.broadcast %317 : vector<16x1xf32> to vector<16x64xf32>
    %319 = arith.subf %313, %318 : vector<16x64xf32>
    %320 = arith.mulf %319, %319 : vector<16x64xf32>
    %cst_104 = arith.constant dense<0.000000e+00> : vector<16xf32>
    %321 = vector.multi_reduction <add>, %320, %cst_104 [1] : vector<16x64xf32> to vector<16xf32>
    %322 = vector.shape_cast %321 : vector<16xf32> to vector<16x1xf32>
    %cst_105 = arith.constant 6.400000e+01 : f32
    %323 = vector.broadcast %cst_105 : f32 to vector<16x1xf32>
    %324 = arith.divf %322, %323 : vector<16x1xf32>
    %325 = vector.broadcast %317 : vector<16x1xf32> to vector<16x64xf32>
    %326 = arith.subf %313, %325 : vector<16x64xf32>
    %cst_106 = arith.constant 9.99999974E-6 : f32
    %327 = vector.broadcast %cst_106 : f32 to vector<16x1xf32>
    %328 = arith.addf %324, %327 : vector<16x1xf32>
    %329 = math.rsqrt %328 : vector<16x1xf32>
    %330 = vector.broadcast %329 : vector<16x1xf32> to vector<16x64xf32>
    %331 = arith.mulf %326, %330 : vector<16x64xf32>
    %332 = vector.broadcast %218 : vector<1x64xf32> to vector<16x64xf32>
    %333 = arith.mulf %331, %332 : vector<16x64xf32>
    %334 = vector.broadcast %219 : vector<1x64xf32> to vector<16x64xf32>
    %335 = arith.addf %333, %334 : vector<16x64xf32>
    %336 = arith.truncf %335 : vector<16x64xf32> to vector<16x64xbf16>
    %c1_107 = arith.constant 1 : index
    %c0_108 = arith.constant 0 : index
    %c0_109 = arith.constant 0 : index
    %337 = vector.load %arg7[%c1_107, %c0_108, %c0_109] : memref<2x64x128xbf16, #tpu.memory_space<vmem>>, vector<1x64x128xbf16>
    %338 = vector.shape_cast %337 : vector<1x64x128xbf16> to vector<64x128xbf16>
    %cst_110 = arith.constant dense<0.000000e+00> : vector<16x128xf32>
    %339 = tpu.matmul %336, %338, %cst_110 {dimension_numbers = #tpu.dot_dimension_numbers<[1], [0], [0], [1], [0, 0, 1, 1], [], []>} : vector<16x64xbf16>, vector<64x128xbf16>, vector<16x128xf32> -> vector<16x128xf32>
    %340 = vector.broadcast %220 : vector<1x128xf32> to vector<16x128xf32>
    %341 = arith.addf %339, %340 : vector<16x128xf32>
    %cst_111 = arith.constant 5.000000e-01 : f32
    %342 = vector.broadcast %cst_111 : f32 to vector<16x128xf32>
    %343 = arith.mulf %342, %341 : vector<16x128xf32>
    %cst_112 = arith.constant 0.707106769 : f32
    %344 = vector.broadcast %cst_112 : f32 to vector<16x128xf32>
    %345 = arith.mulf %341, %344 : vector<16x128xf32>
    %346 = math.absf %345 : vector<16x128xf32>
    %cst_113 = arith.constant 0.327591091 : f32
    %347 = vector.broadcast %cst_113 : f32 to vector<16x128xf32>
    %348 = arith.mulf %347, %346 : vector<16x128xf32>
    %cst_114 = arith.constant 1.000000e+00 : f32
    %349 = vector.broadcast %cst_114 : f32 to vector<16x128xf32>
    %350 = arith.addf %349, %348 : vector<16x128xf32>
    %cst_115 = arith.constant 1.000000e+00 : f32
    %351 = vector.broadcast %cst_115 : f32 to vector<16x128xf32>
    %352 = arith.divf %351, %350 : vector<16x128xf32>
    %cst_116 = arith.constant 1.06140542 : f32
    %353 = vector.broadcast %cst_116 : f32 to vector<16x128xf32>
    %354 = arith.mulf %353, %352 : vector<16x128xf32>
    %cst_117 = arith.constant -1.45315206 : f32
    %355 = vector.broadcast %cst_117 : f32 to vector<16x128xf32>
    %356 = arith.addf %354, %355 : vector<16x128xf32>
    %357 = arith.mulf %356, %352 : vector<16x128xf32>
    %cst_118 = arith.constant 1.42141378 : f32
    %358 = vector.broadcast %cst_118 : f32 to vector<16x128xf32>
    %359 = arith.addf %357, %358 : vector<16x128xf32>
    %360 = arith.mulf %359, %352 : vector<16x128xf32>
    %cst_119 = arith.constant -0.284496725 : f32
    %361 = vector.broadcast %cst_119 : f32 to vector<16x128xf32>
    %362 = arith.addf %360, %361 : vector<16x128xf32>
    %363 = arith.mulf %362, %352 : vector<16x128xf32>
    %cst_120 = arith.constant 0.254829586 : f32
    %364 = vector.broadcast %cst_120 : f32 to vector<16x128xf32>
    %365 = arith.addf %363, %364 : vector<16x128xf32>
    %366 = arith.mulf %365, %352 : vector<16x128xf32>
    %cst_121 = arith.constant 0.000000e+00 : f32
    %367 = vector.broadcast %cst_121 : f32 to vector<16x128xf32>
    %368 = arith.subf %367, %346 : vector<16x128xf32>
    %369 = arith.mulf %368, %346 : vector<16x128xf32>
    %370 = math.exp %369 : vector<16x128xf32>
    %371 = arith.mulf %366, %370 : vector<16x128xf32>
    %cst_122 = arith.constant 1.000000e+00 : f32
    %372 = vector.broadcast %cst_122 : f32 to vector<16x128xf32>
    %373 = arith.subf %372, %371 : vector<16x128xf32>
    %cst_123 = arith.constant 0.000000e+00 : f32
    %374 = vector.broadcast %cst_123 : f32 to vector<16x128xf32>
    %375 = arith.cmpf oge, %345, %374 : vector<16x128xf32>
    %cst_124 = arith.constant 0.000000e+00 : f32
    %376 = vector.broadcast %cst_124 : f32 to vector<16x128xf32>
    %377 = arith.subf %376, %373 : vector<16x128xf32>
    %378 = arith.select %375, %373, %377 : vector<16x128xi1>, vector<16x128xf32>
    %cst_125 = arith.constant 1.000000e+00 : f32
    %379 = vector.broadcast %cst_125 : f32 to vector<16x128xf32>
    %380 = arith.addf %379, %378 : vector<16x128xf32>
    %381 = arith.mulf %343, %380 : vector<16x128xf32>
    %382 = arith.truncf %381 : vector<16x128xf32> to vector<16x128xbf16>
    %c1_126 = arith.constant 1 : index
    %c0_127 = arith.constant 0 : index
    %c0_128 = arith.constant 0 : index
    %383 = vector.load %arg8[%c1_126, %c0_127, %c0_128] : memref<2x128x64xbf16, #tpu.memory_space<vmem>>, vector<1x128x64xbf16>
    %384 = vector.shape_cast %383 : vector<1x128x64xbf16> to vector<128x64xbf16>
    %cst_129 = arith.constant dense<0.000000e+00> : vector<16x64xf32>
    %385 = tpu.matmul %382, %384, %cst_129 {dimension_numbers = #tpu.dot_dimension_numbers<[1], [0], [0], [1], [0, 0, 1, 1], [], []>} : vector<16x128xbf16>, vector<128x64xbf16>, vector<16x64xf32> -> vector<16x64xf32>
    %386 = vector.broadcast %221 : vector<1x64xf32> to vector<16x64xf32>
    %387 = arith.addf %385, %386 : vector<16x64xf32>
    %388 = arith.addf %335, %387 : vector<16x64xf32>
    %cst_130 = arith.constant dense<0.000000e+00> : vector<16xf32>
    %389 = vector.multi_reduction <add>, %388, %cst_130 [1] : vector<16x64xf32> to vector<16xf32>
    %390 = vector.shape_cast %389 : vector<16xf32> to vector<16x1xf32>
    %cst_131 = arith.constant 6.400000e+01 : f32
    %391 = vector.broadcast %cst_131 : f32 to vector<16x1xf32>
    %392 = arith.divf %390, %391 : vector<16x1xf32>
    %393 = vector.broadcast %392 : vector<16x1xf32> to vector<16x64xf32>
    %394 = arith.subf %388, %393 : vector<16x64xf32>
    %395 = arith.mulf %394, %394 : vector<16x64xf32>
    %cst_132 = arith.constant dense<0.000000e+00> : vector<16xf32>
    %396 = vector.multi_reduction <add>, %395, %cst_132 [1] : vector<16x64xf32> to vector<16xf32>
    %397 = vector.shape_cast %396 : vector<16xf32> to vector<16x1xf32>
    %cst_133 = arith.constant 6.400000e+01 : f32
    %398 = vector.broadcast %cst_133 : f32 to vector<16x1xf32>
    %399 = arith.divf %397, %398 : vector<16x1xf32>
    %400 = vector.broadcast %392 : vector<16x1xf32> to vector<16x64xf32>
    %401 = arith.subf %388, %400 : vector<16x64xf32>
    %cst_134 = arith.constant 9.99999974E-6 : f32
    %402 = vector.broadcast %cst_134 : f32 to vector<16x1xf32>
    %403 = arith.addf %399, %402 : vector<16x1xf32>
    %404 = math.rsqrt %403 : vector<16x1xf32>
    %405 = vector.broadcast %404 : vector<16x1xf32> to vector<16x64xf32>
    %406 = arith.mulf %401, %405 : vector<16x64xf32>
    %407 = vector.broadcast %222 : vector<1x64xf32> to vector<16x64xf32>
    %408 = arith.mulf %406, %407 : vector<16x64xf32>
    %409 = vector.broadcast %223 : vector<1x64xf32> to vector<16x64xf32>
    %410 = arith.addf %408, %409 : vector<16x64xf32>
    %411 = vector.extract_strided_slice %410 {offsets = [0, 0], sizes = [1, 64], strides = [1, 1]} : vector<16x64xf32> to vector<1x64xf32>
    %c2 = arith.constant 2 : index
    %c0_135 = arith.constant 0 : index
    %c0_136 = arith.constant 0 : index
    %412 = vector.load %arg9[%c2, %c0_135, %c0_136] : memref<3x8x192xf32, #tpu.memory_space<vmem>>, vector<1x1x64xf32>
    %413 = vector.shape_cast %412 : vector<1x1x64xf32> to vector<1x64xf32>
    %c2_137 = arith.constant 2 : index
    %c1_138 = arith.constant 1 : index
    %c0_139 = arith.constant 0 : index
    %414 = vector.load %arg9[%c2_137, %c1_138, %c0_139] : memref<3x8x192xf32, #tpu.memory_space<vmem>>, vector<1x1x64xf32>
    %415 = vector.shape_cast %414 : vector<1x1x64xf32> to vector<1x64xf32>
    %cst_140 = arith.constant dense<0.000000e+00> : vector<1xf32>
    %416 = vector.multi_reduction <add>, %411, %cst_140 [1] : vector<1x64xf32> to vector<1xf32>
    %417 = vector.shape_cast %416 : vector<1xf32> to vector<1x1xf32>
    %cst_141 = arith.constant 6.400000e+01 : f32
    %418 = vector.broadcast %cst_141 : f32 to vector<1x1xf32>
    %419 = arith.divf %417, %418 : vector<1x1xf32>
    %420 = vector.broadcast %419 : vector<1x1xf32> to vector<1x64xf32>
    %421 = arith.subf %411, %420 : vector<1x64xf32>
    %422 = arith.mulf %421, %421 : vector<1x64xf32>
    %cst_142 = arith.constant dense<0.000000e+00> : vector<1xf32>
    %423 = vector.multi_reduction <add>, %422, %cst_142 [1] : vector<1x64xf32> to vector<1xf32>
    %424 = vector.shape_cast %423 : vector<1xf32> to vector<1x1xf32>
    %cst_143 = arith.constant 6.400000e+01 : f32
    %425 = vector.broadcast %cst_143 : f32 to vector<1x1xf32>
    %426 = arith.divf %424, %425 : vector<1x1xf32>
    %427 = vector.broadcast %419 : vector<1x1xf32> to vector<1x64xf32>
    %428 = arith.subf %411, %427 : vector<1x64xf32>
    %cst_144 = arith.constant 9.99999974E-6 : f32
    %429 = vector.broadcast %cst_144 : f32 to vector<1x1xf32>
    %430 = arith.addf %426, %429 : vector<1x1xf32>
    %431 = math.rsqrt %430 : vector<1x1xf32>
    %432 = vector.broadcast %431 : vector<1x1xf32> to vector<1x64xf32>
    %433 = arith.mulf %428, %432 : vector<1x64xf32>
    %434 = arith.mulf %433, %413 : vector<1x64xf32>
    %435 = arith.addf %434, %415 : vector<1x64xf32>
    %c0_145 = arith.constant 0 : index
    %c0_146 = arith.constant 0 : index
    %c0_147 = arith.constant 0 : index
    %436 = vector.load %arg10[%c0_145, %c0_146, %c0_147] : memref<1x1x64xf32, #tpu.memory_space<vmem>>, vector<1x1x64xf32>
    %437 = vector.shape_cast %436 : vector<1x1x64xf32> to vector<1x64xf32>
    %438 = vector.shape_cast %435 : vector<1x64xf32> to vector<1x1x64xf32>
    tpu.vector_store %arg10[%c0_145, %c0_146, %c0_147], %438 {strides = array<i32>} : memref<1x1x64xf32, #tpu.memory_space<vmem>>, vector<1x1x64xf32>,
    return
  }
  func.func @transform_0(%arg0: i32, %arg1: memref<2xi32, #tpu.memory_space<smem>>) -> (i32, i32, i32) {
    %c0_i32 = arith.constant 0 : i32
    %c0_i32_0 = arith.constant 0 : i32
    %c0_i32_1 = arith.constant 0 : i32
    return %arg0, %c0_i32, %c0_i32_0 : i32, i32, i32
  }
  func.func @transform_1(%arg0: i32, %arg1: memref<2xi32, #tpu.memory_space<smem>>) -> (i32, i32) {
    %c0_i32 = arith.constant 0 : i32
    %c0_i32_0 = arith.constant 0 : i32
    %c0_i32_1 = arith.constant 0 : i32
    return %c0_i32, %c0_i32_0 : i32, i32
  }
  func.func @transform_2(%arg0: i32, %arg1: memref<2xi32, #tpu.memory_space<smem>>) -> (i32, i32) {
    %c0_i32 = arith.constant 0 : i32
    %c0_i32_0 = arith.constant 0 : i32
    %c0_i32_1 = arith.constant 0 : i32
    return %c0_i32, %c0_i32_0 : i32, i32
  }
  func.func @transform_3(%arg0: i32, %arg1: memref<2xi32, #tpu.memory_space<smem>>) -> (i32, i32, i32) {
    %c0_i32 = arith.constant 0 : i32
    %c0_i32_0 = arith.constant 0 : i32
    %c0_i32_1 = arith.constant 0 : i32
    %c0_i32_2 = arith.constant 0 : i32
    return %c0_i32, %c0_i32_0, %c0_i32_1 : i32, i32, i32
  }
  func.func @transform_4(%arg0: i32, %arg1: memref<2xi32, #tpu.memory_space<smem>>) -> (i32, i32, i32) {
    %c0_i32 = arith.constant 0 : i32
    %c0_i32_0 = arith.constant 0 : i32
    %c0_i32_1 = arith.constant 0 : i32
    %c0_i32_2 = arith.constant 0 : i32
    return %c0_i32, %c0_i32_0, %c0_i32_1 : i32, i32, i32
  }
  func.func @transform_5(%arg0: i32, %arg1: memref<2xi32, #tpu.memory_space<smem>>) -> (i32, i32, i32) {
    %c0_i32 = arith.constant 0 : i32
    %c0_i32_0 = arith.constant 0 : i32
    %c0_i32_1 = arith.constant 0 : i32
    %c0_i32_2 = arith.constant 0 : i32
    return %c0_i32, %c0_i32_0, %c0_i32_1 : i32, i32, i32
  }
  func.func @transform_6(%arg0: i32, %arg1: memref<2xi32, #tpu.memory_space<smem>>) -> (i32, i32, i32) {
    %c0_i32 = arith.constant 0 : i32
    %c0_i32_0 = arith.constant 0 : i32
    %c0_i32_1 = arith.constant 0 : i32
    %c0_i32_2 = arith.constant 0 : i32
    return %c0_i32, %c0_i32_0, %c0_i32_1 : i32, i32, i32
  }
  func.func @transform_7(%arg0: i32, %arg1: memref<2xi32, #tpu.memory_space<smem>>) -> (i32, i32, i32) {
    %c0_i32 = arith.constant 0 : i32
    %c0_i32_0 = arith.constant 0 : i32
    %c0_i32_1 = arith.constant 0 : i32
    %c0_i32_2 = arith.constant 0 : i32
    return %c0_i32, %c0_i32_0, %c0_i32_1 : i32, i32, i32
  }
  func.func @transform_8(%arg0: i32, %arg1: memref<2xi32, #tpu.memory_space<smem>>) -> (i32, i32, i32) {
    %c0_i32 = arith.constant 0 : i32
    %c0_i32_0 = arith.constant 0 : i32
    %c0_i32_1 = arith.constant 0 : i32
    return %arg0, %c0_i32, %c0_i32_0 : i32, i32, i32
  }
}

</mosaic_0001>

<llo_original>
// kernel: style_classification_forward.1
$region0: #{style_classification_forward.1}
  #allocation0 [shape = 'u32[]', space=smem, size = 0x4, offset = 0x4, fixed_abs, tag = 'smem constant byte address 0x4 - core index']
  #allocation1 [shape = 'u32[144,128]{1,0:T(1,128)}', space=vmem, size = 0x12000, scoped, tag = 'internal scratch']
  #allocation2 [shape = 's32[1]{0}', space=sflag, size = 0x4, scoped, tag = 'scoped memory for style_classification_forward.1']
  #allocation3 [shape = 'u8[512]{0}', space=smem, size = 0x200, scoped, tag = 'prefetched SMEM operand 0']
  %s0 = inlined_call_operand.vmem [shape: s32[2], index: 0, kind: input, shape index: {}]
  %s1 = inlined_call_operand.vmem [shape: bf16[2,16,264], index: 1, kind: input, shape index: {}]
  %s2 = inlined_call_operand.vmem [shape: f32[16,64], index: 2, kind: input, shape index: {}]
  %s3 = inlined_call_operand.vmem [shape: bf16[264,64], index: 3, kind: input, shape index: {}]
  %s4 = inlined_call_operand.vmem [shape: bf16[2,64,192], index: 4, kind: input, shape index: {}]
  %s5 = inlined_call_operand.vmem [shape: bf16[2,64,64], index: 5, kind: input, shape index: {}]
  %s6 = inlined_call_operand.vmem [shape: bf16[2,64,128], index: 6, kind: input, shape index: {}]
  %s7 = inlined_call_operand.vmem [shape: bf16[2,128,64], index: 7, kind: input, shape index: {}]
  %s8 = inlined_call_operand.vmem [shape: f32[3,8,192], index: 8, kind: input, shape index: {}]
  %s9 = inlined_call_operand.hbm [shape: f32[2,1,64], index: 9, kind: output, shape index: {}]
  %s10 = sld [smem:[#allocation0]]
  $region65: #{style_classification_forward.1} parent=0
    _
  %s12 = ssub.s32 1, %s10
  %s13 = scalar_select 0, %s12, %s10
  %s14 = sshll.u32 %s0, 4
  %s15 = int_to_ptr.vmem [resolvable:$true] %s14
  %17 = dma.vmem_to_smem %s15, 16, [#allocation3], [#allocation2]
  %18 = dma.done [#allocation2], 16
  %19 = sfence
  $region1: #{style_classification_forward.1} parent=0
    #allocation4 [shape = 'u8[1024]{0}', space=vmem, size = 0x400, scoped, tag = 'output window, operand 0']
    #allocation5 [shape = 's32[2]{0}', space=sflag, size = 0x8, scoped, tag = 'scoped memory for style_classification_forward.1']
    %20 = vsyncpa [#allocation5], 0
    %s21 = scalar_lea.sflag [#allocation5], 1
    %22 = vsyncpa %s21, 0
    loop: start=0, step=1, limit=4
    $region2: #{style_classification_forward.1} parent=1 // loop_pre_header
      _
    $region3: #{style_classification_forward.1} parent=1 // loop_header
      %s24 = sphi 0, %s28
      %p25 = scmp.ge.s32.totalorder %s24, 4
      %s34 = sphi 0, %s36
      %s37 = sphi 0, %s34
      %s38 = sphi 0, %s37
      %s54 = sphi 0, %s38
      %s58 = sphi 0, %s58
      %s60 = sphi 0, %s58
      %s61 = sphi 0, %s60
      %s75 = sphi 0, %s61
      %s79 = sphi 0, %s79
      %s81 = sphi 0, %s79
      %s82 = sphi 0, %s81
      %s96 = sphi 0, %s82
      %s100 = sphi 0, %s100
      %s102 = sphi 0, %s100
      %s103 = sphi 0, %s102
      %s117 = sphi 0, %s103
      %s121 = sphi 0, %s121
      %s123 = sphi 0, %s121
      %s124 = sphi 0, %s123
      %s138 = sphi 0, %s124
      %s142 = sphi 0, %s142
      %s144 = sphi 0, %s142
      %s145 = sphi 0, %s144
      %s159 = sphi 0, %s145
      %s163 = sphi 0, %s163
      %s165 = sphi 0, %s163
      %s166 = sphi 0, %s165
      %s180 = sphi 0, %s166
      %s184 = sphi 0, %s184
      %s186 = sphi 0, %s184
      %s187 = sphi 0, %s186
      %s201 = sphi 0, %s187
      %s207 = sphi 0, %s209
      %s210 = sphi 0, %s207
      %s211 = sphi 0, %s210
      %s227 = sphi 0, %s211
    $region4: #{style_classification_forward.1} parent=1 // loop_header_branch
      %27 = sbr.rel (%p25) target = $region8
    $region5: #{style_classification_forward.1} parent=1 // loop_body
      %s29 = ssub.s32 %s24, 1
      %s30 = ssub.s32 %s24, 2
      %s31 = sadd.s32 %s24, 1
      %s32 = ssub.s32 %s24, %s31
      %p33 = scmp.eq.s32.totalorder %s32, 0
      %s35 = sadd.s32 %s34, 1
      %s36 = scalar_select %p33, %s34, %s35
      %p39 = pneg %p33
      %p40 = scmp.eq.s32.totalorder %s24, 1
      %p41 = por %p39, %p40
      %p42 = scmp.ne.s32.totalorder %s34, %s37
      %p43 = scmp.eq.s32.totalorder %s24, 0
      %p44 = por %p42, %p43
      %p45 = scmp.ne.s32.totalorder %s34, %s37
      %p46 = scmp.eq.s32.totalorder %s29, 1
      %p47 = por %p45, %p46
      %p48 = scmp.ne.s32.totalorder %s37, %s38
      %p49 = scmp.eq.s32.totalorder %s29, 0
      %p50 = por %p48, %p49
      %p51 = scmp.ne.s32.totalorder %s37, %s38
      %p52 = scmp.eq.s32.totalorder %s30, 1
      %p53 = por %p51, %p52
      %p55 = scmp.ne.s32.totalorder %s38, %s54
      %p56 = scmp.eq.s32.totalorder %s30, 0
      %p57 = por %p55, %p56
      %s59 = sadd.s32 %s58, 1
      %p62 = scmp.eq.s32.totalorder %s24, 1
      %p63 = scmp.ne.s32.totalorder %s58, %s60
      %p64 = scmp.eq.s32.totalorder %s24, 0
      %p65 = por %p63, %p64
      %p66 = scmp.ne.s32.totalorder %s58, %s60
      %p67 = scmp.eq.s32.totalorder %s29, 1
      %p68 = por %p66, %p67
      %p69 = scmp.ne.s32.totalorder %s60, %s61
      %p70 = scmp.eq.s32.totalorder %s29, 0
      %p71 = por %p69, %p70
      %p72 = scmp.ne.s32.totalorder %s60, %s61
      %p73 = scmp.eq.s32.totalorder %s30, 1
      %p74 = por %p72, %p73
      %p76 = scmp.ne.s32.totalorder %s61, %s75
      %p77 = scmp.eq.s32.totalorder %s30, 0
      %p78 = por %p76, %p77
      %s80 = sadd.s32 %s79, 1
      %p83 = scmp.eq.s32.totalorder %s24, 1
      %p84 = scmp.ne.s32.totalorder %s79, %s81
      %p85 = scmp.eq.s32.totalorder %s24, 0
      %p86 = por %p84, %p85
      %p87 = scmp.ne.s32.totalorder %s79, %s81
      %p88 = scmp.eq.s32.totalorder %s29, 1
      %p89 = por %p87, %p88
      %p90 = scmp.ne.s32.totalorder %s81, %s82
      %p91 = scmp.eq.s32.totalorder %s29, 0
      %p92 = por %p90, %p91
      %p93 = scmp.ne.s32.totalorder %s81, %s82
      %p94 = scmp.eq.s32.totalorder %s30, 1
      %p95 = por %p93, %p94
      %p97 = scmp.ne.s32.totalorder %s82, %s96
      %p98 = scmp.eq.s32.totalorder %s30, 0
      %p99 = por %p97, %p98
      %s101 = sadd.s32 %s100, 1
      %p104 = scmp.eq.s32.totalorder %s24, 1
      %p105 = scmp.ne.s32.totalorder %s100, %s102
      %p106 = scmp.eq.s32.totalorder %s24, 0
      %p107 = por %p105, %p106
      %p108 = scmp.ne.s32.totalorder %s100, %s102
      %p109 = scmp.eq.s32.totalorder %s29, 1
      %p110 = por %p108, %p109
      %p111 = scmp.ne.s32.totalorder %s102, %s103
      %p112 = scmp.eq.s32.totalorder %s29, 0
      %p113 = por %p111, %p112
      %p114 = scmp.ne.s32.totalorder %s102, %s103
      %p115 = scmp.eq.s32.totalorder %s30, 1
      %p116 = por %p114, %p115
      %p118 = scmp.ne.s32.totalorder %s103, %s117
      %p119 = scmp.eq.s32.totalorder %s30, 0
      %p120 = por %p118, %p119
      %s122 = sadd.s32 %s121, 1
      %p125 = scmp.eq.s32.totalorder %s24, 1
      %p126 = scmp.ne.s32.totalorder %s121, %s123
      %p127 = scmp.eq.s32.totalorder %s24, 0
      %p128 = por %p126, %p127
      %p129 = scmp.ne.s32.totalorder %s121, %s123
      %p130 = scmp.eq.s32.totalorder %s29, 1
      %p131 = por %p129, %p130
      %p132 = scmp.ne.s32.totalorder %s123, %s124
      %p133 = scmp.eq.s32.totalorder %s29, 0
      %p134 = por %p132, %p133
      %p135 = scmp.ne.s32.totalorder %s123, %s124
      %p136 = scmp.eq.s32.totalorder %s30, 1
      %p137 = por %p135, %p136
      %p139 = scmp.ne.s32.totalorder %s124, %s138
      %p140 = scmp.eq.s32.totalorder %s30, 0
      %p141 = por %p139, %p140
      %s143 = sadd.s32 %s142, 1
      %p146 = scmp.eq.s32.totalorder %s24, 1
      %p147 = scmp.ne.s32.totalorder %s142, %s144
      %p148 = scmp.eq.s32.totalorder %s24, 0
      %p149 = por %p147, %p148
      %p150 = scmp.ne.s32.totalorder %s142, %s144
      %p151 = scmp.eq.s32.totalorder %s29, 1
      %p152 = por %p150, %p151
      %p153 = scmp.ne.s32.totalorder %s144, %s145
      %p154 = scmp.eq.s32.totalorder %s29, 0
      %p155 = por %p153, %p154
      %p156 = scmp.ne.s32.totalorder %s144, %s145
      %p157 = scmp.eq.s32.totalorder %s30, 1
      %p158 = por %p156, %p157
      %p160 = scmp.ne.s32.totalorder %s145, %s159
      %p161 = scmp.eq.s32.totalorder %s30, 0
      %p162 = por %p160, %p161
      %s164 = sadd.s32 %s163, 1
      %p167 = scmp.eq.s32.totalorder %s24, 1
      %p168 = scmp.ne.s32.totalorder %s163, %s165
      %p169 = scmp.eq.s32.totalorder %s24, 0
      %p170 = por %p168, %p169
      %p171 = scmp.ne.s32.totalorder %s163, %s165
      %p172 = scmp.eq.s32.totalorder %s29, 1
      %p173 = por %p171, %p172
      %p174 = scmp.ne.s32.totalorder %s165, %s166
      %p175 = scmp.eq.s32.totalorder %s29, 0
      %p176 = por %p174, %p175
      %p177 = scmp.ne.s32.totalorder %s165, %s166
      %p178 = scmp.eq.s32.totalorder %s30, 1
      %p179 = por %p177, %p178
      %p181 = scmp.ne.s32.totalorder %s166, %s180
      %p182 = scmp.eq.s32.totalorder %s30, 0
      %p183 = por %p181, %p182
      %s185 = sadd.s32 %s184, 1
      %p188 = scmp.eq.s32.totalorder %s24, 1
      %p189 = scmp.ne.s32.totalorder %s184, %s186
      %p190 = scmp.eq.s32.totalorder %s24, 0
      %p191 = por %p189, %p190
      %p192 = scmp.ne.s32.totalorder %s184, %s186
      %p193 = scmp.eq.s32.totalorder %s29, 1
      %p194 = por %p192, %p193
      %p195 = scmp.ne.s32.totalorder %s186, %s187
      %p196 = scmp.eq.s32.totalorder %s29, 0
      %p197 = por %p195, %p196
      %p198 = scmp.ne.s32.totalorder %s186, %s187
      %p199 = scmp.eq.s32.totalorder %s30, 1
      %p200 = por %p198, %p199
      %p202 = scmp.ne.s32.totalorder %s187, %s201
      %p203 = scmp.eq.s32.totalorder %s30, 0
      %p204 = por %p202, %p203
      %s205 = ssub.s32 %s24, %s31
      %p206 = scmp.eq.s32.totalorder %s205, 0
      %s208 = sadd.s32 %s207, 1
      %s209 = scalar_select %p206, %s207, %s208
      %p212 = pneg %p206
      %p213 = scmp.eq.s32.totalorder %s24, 1
      %p214 = por %p212, %p213
      %p215 = scmp.ne.s32.totalorder %s207, %s210
      %p216 = scmp.eq.s32.totalorder %s24, 0
      %p217 = por %p215, %p216
      %p218 = scmp.ne.s32.totalorder %s207, %s210
      %p219 = scmp.eq.s32.totalorder %s29, 1
      %p220 = por %p218, %p219
      %p221 = scmp.ne.s32.totalorder %s210, %s211
      %p222 = scmp.eq.s32.totalorder %s29, 0
      %p223 = por %p221, %p222
      %p224 = scmp.ne.s32.totalorder %s210, %s211
      %p225 = scmp.eq.s32.totalorder %s30, 1
      %p226 = por %p224, %p225
      %p228 = scmp.ne.s32.totalorder %s211, %s227
      %p229 = scmp.eq.s32.totalorder %s30, 0
      %p230 = por %p228, %p229
      %p231 = scmp.le.s32.totalorder 1, %s24
      %p232 = scmp.lt.s32.totalorder %s24, 3
      %p233 = pnand %p231, %p232
      %p234 = pneg %p233
      // Predicated region
      $region9: #{style_classification_forward.1} parent=5 // pred_check
        _
      $region10: #{style_classification_forward.1} parent=5 // pred_check_branch
        %236 = sbr.rel (%p233) target = $region12
      $region11: #{style_classification_forward.1} parent=5 // pred_region
        %s237 = ssub.s32 %s24, 1
        // Predicated region
        $region13: #{style_classification_forward.1} parent=11 // pred_check
          %p238 = pneg %p71
        $region14: #{style_classification_forward.1} parent=11 // pred_check_branch
          %240 = sbr.rel (%p238) target = $region16
        $region15: #{style_classification_forward.1} parent=11 // pred_region
          _
        $region16: #{style_classification_forward.1} parent=11 // pred_fallthru
          _
        // Predicated region
        $region17: #{style_classification_forward.1} parent=11 // pred_check
          %p241 = pneg %p92
        $region18: #{style_classification_forward.1} parent=11 // pred_check_branch
          %243 = sbr.rel (%p241) target = $region20
        $region19: #{style_classification_forward.1} parent=11 // pred_region
          _
        $region20: #{style_classification_forward.1} parent=11 // pred_fallthru
          _
        // Predicated region
        $region21: #{style_classification_forward.1} parent=11 // pred_check
          %p244 = pneg %p113
        $region22: #{style_classification_forward.1} parent=11 // pred_check_branch
          %246 = sbr.rel (%p244) target = $region24
        $region23: #{style_classification_forward.1} parent=11 // pred_region
          _
        $region24: #{style_classification_forward.1} parent=11 // pred_fallthru
          _
        // Predicated region
        $region25: #{style_classification_forward.1} parent=11 // pred_check
          %p247 = pneg %p134
        $region26: #{style_classification_forward.1} parent=11 // pred_check_branch
          %249 = sbr.rel (%p247) target = $region28
        $region27: #{style_classification_forward.1} parent=11 // pred_region
          _
        $region28: #{style_classification_forward.1} parent=11 // pred_fallthru
          _
        // Predicated region
        $region29: #{style_classification_forward.1} parent=11 // pred_check
          %p250 = pneg %p155
        $region30: #{style_classification_forward.1} parent=11 // pred_check_branch
          %252 = sbr.rel (%p250) target = $region32
        $region31: #{style_classification_forward.1} parent=11 // pred_region
          _
        $region32: #{style_classification_forward.1} parent=11 // pred_fallthru
          _
        // Predicated region
        $region33: #{style_classification_forward.1} parent=11 // pred_check
          %p253 = pneg %p176
        $region34: #{style_classification_forward.1} parent=11 // pred_check_branch
          %255 = sbr.rel (%p253) target = $region36
        $region35: #{style_classification_forward.1} parent=11 // pred_region
          _
        $region36: #{style_classification_forward.1} parent=11 // pred_fallthru
          _
        // Predicated region
        $region37: #{style_classification_forward.1} parent=11 // pred_check
          %p256 = pneg %p197
        $region38: #{style_classification_forward.1} parent=11 // pred_check_branch
          %258 = sbr.rel (%p256) target = $region40
        $region39: #{style_classification_forward.1} parent=11 // pred_region
          _
        $region40: #{style_classification_forward.1} parent=11 // pred_fallthru
          _
      $region12: #{style_classification_forward.1} parent=5 // pred_fallthru
        _
      %p259 = scmp.lt.s32.totalorder %s24, 2
      // Predicated region
      $region41: #{style_classification_forward.1} parent=5 // pred_check
        %p260 = pneg %p259
      $region42: #{style_classification_forward.1} parent=5 // pred_check_branch
        %262 = sbr.rel (%p260) target = $region44
      $region43: #{style_classification_forward.1} parent=5 // pred_region
        // Predicated region
        $region45: #{style_classification_forward.1} parent=43 // pred_check
          %p263 = pneg %p44
        $region46: #{style_classification_forward.1} parent=43 // pred_check_branch
          %265 = sbr.rel (%p263) target = $region48
        $region47: #{style_classification_forward.1} parent=43 // pred_region
          %p266 = scmp.lt.s32.totalorder %s24, 1
          %s267 = scalar_select %p266, %s24, 1
          %s268 = smul.addr %s267, 6
          %s269 = smul.addr %s268, 4
          %s270 = scalar_lea.vmem %s1, %s269
        $region48: #{style_classification_forward.1} parent=43 // pred_fallthru
          _
      $region44: #{style_classification_forward.1} parent=5 // pred_fallthru
        _
      %p271 = scmp.le.s32.totalorder 1, %s24
      %p272 = scmp.lt.s32.totalorder %s24, 3
      %p273 = pnand %p271, %p272
      %p274 = pneg %p273
      // Predicated region
      $region49: #{style_classification_forward.1} parent=5 // pred_check
        _
      $region50: #{style_classification_forward.1} parent=5 // pred_check_branch
        %276 = sbr.rel (%p273) target = $region52
      $region51: #{style_classification_forward.1} parent=5 // pred_region
        %s277 = ssub.s32 %s24, 1
        %p278 = scmp.lt.s32.totalorder %s29, 1
        %s279 = scalar_select %p278, %s29, 1
        %s280 = smul.addr %s279, 6
        %s281 = smul.addr %s280, 4
        %s282 = scalar_lea.vmem %s1, %s281
        %p283 = pneg %p50
        %p284 = pneg %p47
        %p285 = pneg %p71
        %p286 = pneg %p68
        %p287 = pneg %p92
        %p288 = pneg %p89
        %p289 = pneg %p113
        %p290 = pneg %p110
        %p291 = pneg %p134
        %p292 = pneg %p131
        %p293 = pneg %p155
        %p294 = pneg %p152
        %p295 = pneg %p176
        %p296 = pneg %p173
        %p297 = pneg %p197
        %p298 = pneg %p194
        %p299 = pneg %p223
        %p300 = pneg %p220
        %s301 = sand.u32 %s210, 1
        %s302 = scalar_lea.sflag [#allocation5], %s301
        %s303 = sand.u32 %s210, 1
        %s304 = scalar_lea.vmem [#allocation4], %s303
        %p305 = scmp.lt.s32.totalorder %s29, 1
        %s306 = scalar_select %p305, %s29, 1
        %s307 = smul.addr %s306, 6
        %s308 = smul.addr %s307, 4
        %s309 = scalar_lea.vmem %s1, %s308
        %v311 = vlaneseq
        %v312 = vand.u32 %v311, 127
        %s313 = sld [smem:[#allocation3 + %s29]]
        %s314 = sadd.s32 %s313, 2
        %v315 = vstv %s314
        %vm316 = vcmp.lt.s32.totalorder %v312, %v315
        %v317 = vsel %vm316, 0.0, -1e+30
        %v318 = vld [vmem:[%s309] sm:$0xff]
        %v319 = vld [vmem:[%s309 + $0x8] sm:$0xf]
        %v320 = vld [vmem:[%s309 + $0xc] sm:$0xff]
        %v321 = vld [vmem:[%s309 + $0x14] sm:$0xf]
        %v322 = vld [vmem:[%s3] sm:$0xf]
        %v323 = vld [vmem:[%s3 + $0x4] sm:$0xf]
        %v324 = vld [vmem:[%s3 + $0x8] sm:$0xf]
        %v325 = vld [vmem:[%s3 + $0xc] sm:$0xf]
        %v326 = vld [vmem:[%s3 + $0x10] sm:$0xf]
        %v327 = vld [vmem:[%s3 + $0x14] sm:$0xf]
        %v328 = vld [vmem:[%s3 + $0x18] sm:$0xf]
        %v329 = vld [vmem:[%s3 + $0x1c] sm:$0xf]
        %v330 = vld [vmem:[%s3 + $0x20] sm:$0xf]
        %v331 = vld [vmem:[%s3 + $0x24] sm:$0xf]
        %v332 = vld [vmem:[%s3 + $0x28] sm:$0xf]
        %v333 = vld [vmem:[%s3 + $0x2c] sm:$0xf]
        %v334 = vld [vmem:[%s3 + $0x30] sm:$0xf]
        %v335 = vld [vmem:[%s3 + $0x34] sm:$0xf]
        %v336 = vld [vmem:[%s3 + $0x38] sm:$0xf]
        %v337 = vld [vmem:[%s3 + $0x3c] sm:$0xf]
        %v338 = vld [vmem:[%s3 + $0x40] sm:$0xf]
        %v339 = vld [vmem:[%s3 + $0x44] sm:$0xf]
        %v340 = vld [vmem:[%s3 + $0x48] sm:$0xf]
        %v341 = vld [vmem:[%s3 + $0x4c] sm:$0xf]
        %v342 = vld [vmem:[%s3 + $0x50] sm:$0xf]
        %v343 = vld [vmem:[%s3 + $0x54] sm:$0xf]
        %v344 = vld [vmem:[%s3 + $0x58] sm:$0xf]
        %v345 = vld [vmem:[%s3 + $0x5c] sm:$0xf]
        %v346 = vld [vmem:[%s3 + $0x60] sm:$0xf]
        %v347 = vld [vmem:[%s3 + $0x64] sm:$0xf]
        %v348 = vld [vmem:[%s3 + $0x68] sm:$0xf]
        %v349 = vld [vmem:[%s3 + $0x6c] sm:$0xf]
        %v350 = vld [vmem:[%s3 + $0x70] sm:$0xf]
        %v351 = vld [vmem:[%s3 + $0x74] sm:$0xf]
        %v352 = vld [vmem:[%s3 + $0x78] sm:$0xf]
        %v353 = vld [vmem:[%s3 + $0x7c] sm:$0xf]
        %v354 = vld [vmem:[%s3 + $0x80] sm:$0xf]
        %v355 = vld [vmem:[%s2] sm:$0xff]
        %v356 = vld [vmem:[%s2 + $0x8] sm:$0xff]
        %v361 = vunpack.c.l.b16 %v318
        %v362 = vunpack.c.h.b16 %v318
        %v363 = vunpack.c.l.b16 %v319
        %v364 = vunpack.c.l.b16 %v320
        %v365 = vunpack.c.h.b16 %v320
        %v366 = vunpack.c.l.b16 %v321
        %v367 = vpack.c.b16 %v364, %v361
        %v368 = vpack.c.b16 %v365, %v362
        %v369 = vpack.c.b16 %v366, %v363
        %v405 = vunpack.c.l.b16 %v322
        %v406 = vunpack.c.l.b16 %v323
        %v407 = vunpack.c.l.b16 %v324
        %v408 = vunpack.c.l.b16 %v325
        %v409 = vunpack.c.l.b16 %v326
        %v410 = vunpack.c.l.b16 %v327
        %v411 = vunpack.c.l.b16 %v328
        %v412 = vunpack.c.l.b16 %v329
        %v413 = vunpack.c.l.b16 %v330
        %v414 = vunpack.c.l.b16 %v331
        %v415 = vunpack.c.l.b16 %v332
        %v416 = vunpack.c.l.b16 %v333
        %v417 = vunpack.c.l.b16 %v334
        %v418 = vunpack.c.l.b16 %v335
        %v419 = vunpack.c.l.b16 %v336
        %v420 = vunpack.c.l.b16 %v337
        %v421 = vunpack.c.l.b16 %v338
        %v422 = vunpack.c.l.b16 %v339
        %v423 = vunpack.c.l.b16 %v340
        %v424 = vunpack.c.l.b16 %v341
        %v425 = vunpack.c.l.b16 %v342
        %v426 = vunpack.c.l.b16 %v343
        %v427 = vunpack.c.l.b16 %v344
        %v428 = vunpack.c.l.b16 %v345
        %v429 = vunpack.c.l.b16 %v346
        %v430 = vunpack.c.l.b16 %v347
        %v431 = vunpack.c.l.b16 %v348
        %v432 = vunpack.c.l.b16 %v349
        %v433 = vunpack.c.l.b16 %v350
        %v434 = vunpack.c.l.b16 %v351
        %v435 = vunpack.c.l.b16 %v352
        %v436 = vunpack.c.l.b16 %v353
        %v437 = vunpack.c.l.b16 %v354
        %v438 = vpack.c.b16 %v406, %v405
        %v439 = vpack.c.b16 %v408, %v407
        %v440 = vpack.c.b16 %v410, %v409
        %v441 = vpack.c.b16 %v412, %v411
        %v442 = vpack.c.b16 %v414, %v413
        %v443 = vpack.c.b16 %v416, %v415
        %v444 = vpack.c.b16 %v418, %v417
        %v445 = vpack.c.b16 %v420, %v419
        %v446 = vpack.c.b16 %v422, %v421
        %v447 = vpack.c.b16 %v424, %v423
        %v448 = vpack.c.b16 %v426, %v425
        %v449 = vpack.c.b16 %v428, %v427
        %v450 = vpack.c.b16 %v430, %v429
        %v451 = vpack.c.b16 %v432, %v431
        %v452 = vpack.c.b16 %v434, %v433
        %v453 = vpack.c.b16 %v436, %v435
        %v454 = vpack.c.b16 %v437, %v437
        %vm471 = vcmask 64512
        %v473 = vsel %vm471, %v369, 0
        %vm475 = vcmask 1043456
        %v477 = vsel %vm475, %v454, 0
        %479 = vmatprep.subr.bf16.mxu0 0
        %480 = vmatpush1.bf16.msra.mxu0 %v445
        %481 = vmatprep.subr.bf16.mxu0 0
        %482 = vmatpush1.bf16.msra.mxu0 %v444
        %483 = vmatprep.subr.bf16.mxu0 0
        %484 = vmatpush1.bf16.msra.mxu0 %v443
        %485 = vmatprep.subr.bf16.mxu0 0
        %486 = vmatpush1.bf16.msra.mxu0 %v442
        %487 = vmatprep.subr.bf16.mxu0 0
        %488 = vmatpush1.bf16.msra.mxu0 %v441
        %489 = vmatprep.subr.bf16.mxu0 0
        %490 = vmatpush1.bf16.msra.mxu0 %v440
        %491 = vmatprep.subr.bf16.mxu0 0
        %492 = vmatpush1.bf16.msra.mxu0 %v439
        %493 = vmatprep.subr.bf16.mxu0 0
        %494 = vmatpush1.bf16.msra.mxu0 %v438
        %495 = vmatprep.subr.bf16.mxu0 0
        %496 = vmatpush2.bf16.msra.mxu0 %v453
        %497 = vmatprep.subr.bf16.mxu0 0
        %498 = vmatpush2.bf16.msra.mxu0 %v452
        %499 = vmatprep.subr.bf16.mxu0 0
        %500 = vmatpush2.bf16.msra.mxu0 %v451
        %501 = vmatprep.subr.bf16.mxu0 0
        %502 = vmatpush2.bf16.msra.mxu0 %v450
        %503 = vmatprep.subr.bf16.mxu0 0
        %504 = vmatpush2.bf16.msra.mxu0 %v449
        %505 = vmatprep.subr.bf16.mxu0 0
        %506 = vmatpush2.bf16.msra.mxu0 %v448
        %507 = vmatprep.subr.bf16.mxu0 0
        %508 = vmatpush2.bf16.msra.mxu0 %v447
        %509 = vmatprep.subr.bf16.mxu0 0
        %510 = vmatpush2.bf16.msra.mxu0 %v446
        %511 = vmatprep.mubr.bf16.mxu0 %v368
        %512 = vmatmul.mubr.bf16.gmra.mxu0 %v367
        %v513 = vpop.f32.mrf.mxu0
        %v514 = vadd.f32 %v355, %v513
        %v515 = vpop.f32.mrf.mxu0
        %v516 = vpop.f32.mrf.mxu0
        %v517 = vadd.f32 %v356, %v516
        %v518 = vpop.f32.mrf.mxu0
        %519 = vdwg.mxu0
        %520 = vmatprep.subr.bf16.mxu0 0
        %521 = vmatpush1.bf16.msra.mxu0 0
        %522 = vmatprep.subr.bf16.mxu0 0
        %523 = vmatpush1.bf16.msra.mxu0 0
        %524 = vmatprep.subr.bf16.mxu0 0
        %525 = vmatpush1.bf16.msra.mxu0 0
        %526 = vmatprep.subr.bf16.mxu0 0
        %527 = vmatpush1.bf16.msra.mxu0 0
        %528 = vmatprep.subr.bf16.mxu0 0
        %529 = vmatpush1.bf16.msra.mxu0 0
        %530 = vmatprep.subr.bf16.mxu0 0
        %531 = vmatpush1.bf16.msra.mxu0 0
        %532 = vmatprep.subr.bf16.mxu0 0
        %533 = vmatpush1.bf16.msra.mxu0 0
        %534 = vmatprep.subr.bf16.mxu0 0
        %535 = vmatpush1.bf16.msra.mxu0 %v477
        %536 = vmatprep.subr.bf16.mxu0 0
        %537 = vmatpush2.bf16.msra.mxu0 0
        %538 = vmatprep.subr.bf16.mxu0 0
        %539 = vmatpush2.bf16.msra.mxu0 0
        %540 = vmatprep.subr.bf16.mxu0 0
        %541 = vmatpush2.bf16.msra.mxu0 0
        %542 = vmatprep.subr.bf16.mxu0 0
        %543 = vmatpush2.bf16.msra.mxu0 0
        %544 = vmatprep.subr.bf16.mxu0 0
        %545 = vmatpush2.bf16.msra.mxu0 0
        %546 = vmatprep.subr.bf16.mxu0 0
        %547 = vmatpush2.bf16.msra.mxu0 0
        %548 = vmatprep.subr.bf16.mxu0 0
        %549 = vmatpush2.bf16.msra.mxu0 0
        %550 = vmatprep.subr.bf16.mxu0 0
        %551 = vmatpush2.bf16.msra.mxu0 0
        %552 = vmatprep.mubr.bf16.mxu0 0
        %553 = vmatmul.mubr.bf16.gmra.mxu0 %v473
        %v554 = vpop.f32.mrf.mxu0
        %v555 = vadd.f32 %v514, %v554
        %v556 = vpop.f32.mrf.mxu0
        %v557 = vpop.f32.mrf.mxu0
        %v558 = vadd.f32 %v517, %v557
        %v559 = vpop.f32.mrf.mxu0
        %560 = vdwg.mxu0
        %v561 = vld [vmem:[%s8] sm:$0xff]
        %v562 = vld [vmem:[%s8 + $0x8] sm:$0xff]
        %v563 = vpack.c.bf16 %v558, %v555
        %v564 = vld [vmem:[%s4] sm:$0xff]
        %v565 = vld [vmem:[%s4 + $0x8] sm:$0xff]
        %v566 = vld [vmem:[%s4 + $0x10] sm:$0xff]
        %v567 = vld [vmem:[%s4 + $0x18] sm:$0xff]
        %v568 = vld [vmem:[%s4 + $0x20] sm:$0xff]
        %v569 = vld [vmem:[%s4 + $0x28] sm:$0xff]
        %v570 = vld [vmem:[%s4 + $0x30] sm:$0xff]
        %v571 = vld [vmem:[%s4 + $0x38] sm:$0xff]
        %v572 = vlaneseq
        %v573 = vshrl.u32 %v572, 7
        %v574 = vsub.s32 0, %v573
        %v575 = vrot.slane %v561, %v574
        %v576 = vlaneseq
        %v577 = vshrl.u32 %v576, 7
        %v578 = vsub.s32 0, %v577
        %v579 = vrot.slane %v562, %v578
        %v588 = vunpack.c.l.b16 %v564
        %v589 = vunpack.c.h.b16 %v564
        %v590 = vunpack.c.l.b16 %v565
        %v591 = vunpack.c.h.b16 %v565
        %v592 = vunpack.c.l.b16 %v566
        %v593 = vunpack.c.h.b16 %v566
        %v594 = vunpack.c.l.b16 %v567
        %v595 = vunpack.c.h.b16 %v567
        %v596 = vunpack.c.l.b16 %v568
        %v597 = vunpack.c.h.b16 %v568
        %v598 = vunpack.c.l.b16 %v569
        %v599 = vunpack.c.h.b16 %v569
        %v600 = vunpack.c.l.b16 %v570
        %v601 = vunpack.c.h.b16 %v570
        %v602 = vunpack.c.l.b16 %v571
        %v603 = vunpack.c.h.b16 %v571
        %v604 = vpack.c.b16 %v590, %v588
        %v605 = vpack.c.b16 %v591, %v589
        %v606 = vpack.c.b16 %v594, %v592
        %v607 = vpack.c.b16 %v595, %v593
        %v608 = vpack.c.b16 %v598, %v596
        %v609 = vpack.c.b16 %v599, %v597
        %v610 = vpack.c.b16 %v602, %v600
        %v611 = vpack.c.b16 %v603, %v601
        %vm620 = vcmask 523264
        %v622 = vsel %vm620, %v563, 0
        %624 = vmatprep.subr.bf16.mxu0 0
        %625 = vmatpush1.bf16.msra.mxu0 0
        %626 = vmatprep.subr.bf16.mxu0 0
        %627 = vmatpush1.bf16.msra.mxu0 0
        %628 = vmatprep.subr.bf16.mxu0 0
        %629 = vmatpush1.bf16.msra.mxu0 0
        %630 = vmatprep.subr.bf16.mxu0 0
        %631 = vmatpush1.bf16.msra.mxu0 0
        %632 = vmatprep.subr.bf16.mxu0 %v611
        %633 = vmatpush1.bf16.msra.mxu0 %v610
        %634 = vmatprep.subr.bf16.mxu0 %v609
        %635 = vmatpush1.bf16.msra.mxu0 %v608
        %636 = vmatprep.subr.bf16.mxu0 %v607
        %637 = vmatpush1.bf16.msra.mxu0 %v606
        %638 = vmatprep.subr.bf16.mxu0 %v605
        %639 = vmatpush1.bf16.msra.mxu0 %v604
        %640 = vmatprep.subr.bf16.mxu0 0
        %641 = vmatpush2.bf16.msra.mxu0 0
        %642 = vmatprep.subr.bf16.mxu0 0
        %643 = vmatpush2.bf16.msra.mxu0 0
        %644 = vmatprep.subr.bf16.mxu0 0
        %645 = vmatpush2.bf16.msra.mxu0 0
        %646 = vmatprep.subr.bf16.mxu0 0
        %647 = vmatpush2.bf16.msra.mxu0 0
        %648 = vmatprep.subr.bf16.mxu0 0
        %649 = vmatpush2.bf16.msra.mxu0 0
        %650 = vmatprep.subr.bf16.mxu0 0
        %651 = vmatpush2.bf16.msra.mxu0 0
        %652 = vmatprep.subr.bf16.mxu0 0
        %653 = vmatpush2.bf16.msra.mxu0 0
        %654 = vmatprep.subr.bf16.mxu0 0
        %655 = vmatpush2.bf16.msra.mxu0 0
        %656 = vmatprep.mubr.bf16.mxu0 0
        %657 = vmatmul.mubr.bf16.gmra.mxu0 %v622
        %v658 = vpop.f32.mrf.mxu0
        %v659 = vadd.f32 %v575, %v658
        %v660 = vpop.f32.mrf.mxu0
        %v661 = vadd.f32 %v579, %v660
        %v662 = vpop.f32.mrf.mxu0
        %v663 = vadd.f32 %v575, %v662
        %v664 = vpop.f32.mrf.mxu0
        %v665 = vadd.f32 %v579, %v664
        %666 = vdwg.mxu0
        %669 = vrot.lane.b32.xlu0 %v659, 64
        %v670 = vpop.permute.xlu0 %669
        %671 = vrot.lane.b32.xlu0 %v663, 64
        %v672 = vpop.permute.xlu0 %671
        %vm673 = vcmask 130048
        %v674 = vsel %vm673, %v659, 0
        %v676 = vsel %vm673, %v663, 0
        %v678 = vsel %vm673, %v670, 0
        %v680 = vsel %vm673, %v672, 0
        %682 = vmatprep.subr.mxu0 0.0
        %683 = vmatpush1.xpose.msra.mxu0 0.0
        %684 = vmatprep.subr.mxu0 0.0
        %685 = vmatpush1.xpose.msra.mxu0 0.0
        %686 = vmatprep.subr.mxu0 0.0
        %687 = vmatpush1.xpose.msra.mxu0 0.0
        %688 = vmatprep.subr.mxu0 0.0
        %689 = vmatpush1.xpose.msra.mxu0 0.0
        %690 = vmatprep.subr.mxu0 0.0
        %691 = vmatpush1.xpose.msra.mxu0 0.0
        %692 = vmatprep.subr.mxu0 0.0
        %693 = vmatpush1.xpose.msra.mxu0 0.0
        %694 = vmatprep.subr.mxu0 0.0
        %695 = vmatpush1.xpose.msra.mxu0 0.0
        %696 = vmatprep.subr.mxu0 0.0
        %697 = vmatpush1.xpose.msra.mxu0 0.0
        %698 = vmatprep.subr.mxu0 0.0
        %699 = vmatpush1.xpose.msra.mxu0 0.0
        %700 = vmatprep.subr.mxu0 0.0
        %701 = vmatpush1.xpose.msra.mxu0 0.0
        %702 = vmatprep.subr.mxu0 0.0
        %703 = vmatpush1.xpose.msra.mxu0 0.0
        %704 = vmatprep.subr.mxu0 0.0
        %705 = vmatpush1.xpose.msra.mxu0 0.0
        %706 = vmatprep.subr.mxu0 0.0
        %707 = vmatpush1.xpose.msra.mxu0 0.0
        %708 = vmatprep.subr.mxu0 0.0
        %709 = vmatpush1.xpose.msra.mxu0 0.0
        %710 = vmatprep.subr.mxu0 0.0
        %711 = vmatpush1.xpose.msra.mxu0 %v680
        %712 = vmatprep.subr.mxu0 0.0
        %713 = vmatpush1.xpose.msra.mxu0 %v678
        %714 = vmatprep.subr.mxu0 0.0
        %715 = vmatpush2.xpose.msra.mxu0 0.0
        %716 = vmatprep.subr.mxu0 0.0
        %717 = vmatpush2.xpose.msra.mxu0 0.0
        %718 = vmatprep.subr.mxu0 0.0
        %719 = vmatpush2.xpose.msra.mxu0 0.0
        %720 = vmatprep.subr.mxu0 0.0
        %721 = vmatpush2.xpose.msra.mxu0 0.0
        %722 = vmatprep.subr.mxu0 0.0
        %723 = vmatpush2.xpose.msra.mxu0 0.0
        %724 = vmatprep.subr.mxu0 0.0
        %725 = vmatpush2.xpose.msra.mxu0 0.0
        %726 = vmatprep.subr.mxu0 0.0
        %727 = vmatpush2.xpose.msra.mxu0 0.0
        %728 = vmatprep.subr.mxu0 0.0
        %729 = vmatpush2.xpose.msra.mxu0 0.0
        %730 = vmatprep.subr.mxu0 0.0
        %731 = vmatpush2.xpose.msra.mxu0 0.0
        %732 = vmatprep.subr.mxu0 0.0
        %733 = vmatpush2.xpose.msra.mxu0 0.0
        %734 = vmatprep.subr.mxu0 0.0
        %735 = vmatpush2.xpose.msra.mxu0 0.0
        %736 = vmatprep.subr.mxu0 0.0
        %737 = vmatpush2.xpose.msra.mxu0 0.0
        %738 = vmatprep.subr.mxu0 0.0
        %739 = vmatpush2.xpose.msra.mxu0 0.0
        %740 = vmatprep.subr.mxu0 0.0
        %741 = vmatpush2.xpose.msra.mxu0 0.0
        %742 = vmatprep.subr.mxu0 0.0
        %743 = vmatpush2.xpose.msra.mxu0 0.0
        %744 = vmatprep.subr.mxu0 0.0
        %745 = vmatpush2.xpose.msra.mxu0 0.0
        %746 = vmatprep.mubr.f32.mxu0 0.0
        %747 = vmatmul.mubr.f32.gmra.mxu0 %v674
        %v748 = vpop.f32.mrf.mxu0
        %v749 = vadd.f32 0.0, %v748
        %v750 = vpop.f32.mrf.mxu0
        %751 = vmatprep.mubr.f32.mxu0 0.0
        %752 = vmatmul.mubr.f32.gmra.mxu0 %v676
        %v753 = vpop.f32.mrf.mxu0
        %v754 = vadd.f32 0.0, %v753
        %v755 = vpop.f32.mrf.mxu0
        %756 = vdwg.mxu0
        %v757 = vmul.f32 %v749, 0.25
        %v758 = vmul.f32 %v754, 0.25
        %v759 = vadd.f32 %v757, %v317
        %v760 = vadd.f32 %v758, %v317
        %v761 = vsel %vm673, %v759, -inf
        %762 = vmax.xlane.f32.xlu0 %v761
        %v763 = vpop.xlane.xlu0 %762
        %v764 = vsel %vm673, %v760, -inf
        %765 = vmax.xlane.f32.xlu0 %v764
        %v766 = vpop.xlane.xlu0 %765
        %v767 = vsub.f32 %v759, %v763
        %v768 = vsub.f32 %v760, %v766
        %v769 = vmul.f32 %v767, 1.442695
        %v770 = vpow.pop %v769
        %v771 = vmul.f32 %v768, 1.442695
        %v772 = vpow.pop %v771
        %v773 = vsel %vm673, %v770, 0.0
        %774 = vadd.xlane.f32.xlu0 %v773
        %v775 = vpop.xlane.xlu0 %774
        %v776 = vsel %vm673, %v772, 0.0
        %777 = vadd.xlane.f32.xlu0 %v776
        %v778 = vpop.xlane.xlu0 %777
        %v779 = vrcp.pop %v775
        %v780 = vrcp.pop %v778
        %v781 = vmul.f32 %v770, %v779
        %v782 = vmul.f32 %v772, %v780
        %v784 = vsel %vm673, %v781, 0
        %v787 = vsel %vm673, %v782, 0
        %789 = vmatprep.subr.mxu0 0.0
        %790 = vmatpush1.msra.mxu0 0.0
        %791 = vmatprep.subr.mxu0 0.0
        %792 = vmatpush1.msra.mxu0 0.0
        %793 = vmatprep.subr.mxu0 0.0
        %794 = vmatpush1.msra.mxu0 0.0
        %795 = vmatprep.subr.mxu0 0.0
        %796 = vmatpush1.msra.mxu0 0.0
        %797 = vmatprep.subr.mxu0 0.0
        %798 = vmatpush1.msra.mxu0 0.0
        %799 = vmatprep.subr.mxu0 0.0
        %800 = vmatpush1.msra.mxu0 0.0
        %801 = vmatprep.subr.mxu0 0.0
        %802 = vmatpush1.msra.mxu0 0.0
        %803 = vmatprep.subr.mxu0 0.0
        %804 = vmatpush1.msra.mxu0 0.0
        %805 = vmatprep.subr.mxu0 0.0
        %806 = vmatpush1.msra.mxu0 0.0
        %807 = vmatprep.subr.mxu0 0.0
        %808 = vmatpush1.msra.mxu0 0.0
        %809 = vmatprep.subr.mxu0 0.0
        %810 = vmatpush1.msra.mxu0 0.0
        %811 = vmatprep.subr.mxu0 0.0
        %812 = vmatpush1.msra.mxu0 0.0
        %813 = vmatprep.subr.mxu0 0.0
        %814 = vmatpush1.msra.mxu0 0.0
        %815 = vmatprep.subr.mxu0 0.0
        %816 = vmatpush1.msra.mxu0 0.0
        %817 = vmatprep.subr.mxu0 0.0
        %818 = vmatpush1.msra.mxu0 %v665
        %819 = vmatprep.subr.mxu0 0.0
        %820 = vmatpush1.msra.mxu0 %v661
        %821 = vmatprep.subr.mxu0 0.0
        %822 = vmatpush2.msra.mxu0 0.0
        %823 = vmatprep.subr.mxu0 0.0
        %824 = vmatpush2.msra.mxu0 0.0
        %825 = vmatprep.subr.mxu0 0.0
        %826 = vmatpush2.msra.mxu0 0.0
        %827 = vmatprep.subr.mxu0 0.0
        %828 = vmatpush2.msra.mxu0 0.0
        %829 = vmatprep.subr.mxu0 0.0
        %830 = vmatpush2.msra.mxu0 0.0
        %831 = vmatprep.subr.mxu0 0.0
        %832 = vmatpush2.msra.mxu0 0.0
        %833 = vmatprep.subr.mxu0 0.0
        %834 = vmatpush2.msra.mxu0 0.0
        %835 = vmatprep.subr.mxu0 0.0
        %836 = vmatpush2.msra.mxu0 0.0
        %837 = vmatprep.subr.mxu0 0.0
        %838 = vmatpush2.msra.mxu0 0.0
        %839 = vmatprep.subr.mxu0 0.0
        %840 = vmatpush2.msra.mxu0 0.0
        %841 = vmatprep.subr.mxu0 0.0
        %842 = vmatpush2.msra.mxu0 0.0
        %843 = vmatprep.subr.mxu0 0.0
        %844 = vmatpush2.msra.mxu0 0.0
        %845 = vmatprep.subr.mxu0 0.0
        %846 = vmatpush2.msra.mxu0 0.0
        %847 = vmatprep.subr.mxu0 0.0
        %848 = vmatpush2.msra.mxu0 0.0
        %849 = vmatprep.subr.mxu0 0.0
        %850 = vmatpush2.msra.mxu0 0.0
        %851 = vmatprep.subr.mxu0 0.0
        %852 = vmatpush2.msra.mxu0 0.0
        %853 = vmatprep.mubr.f32.mxu0 0.0
        %854 = vmatmul.mubr.f32.gmra.mxu0 %v784
        %v855 = vpop.f32.mrf.mxu0
        %v856 = vadd.f32 0.0, %v855
        %v857 = vpop.f32.mrf.mxu0
        %858 = vmatprep.mubr.f32.mxu0 0.0
        %859 = vmatmul.mubr.f32.gmra.mxu0 %v787
        %v860 = vpop.f32.mrf.mxu0
        %v861 = vadd.f32 0.0, %v860
        %v862 = vpop.f32.mrf.mxu0
        %863 = vdwg.mxu0
        %864 = vrot.lane.b32.xlu0 %v659, 112
        %v865 = vpop.permute.xlu0 %864
        %866 = vrot.lane.b32.xlu0 %v663, 112
        %v867 = vpop.permute.xlu0 %866
        %868 = vrot.lane.b32.xlu0 %v659, 48
        %v869 = vpop.permute.xlu0 %868
        %870 = vrot.lane.b32.xlu0 %v663, 48
        %v871 = vpop.permute.xlu0 %870
        %v872 = vsel %vm673, %v865, 0
        %v874 = vsel %vm673, %v867, 0
        %v876 = vsel %vm673, %v869, 0
        %v878 = vsel %vm673, %v871, 0
        %880 = vmatprep.subr.mxu0 0.0
        %881 = vmatpush1.xpose.msra.mxu0 0.0
        %882 = vmatprep.subr.mxu0 0.0
        %883 = vmatpush1.xpose.msra.mxu0 0.0
        %884 = vmatprep.subr.mxu0 0.0
        %885 = vmatpush1.xpose.msra.mxu0 0.0
        %886 = vmatprep.subr.mxu0 0.0
        %887 = vmatpush1.xpose.msra.mxu0 0.0
        %888 = vmatprep.subr.mxu0 0.0
        %889 = vmatpush1.xpose.msra.mxu0 0.0
        %890 = vmatprep.subr.mxu0 0.0
        %891 = vmatpush1.xpose.msra.mxu0 0.0
        %892 = vmatprep.subr.mxu0 0.0
        %893 = vmatpush1.xpose.msra.mxu0 0.0
        %894 = vmatprep.subr.mxu0 0.0
        %895 = vmatpush1.xpose.msra.mxu0 0.0
        %896 = vmatprep.subr.mxu0 0.0
        %897 = vmatpush1.xpose.msra.mxu0 0.0
        %898 = vmatprep.subr.mxu0 0.0
        %899 = vmatpush1.xpose.msra.mxu0 0.0
        %900 = vmatprep.subr.mxu0 0.0
        %901 = vmatpush1.xpose.msra.mxu0 0.0
        %902 = vmatprep.subr.mxu0 0.0
        %903 = vmatpush1.xpose.msra.mxu0 0.0
        %904 = vmatprep.subr.mxu0 0.0
        %905 = vmatpush1.xpose.msra.mxu0 0.0
        %906 = vmatprep.subr.mxu0 0.0
        %907 = vmatpush1.xpose.msra.mxu0 0.0
        %908 = vmatprep.subr.mxu0 0.0
        %909 = vmatpush1.xpose.msra.mxu0 %v878
        %910 = vmatprep.subr.mxu0 0.0
        %911 = vmatpush1.xpose.msra.mxu0 %v876
        %912 = vmatprep.subr.mxu0 0.0
        %913 = vmatpush2.xpose.msra.mxu0 0.0
        %914 = vmatprep.subr.mxu0 0.0
        %915 = vmatpush2.xpose.msra.mxu0 0.0
        %916 = vmatprep.subr.mxu0 0.0
        %917 = vmatpush2.xpose.msra.mxu0 0.0
        %918 = vmatprep.subr.mxu0 0.0
        %919 = vmatpush2.xpose.msra.mxu0 0.0
        %920 = vmatprep.subr.mxu0 0.0
        %921 = vmatpush2.xpose.msra.mxu0 0.0
        %922 = vmatprep.subr.mxu0 0.0
        %923 = vmatpush2.xpose.msra.mxu0 0.0
        %924 = vmatprep.subr.mxu0 0.0
        %925 = vmatpush2.xpose.msra.mxu0 0.0
        %926 = vmatprep.subr.mxu0 0.0
        %927 = vmatpush2.xpose.msra.mxu0 0.0
        %928 = vmatprep.subr.mxu0 0.0
        %929 = vmatpush2.xpose.msra.mxu0 0.0
        %930 = vmatprep.subr.mxu0 0.0
        %931 = vmatpush2.xpose.msra.mxu0 0.0
        %932 = vmatprep.subr.mxu0 0.0
        %933 = vmatpush2.xpose.msra.mxu0 0.0
        %934 = vmatprep.subr.mxu0 0.0
        %935 = vmatpush2.xpose.msra.mxu0 0.0
        %936 = vmatprep.subr.mxu0 0.0
        %937 = vmatpush2.xpose.msra.mxu0 0.0
        %938 = vmatprep.subr.mxu0 0.0
        %939 = vmatpush2.xpose.msra.mxu0 0.0
        %940 = vmatprep.subr.mxu0 0.0
        %941 = vmatpush2.xpose.msra.mxu0 0.0
        %942 = vmatprep.subr.mxu0 0.0
        %943 = vmatpush2.xpose.msra.mxu0 0.0
        %944 = vmatprep.mubr.f32.mxu0 0.0
        %945 = vmatmul.mubr.f32.gmra.mxu0 %v872
        %v946 = vpop.f32.mrf.mxu0
        %v947 = vadd.f32 0.0, %v946
        %v948 = vpop.f32.mrf.mxu0
        %949 = vmatprep.mubr.f32.mxu0 0.0
        %950 = vmatmul.mubr.f32.gmra.mxu0 %v874
        %v951 = vpop.f32.mrf.mxu0
        %v952 = vadd.f32 0.0, %v951
        %v953 = vpop.f32.mrf.mxu0
        %954 = vdwg.mxu0
        %v955 = vmul.f32 %v947, 0.25
        %v956 = vmul.f32 %v952, 0.25
        %v957 = vadd.f32 %v955, %v317
        %v958 = vadd.f32 %v956, %v317
        %v959 = vsel %vm673, %v957, -inf
        %960 = vmax.xlane.f32.xlu0 %v959
        %v961 = vpop.xlane.xlu0 %960
        %v962 = vsel %vm673, %v958, -inf
        %963 = vmax.xlane.f32.xlu0 %v962
        %v964 = vpop.xlane.xlu0 %963
        %v965 = vsub.f32 %v957, %v961
        %v966 = vsub.f32 %v958, %v964
        %v967 = vmul.f32 %v965, 1.442695
        %v968 = vpow.pop %v967
        %v969 = vmul.f32 %v966, 1.442695
        %v970 = vpow.pop %v969
        %v971 = vsel %vm673, %v968, 0.0
        %972 = vadd.xlane.f32.xlu0 %v971
        %v973 = vpop.xlane.xlu0 %972
        %v974 = vsel %vm673, %v970, 0.0
        %975 = vadd.xlane.f32.xlu0 %v974
        %v976 = vpop.xlane.xlu0 %975
        %v977 = vrcp.pop %v973
        %v978 = vrcp.pop %v976
        %v979 = vmul.f32 %v968, %v977
        %v980 = vmul.f32 %v970, %v978
        %983 = vrot.lane.b32.xlu0 %v661, 112
        %v984 = vpop.permute.xlu0 %983
        %985 = vrot.lane.b32.xlu0 %v665, 112
        %v986 = vpop.permute.xlu0 %985
        %v990 = vsel %vm673, %v979, 0
        %v993 = vsel %vm673, %v980, 0
        %995 = vmatprep.subr.mxu0 0.0
        %996 = vmatpush1.msra.mxu0 0.0
        %997 = vmatprep.subr.mxu0 0.0
        %998 = vmatpush1.msra.mxu0 0.0
        %999 = vmatprep.subr.mxu0 0.0
        %1000 = vmatpush1.msra.mxu0 0.0
        %1001 = vmatprep.subr.mxu0 0.0
        %1002 = vmatpush1.msra.mxu0 0.0
        %1003 = vmatprep.subr.mxu0 0.0
        %1004 = vmatpush1.msra.mxu0 0.0
        %1005 = vmatprep.subr.mxu0 0.0
        %1006 = vmatpush1.msra.mxu0 0.0
        %1007 = vmatprep.subr.mxu0 0.0
        %1008 = vmatpush1.msra.mxu0 0.0
        %1009 = vmatprep.subr.mxu0 0.0
        %1010 = vmatpush1.msra.mxu0 0.0
        %1011 = vmatprep.subr.mxu0 0.0
        %1012 = vmatpush1.msra.mxu0 0.0
        %1013 = vmatprep.subr.mxu0 0.0
        %1014 = vmatpush1.msra.mxu0 0.0
        %1015 = vmatprep.subr.mxu0 0.0
        %1016 = vmatpush1.msra.mxu0 0.0
        %1017 = vmatprep.subr.mxu0 0.0
        %1018 = vmatpush1.msra.mxu0 0.0
        %1019 = vmatprep.subr.mxu0 0.0
        %1020 = vmatpush1.msra.mxu0 0.0
        %1021 = vmatprep.subr.mxu0 0.0
        %1022 = vmatpush1.msra.mxu0 0.0
        %1023 = vmatprep.subr.mxu0 0.0
        %1024 = vmatpush1.msra.mxu0 %v986
        %1025 = vmatprep.subr.mxu0 0.0
        %1026 = vmatpush1.msra.mxu0 %v984
        %1027 = vmatprep.subr.mxu0 0.0
        %1028 = vmatpush2.msra.mxu0 0.0
        %1029 = vmatprep.subr.mxu0 0.0
        %1030 = vmatpush2.msra.mxu0 0.0
        %1031 = vmatprep.subr.mxu0 0.0
        %1032 = vmatpush2.msra.mxu0 0.0
        %1033 = vmatprep.subr.mxu0 0.0
        %1034 = vmatpush2.msra.mxu0 0.0
        %1035 = vmatprep.subr.mxu0 0.0
        %1036 = vmatpush2.msra.mxu0 0.0
        %1037 = vmatprep.subr.mxu0 0.0
        %1038 = vmatpush2.msra.mxu0 0.0
        %1039 = vmatprep.subr.mxu0 0.0
        %1040 = vmatpush2.msra.mxu0 0.0
        %1041 = vmatprep.subr.mxu0 0.0
        %1042 = vmatpush2.msra.mxu0 0.0
        %1043 = vmatprep.subr.mxu0 0.0
        %1044 = vmatpush2.msra.mxu0 0.0
        %1045 = vmatprep.subr.mxu0 0.0
        %1046 = vmatpush2.msra.mxu0 0.0
        %1047 = vmatprep.subr.mxu0 0.0
        %1048 = vmatpush2.msra.mxu0 0.0
        %1049 = vmatprep.subr.mxu0 0.0
        %1050 = vmatpush2.msra.mxu0 0.0
        %1051 = vmatprep.subr.mxu0 0.0
        %1052 = vmatpush2.msra.mxu0 0.0
        %1053 = vmatprep.subr.mxu0 0.0
        %1054 = vmatpush2.msra.mxu0 0.0
        %1055 = vmatprep.subr.mxu0 0.0
        %1056 = vmatpush2.msra.mxu0 0.0
        %1057 = vmatprep.subr.mxu0 0.0
        %1058 = vmatpush2.msra.mxu0 0.0
        %1059 = vmatprep.mubr.f32.mxu0 0.0
        %1060 = vmatmul.mubr.f32.gmra.mxu0 %v990
        %v1061 = vpop.f32.mrf.mxu0
        %v1062 = vadd.f32 0.0, %v1061
        %v1063 = vpop.f32.mrf.mxu0
        %1064 = vmatprep.mubr.f32.mxu0 0.0
        %1065 = vmatmul.mubr.f32.gmra.mxu0 %v993
        %v1066 = vpop.f32.mrf.mxu0
        %v1067 = vadd.f32 0.0, %v1066
        %v1068 = vpop.f32.mrf.mxu0
        %1069 = vdwg.mxu0
        %1070 = vrot.lane.b32.xlu0 %v659, 96
        %v1071 = vpop.permute.xlu0 %1070
        %1072 = vrot.lane.b32.xlu0 %v663, 96
        %v1073 = vpop.permute.xlu0 %1072
        %1074 = vrot.lane.b32.xlu0 %v659, 32
        %v1075 = vpop.permute.xlu0 %1074
        %1076 = vrot.lane.b32.xlu0 %v663, 32
        %v1077 = vpop.permute.xlu0 %1076
        %v1078 = vsel %vm673, %v1071, 0
        %v1080 = vsel %vm673, %v1073, 0
        %v1082 = vsel %vm673, %v1075, 0
        %v1084 = vsel %vm673, %v1077, 0
        %1086 = vmatprep.subr.mxu0 0.0
        %1087 = vmatpush1.xpose.msra.mxu0 0.0
        %1088 = vmatprep.subr.mxu0 0.0
        %1089 = vmatpush1.xpose.msra.mxu0 0.0
        %1090 = vmatprep.subr.mxu0 0.0
        %1091 = vmatpush1.xpose.msra.mxu0 0.0
        %1092 = vmatprep.subr.mxu0 0.0
        %1093 = vmatpush1.xpose.msra.mxu0 0.0
        %1094 = vmatprep.subr.mxu0 0.0
        %1095 = vmatpush1.xpose.msra.mxu0 0.0
        %1096 = vmatprep.subr.mxu0 0.0
        %1097 = vmatpush1.xpose.msra.mxu0 0.0
        %1098 = vmatprep.subr.mxu0 0.0
        %1099 = vmatpush1.xpose.msra.mxu0 0.0
        %1100 = vmatprep.subr.mxu0 0.0
        %1101 = vmatpush1.xpose.msra.mxu0 0.0
        %1102 = vmatprep.subr.mxu0 0.0
        %1103 = vmatpush1.xpose.msra.mxu0 0.0
        %1104 = vmatprep.subr.mxu0 0.0
        %1105 = vmatpush1.xpose.msra.mxu0 0.0
        %1106 = vmatprep.subr.mxu0 0.0
        %1107 = vmatpush1.xpose.msra.mxu0 0.0
        %1108 = vmatprep.subr.mxu0 0.0
        %1109 = vmatpush1.xpose.msra.mxu0 0.0
        %1110 = vmatprep.subr.mxu0 0.0
        %1111 = vmatpush1.xpose.msra.mxu0 0.0
        %1112 = vmatprep.subr.mxu0 0.0
        %1113 = vmatpush1.xpose.msra.mxu0 0.0
        %1114 = vmatprep.subr.mxu0 0.0
        %1115 = vmatpush1.xpose.msra.mxu0 %v1084
        %1116 = vmatprep.subr.mxu0 0.0
        %1117 = vmatpush1.xpose.msra.mxu0 %v1082
        %1118 = vmatprep.subr.mxu0 0.0
        %1119 = vmatpush2.xpose.msra.mxu0 0.0
        %1120 = vmatprep.subr.mxu0 0.0
        %1121 = vmatpush2.xpose.msra.mxu0 0.0
        %1122 = vmatprep.subr.mxu0 0.0
        %1123 = vmatpush2.xpose.msra.mxu0 0.0
        %1124 = vmatprep.subr.mxu0 0.0
        %1125 = vmatpush2.xpose.msra.mxu0 0.0
        %1126 = vmatprep.subr.mxu0 0.0
        %1127 = vmatpush2.xpose.msra.mxu0 0.0
        %1128 = vmatprep.subr.mxu0 0.0
        %1129 = vmatpush2.xpose.msra.mxu0 0.0
        %1130 = vmatprep.subr.mxu0 0.0
        %1131 = vmatpush2.xpose.msra.mxu0 0.0
        %1132 = vmatprep.subr.mxu0 0.0
        %1133 = vmatpush2.xpose.msra.mxu0 0.0
        %1134 = vmatprep.subr.mxu0 0.0
        %1135 = vmatpush2.xpose.msra.mxu0 0.0
        %1136 = vmatprep.subr.mxu0 0.0
        %1137 = vmatpush2.xpose.msra.mxu0 0.0
        %1138 = vmatprep.subr.mxu0 0.0
        %1139 = vmatpush2.xpose.msra.mxu0 0.0
        %1140 = vmatprep.subr.mxu0 0.0
        %1141 = vmatpush2.xpose.msra.mxu0 0.0
        %1142 = vmatprep.subr.mxu0 0.0
        %1143 = vmatpush2.xpose.msra.mxu0 0.0
        %1144 = vmatprep.subr.mxu0 0.0
        %1145 = vmatpush2.xpose.msra.mxu0 0.0
        %1146 = vmatprep.subr.mxu0 0.0
        %1147 = vmatpush2.xpose.msra.mxu0 0.0
        %1148 = vmatprep.subr.mxu0 0.0
        %1149 = vmatpush2.xpose.msra.mxu0 0.0
        %1150 = vmatprep.mubr.f32.mxu0 0.0
        %1151 = vmatmul.mubr.f32.gmra.mxu0 %v1078
        %v1152 = vpop.f32.mrf.mxu0
        %v1153 = vadd.f32 0.0, %v1152
        %v1154 = vpop.f32.mrf.mxu0
        %1155 = vmatprep.mubr.f32.mxu0 0.0
        %1156 = vmatmul.mubr.f32.gmra.mxu0 %v1080
        %v1157 = vpop.f32.mrf.mxu0
        %v1158 = vadd.f32 0.0, %v1157
        %v1159 = vpop.f32.mrf.mxu0
        %1160 = vdwg.mxu0
        %v1161 = vmul.f32 %v1153, 0.25
        %v1162 = vmul.f32 %v1158, 0.25
        %v1163 = vadd.f32 %v1161, %v317
        %v1164 = vadd.f32 %v1162, %v317
        %v1165 = vsel %vm673, %v1163, -inf
        %1166 = vmax.xlane.f32.xlu0 %v1165
        %v1167 = vpop.xlane.xlu0 %1166
        %v1168 = vsel %vm673, %v1164, -inf
        %1169 = vmax.xlane.f32.xlu0 %v1168
        %v1170 = vpop.xlane.xlu0 %1169
        %v1171 = vsub.f32 %v1163, %v1167
        %v1172 = vsub.f32 %v1164, %v1170
        %v1173 = vmul.f32 %v1171, 1.442695
        %v1174 = vpow.pop %v1173
        %v1175 = vmul.f32 %v1172, 1.442695
        %v1176 = vpow.pop %v1175
        %v1177 = vsel %vm673, %v1174, 0.0
        %1178 = vadd.xlane.f32.xlu0 %v1177
        %v1179 = vpop.xlane.xlu0 %1178
        %v1180 = vsel %vm673, %v1176, 0.0
        %1181 = vadd.xlane.f32.xlu0 %v1180
        %v1182 = vpop.xlane.xlu0 %1181
        %v1183 = vrcp.pop %v1179
        %v1184 = vrcp.pop %v1182
        %v1185 = vmul.f32 %v1174, %v1183
        %v1186 = vmul.f32 %v1176, %v1184
        %1187 = vrot.lane.b32.xlu0 %v661, 96
        %v1188 = vpop.permute.xlu0 %1187
        %1189 = vrot.lane.b32.xlu0 %v665, 96
        %v1190 = vpop.permute.xlu0 %1189
        %v1194 = vsel %vm673, %v1185, 0
        %v1197 = vsel %vm673, %v1186, 0
        %1199 = vmatprep.subr.mxu0 0.0
        %1200 = vmatpush1.msra.mxu0 0.0
        %1201 = vmatprep.subr.mxu0 0.0
        %1202 = vmatpush1.msra.mxu0 0.0
        %1203 = vmatprep.subr.mxu0 0.0
        %1204 = vmatpush1.msra.mxu0 0.0
        %1205 = vmatprep.subr.mxu0 0.0
        %1206 = vmatpush1.msra.mxu0 0.0
        %1207 = vmatprep.subr.mxu0 0.0
        %1208 = vmatpush1.msra.mxu0 0.0
        %1209 = vmatprep.subr.mxu0 0.0
        %1210 = vmatpush1.msra.mxu0 0.0
        %1211 = vmatprep.subr.mxu0 0.0
        %1212 = vmatpush1.msra.mxu0 0.0
        %1213 = vmatprep.subr.mxu0 0.0
        %1214 = vmatpush1.msra.mxu0 0.0
        %1215 = vmatprep.subr.mxu0 0.0
        %1216 = vmatpush1.msra.mxu0 0.0
        %1217 = vmatprep.subr.mxu0 0.0
        %1218 = vmatpush1.msra.mxu0 0.0
        %1219 = vmatprep.subr.mxu0 0.0
        %1220 = vmatpush1.msra.mxu0 0.0
        %1221 = vmatprep.subr.mxu0 0.0
        %1222 = vmatpush1.msra.mxu0 0.0
        %1223 = vmatprep.subr.mxu0 0.0
        %1224 = vmatpush1.msra.mxu0 0.0
        %1225 = vmatprep.subr.mxu0 0.0
        %1226 = vmatpush1.msra.mxu0 0.0
        %1227 = vmatprep.subr.mxu0 0.0
        %1228 = vmatpush1.msra.mxu0 %v1190
        %1229 = vmatprep.subr.mxu0 0.0
        %1230 = vmatpush1.msra.mxu0 %v1188
        %1231 = vmatprep.subr.mxu0 0.0
        %1232 = vmatpush2.msra.mxu0 0.0
        %1233 = vmatprep.subr.mxu0 0.0
        %1234 = vmatpush2.msra.mxu0 0.0
        %1235 = vmatprep.subr.mxu0 0.0
        %1236 = vmatpush2.msra.mxu0 0.0
        %1237 = vmatprep.subr.mxu0 0.0
        %1238 = vmatpush2.msra.mxu0 0.0
        %1239 = vmatprep.subr.mxu0 0.0
        %1240 = vmatpush2.msra.mxu0 0.0
        %1241 = vmatprep.subr.mxu0 0.0
        %1242 = vmatpush2.msra.mxu0 0.0
        %1243 = vmatprep.subr.mxu0 0.0
        %1244 = vmatpush2.msra.mxu0 0.0
        %1245 = vmatprep.subr.mxu0 0.0
        %1246 = vmatpush2.msra.mxu0 0.0
        %1247 = vmatprep.subr.mxu0 0.0
        %1248 = vmatpush2.msra.mxu0 0.0
        %1249 = vmatprep.subr.mxu0 0.0
        %1250 = vmatpush2.msra.mxu0 0.0
        %1251 = vmatprep.subr.mxu0 0.0
        %1252 = vmatpush2.msra.mxu0 0.0
        %1253 = vmatprep.subr.mxu0 0.0
        %1254 = vmatpush2.msra.mxu0 0.0
        %1255 = vmatprep.subr.mxu0 0.0
        %1256 = vmatpush2.msra.mxu0 0.0
        %1257 = vmatprep.subr.mxu0 0.0
        %1258 = vmatpush2.msra.mxu0 0.0
        %1259 = vmatprep.subr.mxu0 0.0
        %1260 = vmatpush2.msra.mxu0 0.0
        %1261 = vmatprep.subr.mxu0 0.0
        %1262 = vmatpush2.msra.mxu0 0.0
        %1263 = vmatprep.mubr.f32.mxu0 0.0
        %1264 = vmatmul.mubr.f32.gmra.mxu0 %v1194
        %v1265 = vpop.f32.mrf.mxu0
        %v1266 = vadd.f32 0.0, %v1265
        %v1267 = vpop.f32.mrf.mxu0
        %1268 = vmatprep.mubr.f32.mxu0 0.0
        %1269 = vmatmul.mubr.f32.gmra.mxu0 %v1197
        %v1270 = vpop.f32.mrf.mxu0
        %v1271 = vadd.f32 0.0, %v1270
        %v1272 = vpop.f32.mrf.mxu0
        %1273 = vdwg.mxu0
        %1274 = vrot.lane.b32.xlu0 %v659, 80
        %v1275 = vpop.permute.xlu0 %1274
        %1276 = vrot.lane.b32.xlu0 %v663, 80
        %v1277 = vpop.permute.xlu0 %1276
        %1278 = vrot.lane.b32.xlu0 %v659, 16
        %v1279 = vpop.permute.xlu0 %1278
        %1280 = vrot.lane.b32.xlu0 %v663, 16
        %v1281 = vpop.permute.xlu0 %1280
        %v1282 = vsel %vm673, %v1275, 0
        %v1284 = vsel %vm673, %v1277, 0
        %v1286 = vsel %vm673, %v1279, 0
        %v1288 = vsel %vm673, %v1281, 0
        %1290 = vmatprep.subr.mxu0 0.0
        %1291 = vmatpush1.xpose.msra.mxu0 0.0
        %1292 = vmatprep.subr.mxu0 0.0
        %1293 = vmatpush1.xpose.msra.mxu0 0.0
        %1294 = vmatprep.subr.mxu0 0.0
        %1295 = vmatpush1.xpose.msra.mxu0 0.0
        %1296 = vmatprep.subr.mxu0 0.0
        %1297 = vmatpush1.xpose.msra.mxu0 0.0
        %1298 = vmatprep.subr.mxu0 0.0
        %1299 = vmatpush1.xpose.msra.mxu0 0.0
        %1300 = vmatprep.subr.mxu0 0.0
        %1301 = vmatpush1.xpose.msra.mxu0 0.0
        %1302 = vmatprep.subr.mxu0 0.0
        %1303 = vmatpush1.xpose.msra.mxu0 0.0
        %1304 = vmatprep.subr.mxu0 0.0
        %1305 = vmatpush1.xpose.msra.mxu0 0.0
        %1306 = vmatprep.subr.mxu0 0.0
        %1307 = vmatpush1.xpose.msra.mxu0 0.0
        %1308 = vmatprep.subr.mxu0 0.0
        %1309 = vmatpush1.xpose.msra.mxu0 0.0
        %1310 = vmatprep.subr.mxu0 0.0
        %1311 = vmatpush1.xpose.msra.mxu0 0.0
        %1312 = vmatprep.subr.mxu0 0.0
        %1313 = vmatpush1.xpose.msra.mxu0 0.0
        %1314 = vmatprep.subr.mxu0 0.0
        %1315 = vmatpush1.xpose.msra.mxu0 0.0
        %1316 = vmatprep.subr.mxu0 0.0
        %1317 = vmatpush1.xpose.msra.mxu0 0.0
        %1318 = vmatprep.subr.mxu0 0.0
        %1319 = vmatpush1.xpose.msra.mxu0 %v1288
        %1320 = vmatprep.subr.mxu0 0.0
        %1321 = vmatpush1.xpose.msra.mxu0 %v1286
        %1322 = vmatprep.subr.mxu0 0.0
        %1323 = vmatpush2.xpose.msra.mxu0 0.0
        %1324 = vmatprep.subr.mxu0 0.0
        %1325 = vmatpush2.xpose.msra.mxu0 0.0
        %1326 = vmatprep.subr.mxu0 0.0
        %1327 = vmatpush2.xpose.msra.mxu0 0.0
        %1328 = vmatprep.subr.mxu0 0.0
        %1329 = vmatpush2.xpose.msra.mxu0 0.0
        %1330 = vmatprep.subr.mxu0 0.0
        %1331 = vmatpush2.xpose.msra.mxu0 0.0
        %1332 = vmatprep.subr.mxu0 0.0
        %1333 = vmatpush2.xpose.msra.mxu0 0.0
        %1334 = vmatprep.subr.mxu0 0.0
        %1335 = vmatpush2.xpose.msra.mxu0 0.0
        %1336 = vmatprep.subr.mxu0 0.0
        %1337 = vmatpush2.xpose.msra.mxu0 0.0
        %1338 = vmatprep.subr.mxu0 0.0
        %1339 = vmatpush2.xpose.msra.mxu0 0.0
        %1340 = vmatprep.subr.mxu0 0.0
        %1341 = vmatpush2.xpose.msra.mxu0 0.0
        %1342 = vmatprep.subr.mxu0 0.0
        %1343 = vmatpush2.xpose.msra.mxu0 0.0
        %1344 = vmatprep.subr.mxu0 0.0
        %1345 = vmatpush2.xpose.msra.mxu0 0.0
        %1346 = vmatprep.subr.mxu0 0.0
        %1347 = vmatpush2.xpose.msra.mxu0 0.0
        %1348 = vmatprep.subr.mxu0 0.0
        %1349 = vmatpush2.xpose.msra.mxu0 0.0
        %1350 = vmatprep.subr.mxu0 0.0
        %1351 = vmatpush2.xpose.msra.mxu0 0.0
        %1352 = vmatprep.subr.mxu0 0.0
        %1353 = vmatpush2.xpose.msra.mxu0 0.0
        %1354 = vmatprep.mubr.f32.mxu0 0.0
        %1355 = vmatmul.mubr.f32.gmra.mxu0 %v1282
        %v1356 = vpop.f32.mrf.mxu0
        %v1357 = vadd.f32 0.0, %v1356
        %v1358 = vpop.f32.mrf.mxu0
        %1359 = vmatprep.mubr.f32.mxu0 0.0
        %1360 = vmatmul.mubr.f32.gmra.mxu0 %v1284
        %v1361 = vpop.f32.mrf.mxu0
        %v1362 = vadd.f32 0.0, %v1361
        %v1363 = vpop.f32.mrf.mxu0
        %1364 = vdwg.mxu0
        %v1365 = vmul.f32 %v1357, 0.25
        %v1366 = vmul.f32 %v1362, 0.25
        %v1367 = vadd.f32 %v1365, %v317
        %v1368 = vadd.f32 %v1366, %v317
        %v1369 = vsel %vm673, %v1367, -inf
        %1370 = vmax.xlane.f32.xlu0 %v1369
        %v1371 = vpop.xlane.xlu0 %1370
        %v1372 = vsel %vm673, %v1368, -inf
        %1373 = vmax.xlane.f32.xlu0 %v1372
        %v1374 = vpop.xlane.xlu0 %1373
        %v1375 = vsub.f32 %v1367, %v1371
        %v1376 = vsub.f32 %v1368, %v1374
        %v1377 = vmul.f32 %v1375, 1.442695
        %v1378 = vpow.pop %v1377
        %v1379 = vmul.f32 %v1376, 1.442695
        %v1380 = vpow.pop %v1379
        %v1381 = vsel %vm673, %v1378, 0.0
        %1382 = vadd.xlane.f32.xlu0 %v1381
        %v1383 = vpop.xlane.xlu0 %1382
        %v1384 = vsel %vm673, %v1380, 0.0
        %1385 = vadd.xlane.f32.xlu0 %v1384
        %v1386 = vpop.xlane.xlu0 %1385
        %v1387 = vrcp.pop %v1383
        %v1388 = vrcp.pop %v1386
        %v1389 = vmul.f32 %v1378, %v1387
        %v1390 = vmul.f32 %v1380, %v1388
        %1391 = vrot.lane.b32.xlu0 %v661, 80
        %v1392 = vpop.permute.xlu0 %1391
        %1393 = vrot.lane.b32.xlu0 %v665, 80
        %v1394 = vpop.permute.xlu0 %1393
        %v1398 = vsel %vm673, %v1389, 0
        %v1401 = vsel %vm673, %v1390, 0
        %1403 = vmatprep.subr.mxu0 0.0
        %1404 = vmatpush1.msra.mxu0 0.0
        %1405 = vmatprep.subr.mxu0 0.0
        %1406 = vmatpush1.msra.mxu0 0.0
        %1407 = vmatprep.subr.mxu0 0.0
        %1408 = vmatpush1.msra.mxu0 0.0
        %1409 = vmatprep.subr.mxu0 0.0
        %1410 = vmatpush1.msra.mxu0 0.0
        %1411 = vmatprep.subr.mxu0 0.0
        %1412 = vmatpush1.msra.mxu0 0.0
        %1413 = vmatprep.subr.mxu0 0.0
        %1414 = vmatpush1.msra.mxu0 0.0
        %1415 = vmatprep.subr.mxu0 0.0
        %1416 = vmatpush1.msra.mxu0 0.0
        %1417 = vmatprep.subr.mxu0 0.0
        %1418 = vmatpush1.msra.mxu0 0.0
        %1419 = vmatprep.subr.mxu0 0.0
        %1420 = vmatpush1.msra.mxu0 0.0
        %1421 = vmatprep.subr.mxu0 0.0
        %1422 = vmatpush1.msra.mxu0 0.0
        %1423 = vmatprep.subr.mxu0 0.0
        %1424 = vmatpush1.msra.mxu0 0.0
        %1425 = vmatprep.subr.mxu0 0.0
        %1426 = vmatpush1.msra.mxu0 0.0
        %1427 = vmatprep.subr.mxu0 0.0
        %1428 = vmatpush1.msra.mxu0 0.0
        %1429 = vmatprep.subr.mxu0 0.0
        %1430 = vmatpush1.msra.mxu0 0.0
        %1431 = vmatprep.subr.mxu0 0.0
        %1432 = vmatpush1.msra.mxu0 %v1394
        %1433 = vmatprep.subr.mxu0 0.0
        %1434 = vmatpush1.msra.mxu0 %v1392
        %1435 = vmatprep.subr.mxu0 0.0
        %1436 = vmatpush2.msra.mxu0 0.0
        %1437 = vmatprep.subr.mxu0 0.0
        %1438 = vmatpush2.msra.mxu0 0.0
        %1439 = vmatprep.subr.mxu0 0.0
        %1440 = vmatpush2.msra.mxu0 0.0
        %1441 = vmatprep.subr.mxu0 0.0
        %1442 = vmatpush2.msra.mxu0 0.0
        %1443 = vmatprep.subr.mxu0 0.0
        %1444 = vmatpush2.msra.mxu0 0.0
        %1445 = vmatprep.subr.mxu0 0.0
        %1446 = vmatpush2.msra.mxu0 0.0
        %1447 = vmatprep.subr.mxu0 0.0
        %1448 = vmatpush2.msra.mxu0 0.0
        %1449 = vmatprep.subr.mxu0 0.0
        %1450 = vmatpush2.msra.mxu0 0.0
        %1451 = vmatprep.subr.mxu0 0.0
        %1452 = vmatpush2.msra.mxu0 0.0
        %1453 = vmatprep.subr.mxu0 0.0
        %1454 = vmatpush2.msra.mxu0 0.0
        %1455 = vmatprep.subr.mxu0 0.0
        %1456 = vmatpush2.msra.mxu0 0.0
        %1457 = vmatprep.subr.mxu0 0.0
        %1458 = vmatpush2.msra.mxu0 0.0
        %1459 = vmatprep.subr.mxu0 0.0
        %1460 = vmatpush2.msra.mxu0 0.0
        %1461 = vmatprep.subr.mxu0 0.0
        %1462 = vmatpush2.msra.mxu0 0.0
        %1463 = vmatprep.subr.mxu0 0.0
        %1464 = vmatpush2.msra.mxu0 0.0
        %1465 = vmatprep.subr.mxu0 0.0
        %1466 = vmatpush2.msra.mxu0 0.0
        %1467 = vmatprep.mubr.f32.mxu0 0.0
        %1468 = vmatmul.mubr.f32.gmra.mxu0 %v1398
        %v1469 = vpop.f32.mrf.mxu0
        %v1470 = vadd.f32 0.0, %v1469
        %v1471 = vpop.f32.mrf.mxu0
        %1472 = vmatprep.mubr.f32.mxu0 0.0
        %1473 = vmatmul.mubr.f32.gmra.mxu0 %v1401
        %v1474 = vpop.f32.mrf.mxu0
        %v1475 = vadd.f32 0.0, %v1474
        %v1476 = vpop.f32.mrf.mxu0
        %1477 = vdwg.mxu0
        %1480 = vrot.lane.b32.xlu0 %v1062, 16
        %v1481 = vpop.permute.xlu0 %1480
        %1482 = vrot.lane.b32.xlu0 %v1067, 16
        %v1483 = vpop.permute.xlu0 %1482
        %1488 = vrot.lane.b32.xlu0 %v1266, 32
        %v1489 = vpop.permute.xlu0 %1488
        %1490 = vrot.lane.b32.xlu0 %v1271, 32
        %v1491 = vpop.permute.xlu0 %1490
        %1496 = vrot.lane.b32.xlu0 %v1470, 48
        %v1497 = vpop.permute.xlu0 %1496
        %1498 = vrot.lane.b32.xlu0 %v1475, 48
        %v1499 = vpop.permute.xlu0 %1498
        %v1502 = vsel %vm673, %v856, %v1481
        %v1503 = vsel %vm673, %v861, %v1483
        %vm1504 = vcmask 261120
        %v1505 = vsel %vm1504, %v1502, %v1489
        %v1506 = vsel %vm1504, %v1503, %v1491
        %vm1507 = vcmask 392192
        %v1508 = vsel %vm1507, %v1505, %v1497
        %v1509 = vsel %vm1507, %v1506, %v1499
        %v1510 = vpack.c.bf16 %v1509, %v1508
        %v1511 = vld [vmem:[%s5] sm:$0xf]
        %v1512 = vld [vmem:[%s5 + $0x4] sm:$0xf]
        %v1513 = vld [vmem:[%s5 + $0x8] sm:$0xf]
        %v1514 = vld [vmem:[%s5 + $0xc] sm:$0xf]
        %v1515 = vld [vmem:[%s5 + $0x10] sm:$0xf]
        %v1516 = vld [vmem:[%s5 + $0x14] sm:$0xf]
        %v1517 = vld [vmem:[%s5 + $0x18] sm:$0xf]
        %v1518 = vld [vmem:[%s5 + $0x1c] sm:$0xf]
        %v1519 = vlaneseq
        %v1520 = vshrl.u32 %v1519, 7
        %v1521 = vsub.s32 1, %v1520
        %v1522 = vrot.slane %v561, %v1521
        %v1531 = vunpack.c.l.b16 %v1511
        %v1532 = vunpack.c.l.b16 %v1512
        %v1533 = vunpack.c.l.b16 %v1513
        %v1534 = vunpack.c.l.b16 %v1514
        %v1535 = vunpack.c.l.b16 %v1515
        %v1536 = vunpack.c.l.b16 %v1516
        %v1537 = vunpack.c.l.b16 %v1517
        %v1538 = vunpack.c.l.b16 %v1518
        %v1539 = vpack.c.b16 %v1532, %v1531
        %v1540 = vpack.c.b16 %v1534, %v1533
        %v1541 = vpack.c.b16 %v1536, %v1535
        %v1542 = vpack.c.b16 %v1538, %v1537
        %v1548 = vsel %vm620, %v1510, 0
        %1550 = vmatprep.subr.bf16.mxu0 0
        %1551 = vmatpush1.bf16.msra.mxu0 0
        %1552 = vmatprep.subr.bf16.mxu0 0
        %1553 = vmatpush1.bf16.msra.mxu0 0
        %1554 = vmatprep.subr.bf16.mxu0 0
        %1555 = vmatpush1.bf16.msra.mxu0 0
        %1556 = vmatprep.subr.bf16.mxu0 0
        %1557 = vmatpush1.bf16.msra.mxu0 0
        %1558 = vmatprep.subr.bf16.mxu0 0
        %1559 = vmatpush1.bf16.msra.mxu0 %v1542
        %1560 = vmatprep.subr.bf16.mxu0 0
        %1561 = vmatpush1.bf16.msra.mxu0 %v1541
        %1562 = vmatprep.subr.bf16.mxu0 0
        %1563 = vmatpush1.bf16.msra.mxu0 %v1540
        %1564 = vmatprep.subr.bf16.mxu0 0
        %1565 = vmatpush1.bf16.msra.mxu0 %v1539
        %1566 = vmatprep.subr.bf16.mxu0 0
        %1567 = vmatpush2.bf16.msra.mxu0 0
        %1568 = vmatprep.subr.bf16.mxu0 0
        %1569 = vmatpush2.bf16.msra.mxu0 0
        %1570 = vmatprep.subr.bf16.mxu0 0
        %1571 = vmatpush2.bf16.msra.mxu0 0
        %1572 = vmatprep.subr.bf16.mxu0 0
        %1573 = vmatpush2.bf16.msra.mxu0 0
        %1574 = vmatprep.subr.bf16.mxu0 0
        %1575 = vmatpush2.bf16.msra.mxu0 0
        %1576 = vmatprep.subr.bf16.mxu0 0
        %1577 = vmatpush2.bf16.msra.mxu0 0
        %1578 = vmatprep.subr.bf16.mxu0 0
        %1579 = vmatpush2.bf16.msra.mxu0 0
        %1580 = vmatprep.subr.bf16.mxu0 0
        %1581 = vmatpush2.bf16.msra.mxu0 0
        %1582 = vmatprep.mubr.bf16.mxu0 0
        %1583 = vmatmul.mubr.bf16.gmra.mxu0 %v1548
        %v1584 = vpop.f32.mrf.mxu0
        %v1585 = vadd.f32 %v1522, %v1584
        %v1586 = vpop.f32.mrf.mxu0
        %v1587 = vpop.f32.mrf.mxu0
        %v1588 = vadd.f32 %v1522, %v1587
        %v1589 = vpop.f32.mrf.mxu0
        %1590 = vdwg.mxu0
        %v1591 = vadd.f32 %v555, %v1585
        %v1592 = vadd.f32 %v558, %v1588
        %v1593 = vsel %vm620, %v1591, 0.0
        %1594 = vadd.xlane.f32.xlu0 %v1593
        %v1595 = vpop.xlane.xlu0 %1594
        %v1596 = vsel %vm620, %v1592, 0.0
        %1597 = vadd.xlane.f32.xlu0 %v1596
        %v1598 = vpop.xlane.xlu0 %1597
        %v1599 = vrcp.pop 64.0
        %v1600 = vmul.f32 %v1595, %v1599
        %v1601 = vmul.f32 %v1598, %v1599
        %v1602 = vsub.f32 %v1591, %v1600
        %v1603 = vsub.f32 %v1592, %v1601
        %v1604 = vmul.f32 %v1602, %v1602
        %v1605 = vmul.f32 %v1603, %v1603
        %v1606 = vsel %vm620, %v1604, 0.0
        %1607 = vadd.xlane.f32.xlu0 %v1606
        %v1608 = vpop.xlane.xlu0 %1607
        %v1609 = vsel %vm620, %v1605, 0.0
        %1610 = vadd.xlane.f32.xlu0 %v1609
        %v1611 = vpop.xlane.xlu0 %1610
        %v1612 = vmul.f32 %v1608, %v1599
        %v1613 = vmul.f32 %v1611, %v1599
        %v1614 = vadd.f32 %v1612, 1e-05
        %v1615 = vadd.f32 %v1613, 1e-05
        %v1616 = vrsqrt.pop %v1614
        %v1617 = vrsqrt.pop %v1615
        %v1618 = vmul.f32 %v1602, %v1616
        %v1619 = vmul.f32 %v1603, %v1617
        %v1620 = vlaneseq
        %v1621 = vshrl.u32 %v1620, 7
        %v1622 = vsub.s32 2, %v1621
        %v1623 = vrot.slane %v561, %v1622
        %v1624 = vmul.f32 %v1618, %v1623
        %v1625 = vmul.f32 %v1619, %v1623
        %v1626 = vlaneseq
        %v1627 = vshrl.u32 %v1626, 7
        %v1628 = vsub.s32 3, %v1627
        %v1629 = vrot.slane %v561, %v1628
        %v1630 = vadd.f32 %v1624, %v1629
        %v1631 = vadd.f32 %v1625, %v1629
        %v1632 = vpack.c.bf16 %v1631, %v1630
        %v1633 = vld [vmem:[%s6] sm:$0xf]
        %v1634 = vld [vmem:[%s6 + $0x4] sm:$0xf]
        %v1635 = vld [vmem:[%s6 + $0x8] sm:$0xf]
        %v1636 = vld [vmem:[%s6 + $0xc] sm:$0xf]
        %v1637 = vld [vmem:[%s6 + $0x10] sm:$0xf]
        %v1638 = vld [vmem:[%s6 + $0x14] sm:$0xf]
        %v1639 = vld [vmem:[%s6 + $0x18] sm:$0xf]
        %v1640 = vld [vmem:[%s6 + $0x1c] sm:$0xf]
        %v1641 = vlaneseq
        %v1642 = vshrl.u32 %v1641, 7
        %v1643 = vsub.s32 4, %v1642
        %v1644 = vrot.slane %v561, %v1643
        %v1653 = vunpack.c.l.b16 %v1633
        %v1654 = vunpack.c.l.b16 %v1634
        %v1655 = vunpack.c.l.b16 %v1635
        %v1656 = vunpack.c.l.b16 %v1636
        %v1657 = vunpack.c.l.b16 %v1637
        %v1658 = vunpack.c.l.b16 %v1638
        %v1659 = vunpack.c.l.b16 %v1639
        %v1660 = vunpack.c.l.b16 %v1640
        %v1661 = vpack.c.b16 %v1654, %v1653
        %v1662 = vpack.c.b16 %v1656, %v1655
        %v1663 = vpack.c.b16 %v1658, %v1657
        %v1664 = vpack.c.b16 %v1660, %v1659
        %v1670 = vsel %vm620, %v1632, 0
        %1672 = vmatprep.subr.bf16.mxu0 0
        %1673 = vmatpush1.bf16.msra.mxu0 0
        %1674 = vmatprep.subr.bf16.mxu0 0
        %1675 = vmatpush1.bf16.msra.mxu0 0
        %1676 = vmatprep.subr.bf16.mxu0 0
        %1677 = vmatpush1.bf16.msra.mxu0 0
        %1678 = vmatprep.subr.bf16.mxu0 0
        %1679 = vmatpush1.bf16.msra.mxu0 0
        %1680 = vmatprep.subr.bf16.mxu0 0
        %1681 = vmatpush1.bf16.msra.mxu0 %v1664
        %1682 = vmatprep.subr.bf16.mxu0 0
        %1683 = vmatpush1.bf16.msra.mxu0 %v1663
        %1684 = vmatprep.subr.bf16.mxu0 0
        %1685 = vmatpush1.bf16.msra.mxu0 %v1662
        %1686 = vmatprep.subr.bf16.mxu0 0
        %1687 = vmatpush1.bf16.msra.mxu0 %v1661
        %1688 = vmatprep.subr.bf16.mxu0 0
        %1689 = vmatpush2.bf16.msra.mxu0 0
        %1690 = vmatprep.subr.bf16.mxu0 0
        %1691 = vmatpush2.bf16.msra.mxu0 0
        %1692 = vmatprep.subr.bf16.mxu0 0
        %1693 = vmatpush2.bf16.msra.mxu0 0
        %1694 = vmatprep.subr.bf16.mxu0 0
        %1695 = vmatpush2.bf16.msra.mxu0 0
        %1696 = vmatprep.subr.bf16.mxu0 0
        %1697 = vmatpush2.bf16.msra.mxu0 0
        %1698 = vmatprep.subr.bf16.mxu0 0
        %1699 = vmatpush2.bf16.msra.mxu0 0
        %1700 = vmatprep.subr.bf16.mxu0 0
        %1701 = vmatpush2.bf16.msra.mxu0 0
        %1702 = vmatprep.subr.bf16.mxu0 0
        %1703 = vmatpush2.bf16.msra.mxu0 0
        %1704 = vmatprep.mubr.bf16.mxu0 0
        %1705 = vmatmul.mubr.bf16.gmra.mxu0 %v1670
        %v1706 = vpop.f32.mrf.mxu0
        %v1707 = vadd.f32 %v1644, %v1706
        %v1708 = vpop.f32.mrf.mxu0
        %v1709 = vpop.f32.mrf.mxu0
        %v1710 = vadd.f32 %v1644, %v1709
        %v1711 = vpop.f32.mrf.mxu0
        %1712 = vdwg.mxu0
        %v1713 = vmul.f32 %v1707, 0.5
        %v1714 = vmul.f32 %v1710, 0.5
        %v1715 = vmul.f32 %v1707, 0.70710677
        %v1716 = vmul.f32 %v1710, 0.70710677
        %v1717 = vand.u32 2147483647, %v1715
        %v1718 = vand.u32 2147483647, %v1716
        %v1719 = vmul.f32 %v1717, 0.3275911
        %v1720 = vmul.f32 %v1718, 0.3275911
        %v1721 = vadd.f32 %v1719, 1.0
        %v1722 = vadd.f32 %v1720, 1.0
        %v1723 = vrcp.pop %v1721
        %v1724 = vmul.f32 1.0, %v1723
        %v1725 = vrcp.pop %v1722
        %v1726 = vmul.f32 1.0, %v1725
        %v1727 = vmul.f32 %v1724, 1.0614054
        %v1728 = vmul.f32 %v1726, 1.0614054
        %v1729 = vadd.f32 %v1727, -1.4531521
        %v1730 = vadd.f32 %v1728, -1.4531521
        %v1731 = vmul.f32 %v1729, %v1724
        %v1732 = vmul.f32 %v1730, %v1726
        %v1733 = vadd.f32 %v1731, 1.4214138
        %v1734 = vadd.f32 %v1732, 1.4214138
        %v1735 = vmul.f32 %v1733, %v1724
        %v1736 = vmul.f32 %v1734, %v1726
        %v1737 = vadd.f32 %v1735, -0.28449672
        %v1738 = vadd.f32 %v1736, -0.28449672
        %v1739 = vmul.f32 %v1737, %v1724
        %v1740 = vmul.f32 %v1738, %v1726
        %v1741 = vadd.f32 %v1739, 0.2548296
        %v1742 = vadd.f32 %v1740, 0.2548296
        %v1743 = vmul.f32 %v1741, %v1724
        %v1744 = vmul.f32 %v1742, %v1726
        %v1745 = vsub.f32 0.0, %v1717
        %v1746 = vsub.f32 0.0, %v1718
        %v1747 = vmul.f32 %v1745, %v1717
        %v1748 = vmul.f32 %v1746, %v1718
        %v1749 = vmul.f32 %v1747, 1.442695
        %v1750 = vpow.pop %v1749
        %v1751 = vmul.f32 %v1748, 1.442695
        %v1752 = vpow.pop %v1751
        %v1753 = vmul.f32 %v1743, %v1750
        %v1754 = vmul.f32 %v1744, %v1752
        %v1755 = vsub.f32 1.0, %v1753
        %v1756 = vsub.f32 1.0, %v1754
        %vm1757 = vcmp.ge.f32.partialorder %v1715, 0.0
        %vm1758 = vcmp.ge.f32.partialorder %v1716, 0.0
        %v1759 = vsub.f32 0.0, %v1755
        %v1760 = vsub.f32 0.0, %v1756
        %v1761 = vsel %vm1757, %v1755, %v1759
        %v1762 = vsel %vm1758, %v1756, %v1760
        %v1763 = vadd.f32 %v1761, 1.0
        %v1764 = vadd.f32 %v1762, 1.0
        %v1765 = vmul.f32 %v1713, %v1763
        %v1766 = vmul.f32 %v1714, %v1764
        %v1767 = vpack.c.bf16 %v1766, %v1765
        %v1768 = vld [vmem:[%s7] sm:$0xf]
        %v1769 = vld [vmem:[%s7 + $0x4] sm:$0xf]
        %v1770 = vld [vmem:[%s7 + $0x8] sm:$0xf]
        %v1771 = vld [vmem:[%s7 + $0xc] sm:$0xf]
        %v1772 = vld [vmem:[%s7 + $0x10] sm:$0xf]
        %v1773 = vld [vmem:[%s7 + $0x14] sm:$0xf]
        %v1774 = vld [vmem:[%s7 + $0x18] sm:$0xf]
        %v1775 = vld [vmem:[%s7 + $0x1c] sm:$0xf]
        %v1776 = vld [vmem:[%s7 + $0x20] sm:$0xf]
        %v1777 = vld [vmem:[%s7 + $0x24] sm:$0xf]
        %v1778 = vld [vmem:[%s7 + $0x28] sm:$0xf]
        %v1779 = vld [vmem:[%s7 + $0x2c] sm:$0xf]
        %v1780 = vld [vmem:[%s7 + $0x30] sm:$0xf]
        %v1781 = vld [vmem:[%s7 + $0x34] sm:$0xf]
        %v1782 = vld [vmem:[%s7 + $0x38] sm:$0xf]
        %v1783 = vld [vmem:[%s7 + $0x3c] sm:$0xf]
        %v1784 = vlaneseq
        %v1785 = vshrl.u32 %v1784, 7
        %v1786 = vsub.s32 5, %v1785
        %v1787 = vrot.slane %v561, %v1786
        %v1804 = vunpack.c.l.b16 %v1768
        %v1805 = vunpack.c.l.b16 %v1769
        %v1806 = vunpack.c.l.b16 %v1770
        %v1807 = vunpack.c.l.b16 %v1771
        %v1808 = vunpack.c.l.b16 %v1772
        %v1809 = vunpack.c.l.b16 %v1773
        %v1810 = vunpack.c.l.b16 %v1774
        %v1811 = vunpack.c.l.b16 %v1775
        %v1812 = vunpack.c.l.b16 %v1776
        %v1813 = vunpack.c.l.b16 %v1777
        %v1814 = vunpack.c.l.b16 %v1778
        %v1815 = vunpack.c.l.b16 %v1779
        %v1816 = vunpack.c.l.b16 %v1780
        %v1817 = vunpack.c.l.b16 %v1781
        %v1818 = vunpack.c.l.b16 %v1782
        %v1819 = vunpack.c.l.b16 %v1783
        %v1820 = vpack.c.b16 %v1805, %v1804
        %v1821 = vpack.c.b16 %v1807, %v1806
        %v1822 = vpack.c.b16 %v1809, %v1808
        %v1823 = vpack.c.b16 %v1811, %v1810
        %v1824 = vpack.c.b16 %v1813, %v1812
        %v1825 = vpack.c.b16 %v1815, %v1814
        %v1826 = vpack.c.b16 %v1817, %v1816
        %v1827 = vpack.c.b16 %v1819, %v1818
        %1836 = vmatprep.subr.bf16.mxu0 0
        %1837 = vmatpush1.bf16.msra.mxu0 %v1827
        %1838 = vmatprep.subr.bf16.mxu0 0
        %1839 = vmatpush1.bf16.msra.mxu0 %v1826
        %1840 = vmatprep.subr.bf16.mxu0 0
        %1841 = vmatpush1.bf16.msra.mxu0 %v1825
        %1842 = vmatprep.subr.bf16.mxu0 0
        %1843 = vmatpush1.bf16.msra.mxu0 %v1824
        %1844 = vmatprep.subr.bf16.mxu0 0
        %1845 = vmatpush1.bf16.msra.mxu0 %v1823
        %1846 = vmatprep.subr.bf16.mxu0 0
        %1847 = vmatpush1.bf16.msra.mxu0 %v1822
        %1848 = vmatprep.subr.bf16.mxu0 0
        %1849 = vmatpush1.bf16.msra.mxu0 %v1821
        %1850 = vmatprep.subr.bf16.mxu0 0
        %1851 = vmatpush1.bf16.msra.mxu0 %v1820
        %1852 = vmatprep.subr.bf16.mxu0 0
        %1853 = vmatpush2.bf16.msra.mxu0 0
        %1854 = vmatprep.subr.bf16.mxu0 0
        %1855 = vmatpush2.bf16.msra.mxu0 0
        %1856 = vmatprep.subr.bf16.mxu0 0
        %1857 = vmatpush2.bf16.msra.mxu0 0
        %1858 = vmatprep.subr.bf16.mxu0 0
        %1859 = vmatpush2.bf16.msra.mxu0 0
        %1860 = vmatprep.subr.bf16.mxu0 0
        %1861 = vmatpush2.bf16.msra.mxu0 0
        %1862 = vmatprep.subr.bf16.mxu0 0
        %1863 = vmatpush2.bf16.msra.mxu0 0
        %1864 = vmatprep.subr.bf16.mxu0 0
        %1865 = vmatpush2.bf16.msra.mxu0 0
        %1866 = vmatprep.subr.bf16.mxu0 0
        %1867 = vmatpush2.bf16.msra.mxu0 0
        %1868 = vmatprep.mubr.bf16.mxu0 0
        %1869 = vmatmul.mubr.bf16.gmra.mxu0 %v1767
        %v1870 = vpop.f32.mrf.mxu0
        %v1871 = vadd.f32 %v1787, %v1870
        %v1872 = vpop.f32.mrf.mxu0
        %v1873 = vpop.f32.mrf.mxu0
        %v1874 = vadd.f32 %v1787, %v1873
        %v1875 = vpop.f32.mrf.mxu0
        %1876 = vdwg.mxu0
        %v1877 = vadd.f32 %v1630, %v1871
        %v1878 = vadd.f32 %v1631, %v1874
        %v1879 = vsel %vm620, %v1877, 0.0
        %1880 = vadd.xlane.f32.xlu0 %v1879
        %v1881 = vpop.xlane.xlu0 %1880
        %v1882 = vsel %vm620, %v1878, 0.0
        %1883 = vadd.xlane.f32.xlu0 %v1882
        %v1884 = vpop.xlane.xlu0 %1883
        %v1885 = vmul.f32 %v1881, %v1599
        %v1886 = vmul.f32 %v1884, %v1599
        %v1887 = vsub.f32 %v1877, %v1885
        %v1888 = vsub.f32 %v1878, %v1886
        %v1889 = vmul.f32 %v1887, %v1887
        %v1890 = vmul.f32 %v1888, %v1888
        %v1891 = vsel %vm620, %v1889, 0.0
        %1892 = vadd.xlane.f32.xlu0 %v1891
        %v1893 = vpop.xlane.xlu0 %1892
        %v1894 = vsel %vm620, %v1890, 0.0
        %1895 = vadd.xlane.f32.xlu0 %v1894
        %v1896 = vpop.xlane.xlu0 %1895
        %v1897 = vmul.f32 %v1893, %v1599
        %v1898 = vmul.f32 %v1896, %v1599
        %v1899 = vadd.f32 %v1897, 1e-05
        %v1900 = vadd.f32 %v1898, 1e-05
        %v1901 = vrsqrt.pop %v1899
        %v1902 = vrsqrt.pop %v1900
        %v1903 = vmul.f32 %v1887, %v1901
        %v1904 = vmul.f32 %v1888, %v1902
        %v1905 = vlaneseq
        %v1906 = vshrl.u32 %v1905, 7
        %v1907 = vsub.s32 6, %v1906
        %v1908 = vrot.slane %v561, %v1907
        %v1909 = vmul.f32 %v1903, %v1908
        %v1910 = vmul.f32 %v1904, %v1908
        %v1911 = vlaneseq
        %v1912 = vshrl.u32 %v1911, 7
        %v1913 = vsub.s32 7, %v1912
        %v1914 = vrot.slane %v561, %v1913
        %v1915 = vadd.f32 %v1909, %v1914
        %v1916 = vadd.f32 %v1910, %v1914
        %s1917 = scalar_lea.vmem %s8, 16
        %v1918 = vld [vmem:[%s1917] sm:$0xff]
        %v1919 = vld [vmem:[%s1917 + $0x8] sm:$0xff]
        %v1920 = vpack.c.bf16 %v1916, %v1915
        %s1921 = scalar_lea.vmem %s4, 64
        %v1922 = vld [vmem:[%s1921] sm:$0xff]
        %v1923 = vld [vmem:[%s1921 + $0x8] sm:$0xff]
        %v1924 = vld [vmem:[%s1921 + $0x10] sm:$0xff]
        %v1925 = vld [vmem:[%s1921 + $0x18] sm:$0xff]
        %v1926 = vld [vmem:[%s1921 + $0x20] sm:$0xff]
        %v1927 = vld [vmem:[%s1921 + $0x28] sm:$0xff]
        %v1928 = vld [vmem:[%s1921 + $0x30] sm:$0xff]
        %v1929 = vld [vmem:[%s1921 + $0x38] sm:$0xff]
        %v1930 = vlaneseq
        %v1931 = vshrl.u32 %v1930, 7
        %v1932 = vsub.s32 0, %v1931
        %v1933 = vrot.slane %v1918, %v1932
        %v1934 = vlaneseq
        %v1935 = vshrl.u32 %v1934, 7
        %v1936 = vsub.s32 0, %v1935
        %v1937 = vrot.slane %v1919, %v1936
        %v1946 = vunpack.c.l.b16 %v1922
        %v1947 = vunpack.c.h.b16 %v1922
        %v1948 = vunpack.c.l.b16 %v1923
        %v1949 = vunpack.c.h.b16 %v1923
        %v1950 = vunpack.c.l.b16 %v1924
        %v1951 = vunpack.c.h.b16 %v1924
        %v1952 = vunpack.c.l.b16 %v1925
        %v1953 = vunpack.c.h.b16 %v1925
        %v1954 = vunpack.c.l.b16 %v1926
        %v1955 = vunpack.c.h.b16 %v1926
        %v1956 = vunpack.c.l.b16 %v1927
        %v1957 = vunpack.c.h.b16 %v1927
        %v1958 = vunpack.c.l.b16 %v1928
        %v1959 = vunpack.c.h.b16 %v1928
        %v1960 = vunpack.c.l.b16 %v1929
        %v1961 = vunpack.c.h.b16 %v1929
        %v1962 = vpack.c.b16 %v1948, %v1946
        %v1963 = vpack.c.b16 %v1949, %v1947
        %v1964 = vpack.c.b16 %v1952, %v1950
        %v1965 = vpack.c.b16 %v1953, %v1951
        %v1966 = vpack.c.b16 %v1956, %v1954
        %v1967 = vpack.c.b16 %v1957, %v1955
        %v1968 = vpack.c.b16 %v1960, %v1958
        %v1969 = vpack.c.b16 %v1961, %v1959
        %v1979 = vsel %vm620, %v1920, 0
        %1981 = vmatprep.subr.bf16.mxu0 0
        %1982 = vmatpush1.bf16.msra.mxu0 0
        %1983 = vmatprep.subr.bf16.mxu0 0
        %1984 = vmatpush1.bf16.msra.mxu0 0
        %1985 = vmatprep.subr.bf16.mxu0 0
        %1986 = vmatpush1.bf16.msra.mxu0 0
        %1987 = vmatprep.subr.bf16.mxu0 0
        %1988 = vmatpush1.bf16.msra.mxu0 0
        %1989 = vmatprep.subr.bf16.mxu0 %v1969
        %1990 = vmatpush1.bf16.msra.mxu0 %v1968
        %1991 = vmatprep.subr.bf16.mxu0 %v1967
        %1992 = vmatpush1.bf16.msra.mxu0 %v1966
        %1993 = vmatprep.subr.bf16.mxu0 %v1965
        %1994 = vmatpush1.bf16.msra.mxu0 %v1964
        %1995 = vmatprep.subr.bf16.mxu0 %v1963
        %1996 = vmatpush1.bf16.msra.mxu0 %v1962
        %1997 = vmatprep.subr.bf16.mxu0 0
        %1998 = vmatpush2.bf16.msra.mxu0 0
        %1999 = vmatprep.subr.bf16.mxu0 0
        %2000 = vmatpush2.bf16.msra.mxu0 0
        %2001 = vmatprep.subr.bf16.mxu0 0
        %2002 = vmatpush2.bf16.msra.mxu0 0
        %2003 = vmatprep.subr.bf16.mxu0 0
        %2004 = vmatpush2.bf16.msra.mxu0 0
        %2005 = vmatprep.subr.bf16.mxu0 0
        %2006 = vmatpush2.bf16.msra.mxu0 0
        %2007 = vmatprep.subr.bf16.mxu0 0
        %2008 = vmatpush2.bf16.msra.mxu0 0
        %2009 = vmatprep.subr.bf16.mxu0 0
        %2010 = vmatpush2.bf16.msra.mxu0 0
        %2011 = vmatprep.subr.bf16.mxu0 0
        %2012 = vmatpush2.bf16.msra.mxu0 0
        %2013 = vmatprep.mubr.bf16.mxu0 0
        %2014 = vmatmul.mubr.bf16.gmra.mxu0 %v1979
        %v2015 = vpop.f32.mrf.mxu0
        %v2016 = vadd.f32 %v1933, %v2015
        %v2017 = vpop.f32.mrf.mxu0
        %v2018 = vadd.f32 %v1937, %v2017
        %v2019 = vpop.f32.mrf.mxu0
        %v2020 = vadd.f32 %v1933, %v2019
        %v2021 = vpop.f32.mrf.mxu0
        %v2022 = vadd.f32 %v1937, %v2021
        %2023 = vdwg.mxu0
        %2026 = vrot.lane.b32.xlu0 %v2016, 64
        %v2027 = vpop.permute.xlu0 %2026
        %2028 = vrot.lane.b32.xlu0 %v2020, 64
        %v2029 = vpop.permute.xlu0 %2028
        %v2030 = vsel %vm673, %v2016, 0
        %v2032 = vsel %vm673, %v2020, 0
        %v2034 = vsel %vm673, %v2027, 0
        %v2036 = vsel %vm673, %v2029, 0
        %2038 = vmatprep.subr.mxu0 0.0
        %2039 = vmatpush1.xpose.msra.mxu0 0.0
        %2040 = vmatprep.subr.mxu0 0.0
        %2041 = vmatpush1.xpose.msra.mxu0 0.0
        %2042 = vmatprep.subr.mxu0 0.0
        %2043 = vmatpush1.xpose.msra.mxu0 0.0
        %2044 = vmatprep.subr.mxu0 0.0
        %2045 = vmatpush1.xpose.msra.mxu0 0.0
        %2046 = vmatprep.subr.mxu0 0.0
        %2047 = vmatpush1.xpose.msra.mxu0 0.0
        %2048 = vmatprep.subr.mxu0 0.0
        %2049 = vmatpush1.xpose.msra.mxu0 0.0
        %2050 = vmatprep.subr.mxu0 0.0
        %2051 = vmatpush1.xpose.msra.mxu0 0.0
        %2052 = vmatprep.subr.mxu0 0.0
        %2053 = vmatpush1.xpose.msra.mxu0 0.0
        %2054 = vmatprep.subr.mxu0 0.0
        %2055 = vmatpush1.xpose.msra.mxu0 0.0
        %2056 = vmatprep.subr.mxu0 0.0
        %2057 = vmatpush1.xpose.msra.mxu0 0.0
        %2058 = vmatprep.subr.mxu0 0.0
        %2059 = vmatpush1.xpose.msra.mxu0 0.0
        %2060 = vmatprep.subr.mxu0 0.0
        %2061 = vmatpush1.xpose.msra.mxu0 0.0
        %2062 = vmatprep.subr.mxu0 0.0
        %2063 = vmatpush1.xpose.msra.mxu0 0.0
        %2064 = vmatprep.subr.mxu0 0.0
        %2065 = vmatpush1.xpose.msra.mxu0 0.0
        %2066 = vmatprep.subr.mxu0 0.0
        %2067 = vmatpush1.xpose.msra.mxu0 %v2036
        %2068 = vmatprep.subr.mxu0 0.0
        %2069 = vmatpush1.xpose.msra.mxu0 %v2034
        %2070 = vmatprep.subr.mxu0 0.0
        %2071 = vmatpush2.xpose.msra.mxu0 0.0
        %2072 = vmatprep.subr.mxu0 0.0
        %2073 = vmatpush2.xpose.msra.mxu0 0.0
        %2074 = vmatprep.subr.mxu0 0.0
        %2075 = vmatpush2.xpose.msra.mxu0 0.0
        %2076 = vmatprep.subr.mxu0 0.0
        %2077 = vmatpush2.xpose.msra.mxu0 0.0
        %2078 = vmatprep.subr.mxu0 0.0
        %2079 = vmatpush2.xpose.msra.mxu0 0.0
        %2080 = vmatprep.subr.mxu0 0.0
        %2081 = vmatpush2.xpose.msra.mxu0 0.0
        %2082 = vmatprep.subr.mxu0 0.0
        %2083 = vmatpush2.xpose.msra.mxu0 0.0
        %2084 = vmatprep.subr.mxu0 0.0
        %2085 = vmatpush2.xpose.msra.mxu0 0.0
        %2086 = vmatprep.subr.mxu0 0.0
        %2087 = vmatpush2.xpose.msra.mxu0 0.0
        %2088 = vmatprep.subr.mxu0 0.0
        %2089 = vmatpush2.xpose.msra.mxu0 0.0
        %2090 = vmatprep.subr.mxu0 0.0
        %2091 = vmatpush2.xpose.msra.mxu0 0.0
        %2092 = vmatprep.subr.mxu0 0.0
        %2093 = vmatpush2.xpose.msra.mxu0 0.0
        %2094 = vmatprep.subr.mxu0 0.0
        %2095 = vmatpush2.xpose.msra.mxu0 0.0
        %2096 = vmatprep.subr.mxu0 0.0
        %2097 = vmatpush2.xpose.msra.mxu0 0.0
        %2098 = vmatprep.subr.mxu0 0.0
        %2099 = vmatpush2.xpose.msra.mxu0 0.0
        %2100 = vmatprep.subr.mxu0 0.0
        %2101 = vmatpush2.xpose.msra.mxu0 0.0
        %2102 = vmatprep.mubr.f32.mxu0 0.0
        %2103 = vmatmul.mubr.f32.gmra.mxu0 %v2030
        %v2104 = vpop.f32.mrf.mxu0
        %v2105 = vadd.f32 0.0, %v2104
        %v2106 = vpop.f32.mrf.mxu0
        %2107 = vmatprep.mubr.f32.mxu0 0.0
        %2108 = vmatmul.mubr.f32.gmra.mxu0 %v2032
        %v2109 = vpop.f32.mrf.mxu0
        %v2110 = vadd.f32 0.0, %v2109
        %v2111 = vpop.f32.mrf.mxu0
        %2112 = vdwg.mxu0
        %v2113 = vmul.f32 %v2105, 0.25
        %v2114 = vmul.f32 %v2110, 0.25
        %v2115 = vadd.f32 %v2113, %v317
        %v2116 = vadd.f32 %v2114, %v317
        %v2117 = vsel %vm673, %v2115, -inf
        %2118 = vmax.xlane.f32.xlu0 %v2117
        %v2119 = vpop.xlane.xlu0 %2118
        %v2120 = vsel %vm673, %v2116, -inf
        %2121 = vmax.xlane.f32.xlu0 %v2120
        %v2122 = vpop.xlane.xlu0 %2121
        %v2123 = vsub.f32 %v2115, %v2119
        %v2124 = vsub.f32 %v2116, %v2122
        %v2125 = vmul.f32 %v2123, 1.442695
        %v2126 = vpow.pop %v2125
        %v2127 = vmul.f32 %v2124, 1.442695
        %v2128 = vpow.pop %v2127
        %v2129 = vsel %vm673, %v2126, 0.0
        %2130 = vadd.xlane.f32.xlu0 %v2129
        %v2131 = vpop.xlane.xlu0 %2130
        %v2132 = vsel %vm673, %v2128, 0.0
        %2133 = vadd.xlane.f32.xlu0 %v2132
        %v2134 = vpop.xlane.xlu0 %2133
        %v2135 = vrcp.pop %v2131
        %v2136 = vrcp.pop %v2134
        %v2137 = vmul.f32 %v2126, %v2135
        %v2138 = vmul.f32 %v2128, %v2136
        %v2140 = vsel %vm673, %v2137, 0
        %v2143 = vsel %vm673, %v2138, 0
        %2145 = vmatprep.subr.mxu0 0.0
        %2146 = vmatpush1.msra.mxu0 0.0
        %2147 = vmatprep.subr.mxu0 0.0
        %2148 = vmatpush1.msra.mxu0 0.0
        %2149 = vmatprep.subr.mxu0 0.0
        %2150 = vmatpush1.msra.mxu0 0.0
        %2151 = vmatprep.subr.mxu0 0.0
        %2152 = vmatpush1.msra.mxu0 0.0
        %2153 = vmatprep.subr.mxu0 0.0
        %2154 = vmatpush1.msra.mxu0 0.0
        %2155 = vmatprep.subr.mxu0 0.0
        %2156 = vmatpush1.msra.mxu0 0.0
        %2157 = vmatprep.subr.mxu0 0.0
        %2158 = vmatpush1.msra.mxu0 0.0
        %2159 = vmatprep.subr.mxu0 0.0
        %2160 = vmatpush1.msra.mxu0 0.0
        %2161 = vmatprep.subr.mxu0 0.0
        %2162 = vmatpush1.msra.mxu0 0.0
        %2163 = vmatprep.subr.mxu0 0.0
        %2164 = vmatpush1.msra.mxu0 0.0
        %2165 = vmatprep.subr.mxu0 0.0
        %2166 = vmatpush1.msra.mxu0 0.0
        %2167 = vmatprep.subr.mxu0 0.0
        %2168 = vmatpush1.msra.mxu0 0.0
        %2169 = vmatprep.subr.mxu0 0.0
        %2170 = vmatpush1.msra.mxu0 0.0
        %2171 = vmatprep.subr.mxu0 0.0
        %2172 = vmatpush1.msra.mxu0 0.0
        %2173 = vmatprep.subr.mxu0 0.0
        %2174 = vmatpush1.msra.mxu0 %v2022
        %2175 = vmatprep.subr.mxu0 0.0
        %2176 = vmatpush1.msra.mxu0 %v2018
        %2177 = vmatprep.subr.mxu0 0.0
        %2178 = vmatpush2.msra.mxu0 0.0
        %2179 = vmatprep.subr.mxu0 0.0
        %2180 = vmatpush2.msra.mxu0 0.0
        %2181 = vmatprep.subr.mxu0 0.0
        %2182 = vmatpush2.msra.mxu0 0.0
        %2183 = vmatprep.subr.mxu0 0.0
        %2184 = vmatpush2.msra.mxu0 0.0
        %2185 = vmatprep.subr.mxu0 0.0
        %2186 = vmatpush2.msra.mxu0 0.0
        %2187 = vmatprep.subr.mxu0 0.0
        %2188 = vmatpush2.msra.mxu0 0.0
        %2189 = vmatprep.subr.mxu0 0.0
        %2190 = vmatpush2.msra.mxu0 0.0
        %2191 = vmatprep.subr.mxu0 0.0
        %2192 = vmatpush2.msra.mxu0 0.0
        %2193 = vmatprep.subr.mxu0 0.0
        %2194 = vmatpush2.msra.mxu0 0.0
        %2195 = vmatprep.subr.mxu0 0.0
        %2196 = vmatpush2.msra.mxu0 0.0
        %2197 = vmatprep.subr.mxu0 0.0
        %2198 = vmatpush2.msra.mxu0 0.0
        %2199 = vmatprep.subr.mxu0 0.0
        %2200 = vmatpush2.msra.mxu0 0.0
        %2201 = vmatprep.subr.mxu0 0.0
        %2202 = vmatpush2.msra.mxu0 0.0
        %2203 = vmatprep.subr.mxu0 0.0
        %2204 = vmatpush2.msra.mxu0 0.0
        %2205 = vmatprep.subr.mxu0 0.0
        %2206 = vmatpush2.msra.mxu0 0.0
        %2207 = vmatprep.subr.mxu0 0.0
        %2208 = vmatpush2.msra.mxu0 0.0
        %2209 = vmatprep.mubr.f32.mxu0 0.0
        %2210 = vmatmul.mubr.f32.gmra.mxu0 %v2140
        %v2211 = vpop.f32.mrf.mxu0
        %v2212 = vadd.f32 0.0, %v2211
        %v2213 = vpop.f32.mrf.mxu0
        %2214 = vmatprep.mubr.f32.mxu0 0.0
        %2215 = vmatmul.mubr.f32.gmra.mxu0 %v2143
        %v2216 = vpop.f32.mrf.mxu0
        %v2217 = vadd.f32 0.0, %v2216
        %v2218 = vpop.f32.mrf.mxu0
        %2219 = vdwg.mxu0
        %2220 = vrot.lane.b32.xlu0 %v2016, 112
        %v2221 = vpop.permute.xlu0 %2220
        %2222 = vrot.lane.b32.xlu0 %v2020, 112
        %v2223 = vpop.permute.xlu0 %2222
        %2224 = vrot.lane.b32.xlu0 %v2016, 48
        %v2225 = vpop.permute.xlu0 %2224
        %2226 = vrot.lane.b32.xlu0 %v2020, 48
        %v2227 = vpop.permute.xlu0 %2226
        %v2228 = vsel %vm673, %v2221, 0
        %v2230 = vsel %vm673, %v2223, 0
        %v2232 = vsel %vm673, %v2225, 0
        %v2234 = vsel %vm673, %v2227, 0
        %2236 = vmatprep.subr.mxu0 0.0
        %2237 = vmatpush1.xpose.msra.mxu0 0.0
        %2238 = vmatprep.subr.mxu0 0.0
        %2239 = vmatpush1.xpose.msra.mxu0 0.0
        %2240 = vmatprep.subr.mxu0 0.0
        %2241 = vmatpush1.xpose.msra.mxu0 0.0
        %2242 = vmatprep.subr.mxu0 0.0
        %2243 = vmatpush1.xpose.msra.mxu0 0.0
        %2244 = vmatprep.subr.mxu0 0.0
        %2245 = vmatpush1.xpose.msra.mxu0 0.0
        %2246 = vmatprep.subr.mxu0 0.0
        %2247 = vmatpush1.xpose.msra.mxu0 0.0
        %2248 = vmatprep.subr.mxu0 0.0
        %2249 = vmatpush1.xpose.msra.mxu0 0.0
        %2250 = vmatprep.subr.mxu0 0.0
        %2251 = vmatpush1.xpose.msra.mxu0 0.0
        %2252 = vmatprep.subr.mxu0 0.0
        %2253 = vmatpush1.xpose.msra.mxu0 0.0
        %2254 = vmatprep.subr.mxu0 0.0
        %2255 = vmatpush1.xpose.msra.mxu0 0.0
        %2256 = vmatprep.subr.mxu0 0.0
        %2257 = vmatpush1.xpose.msra.mxu0 0.0
        %2258 = vmatprep.subr.mxu0 0.0
        %2259 = vmatpush1.xpose.msra.mxu0 0.0
        %2260 = vmatprep.subr.mxu0 0.0
        %2261 = vmatpush1.xpose.msra.mxu0 0.0
        %2262 = vmatprep.subr.mxu0 0.0
        %2263 = vmatpush1.xpose.msra.mxu0 0.0
        %2264 = vmatprep.subr.mxu0 0.0
        %2265 = vmatpush1.xpose.msra.mxu0 %v2234
        %2266 = vmatprep.subr.mxu0 0.0
        %2267 = vmatpush1.xpose.msra.mxu0 %v2232
        %2268 = vmatprep.subr.mxu0 0.0
        %2269 = vmatpush2.xpose.msra.mxu0 0.0
        %2270 = vmatprep.subr.mxu0 0.0
        %2271 = vmatpush2.xpose.msra.mxu0 0.0
        %2272 = vmatprep.subr.mxu0 0.0
        %2273 = vmatpush2.xpose.msra.mxu0 0.0
        %2274 = vmatprep.subr.mxu0 0.0
        %2275 = vmatpush2.xpose.msra.mxu0 0.0
        %2276 = vmatprep.subr.mxu0 0.0
        %2277 = vmatpush2.xpose.msra.mxu0 0.0
        %2278 = vmatprep.subr.mxu0 0.0
        %2279 = vmatpush2.xpose.msra.mxu0 0.0
        %2280 = vmatprep.subr.mxu0 0.0
        %2281 = vmatpush2.xpose.msra.mxu0 0.0
        %2282 = vmatprep.subr.mxu0 0.0
        %2283 = vmatpush2.xpose.msra.mxu0 0.0
        %2284 = vmatprep.subr.mxu0 0.0
        %2285 = vmatpush2.xpose.msra.mxu0 0.0
        %2286 = vmatprep.subr.mxu0 0.0
        %2287 = vmatpush2.xpose.msra.mxu0 0.0
        %2288 = vmatprep.subr.mxu0 0.0
        %2289 = vmatpush2.xpose.msra.mxu0 0.0
        %2290 = vmatprep.subr.mxu0 0.0
        %2291 = vmatpush2.xpose.msra.mxu0 0.0
        %2292 = vmatprep.subr.mxu0 0.0
        %2293 = vmatpush2.xpose.msra.mxu0 0.0
        %2294 = vmatprep.subr.mxu0 0.0
        %2295 = vmatpush2.xpose.msra.mxu0 0.0
        %2296 = vmatprep.subr.mxu0 0.0
        %2297 = vmatpush2.xpose.msra.mxu0 0.0
        %2298 = vmatprep.subr.mxu0 0.0
        %2299 = vmatpush2.xpose.msra.mxu0 0.0
        %2300 = vmatprep.mubr.f32.mxu0 0.0
        %2301 = vmatmul.mubr.f32.gmra.mxu0 %v2228
        %v2302 = vpop.f32.mrf.mxu0
        %v2303 = vadd.f32 0.0, %v2302
        %v2304 = vpop.f32.mrf.mxu0
        %2305 = vmatprep.mubr.f32.mxu0 0.0
        %2306 = vmatmul.mubr.f32.gmra.mxu0 %v2230
        %v2307 = vpop.f32.mrf.mxu0
        %v2308 = vadd.f32 0.0, %v2307
        %v2309 = vpop.f32.mrf.mxu0
        %2310 = vdwg.mxu0
        %v2311 = vmul.f32 %v2303, 0.25
        %v2312 = vmul.f32 %v2308, 0.25
        %v2313 = vadd.f32 %v2311, %v317
        %v2314 = vadd.f32 %v2312, %v317
        %v2315 = vsel %vm673, %v2313, -inf
        %2316 = vmax.xlane.f32.xlu0 %v2315
        %v2317 = vpop.xlane.xlu0 %2316
        %v2318 = vsel %vm673, %v2314, -inf
        %2319 = vmax.xlane.f32.xlu0 %v2318
        %v2320 = vpop.xlane.xlu0 %2319
        %v2321 = vsub.f32 %v2313, %v2317
        %v2322 = vsub.f32 %v2314, %v2320
        %v2323 = vmul.f32 %v2321, 1.442695
        %v2324 = vpow.pop %v2323
        %v2325 = vmul.f32 %v2322, 1.442695
        %v2326 = vpow.pop %v2325
        %v2327 = vsel %vm673, %v2324, 0.0
        %2328 = vadd.xlane.f32.xlu0 %v2327
        %v2329 = vpop.xlane.xlu0 %2328
        %v2330 = vsel %vm673, %v2326, 0.0
        %2331 = vadd.xlane.f32.xlu0 %v2330
        %v2332 = vpop.xlane.xlu0 %2331
        %v2333 = vrcp.pop %v2329
        %v2334 = vrcp.pop %v2332
        %v2335 = vmul.f32 %v2324, %v2333
        %v2336 = vmul.f32 %v2326, %v2334
        %2339 = vrot.lane.b32.xlu0 %v2018, 112
        %v2340 = vpop.permute.xlu0 %2339
        %2341 = vrot.lane.b32.xlu0 %v2022, 112
        %v2342 = vpop.permute.xlu0 %2341
        %v2346 = vsel %vm673, %v2335, 0
        %v2349 = vsel %vm673, %v2336, 0
        %2351 = vmatprep.subr.mxu0 0.0
        %2352 = vmatpush1.msra.mxu0 0.0
        %2353 = vmatprep.subr.mxu0 0.0
        %2354 = vmatpush1.msra.mxu0 0.0
        %2355 = vmatprep.subr.mxu0 0.0
        %2356 = vmatpush1.msra.mxu0 0.0
        %2357 = vmatprep.subr.mxu0 0.0
        %2358 = vmatpush1.msra.mxu0 0.0
        %2359 = vmatprep.subr.mxu0 0.0
        %2360 = vmatpush1.msra.mxu0 0.0
        %2361 = vmatprep.subr.mxu0 0.0
        %2362 = vmatpush1.msra.mxu0 0.0
        %2363 = vmatprep.subr.mxu0 0.0
        %2364 = vmatpush1.msra.mxu0 0.0
        %2365 = vmatprep.subr.mxu0 0.0
        %2366 = vmatpush1.msra.mxu0 0.0
        %2367 = vmatprep.subr.mxu0 0.0
        %2368 = vmatpush1.msra.mxu0 0.0
        %2369 = vmatprep.subr.mxu0 0.0
        %2370 = vmatpush1.msra.mxu0 0.0
        %2371 = vmatprep.subr.mxu0 0.0
        %2372 = vmatpush1.msra.mxu0 0.0
        %2373 = vmatprep.subr.mxu0 0.0
        %2374 = vmatpush1.msra.mxu0 0.0
        %2375 = vmatprep.subr.mxu0 0.0
        %2376 = vmatpush1.msra.mxu0 0.0
        %2377 = vmatprep.subr.mxu0 0.0
        %2378 = vmatpush1.msra.mxu0 0.0
        %2379 = vmatprep.subr.mxu0 0.0
        %2380 = vmatpush1.msra.mxu0 %v2342
        %2381 = vmatprep.subr.mxu0 0.0
        %2382 = vmatpush1.msra.mxu0 %v2340
        %2383 = vmatprep.subr.mxu0 0.0
        %2384 = vmatpush2.msra.mxu0 0.0
        %2385 = vmatprep.subr.mxu0 0.0
        %2386 = vmatpush2.msra.mxu0 0.0
        %2387 = vmatprep.subr.mxu0 0.0
        %2388 = vmatpush2.msra.mxu0 0.0
        %2389 = vmatprep.subr.mxu0 0.0
        %2390 = vmatpush2.msra.mxu0 0.0
        %2391 = vmatprep.subr.mxu0 0.0
        %2392 = vmatpush2.msra.mxu0 0.0
        %2393 = vmatprep.subr.mxu0 0.0
        %2394 = vmatpush2.msra.mxu0 0.0
        %2395 = vmatprep.subr.mxu0 0.0
        %2396 = vmatpush2.msra.mxu0 0.0
        %2397 = vmatprep.subr.mxu0 0.0
        %2398 = vmatpush2.msra.mxu0 0.0
        %2399 = vmatprep.subr.mxu0 0.0
        %2400 = vmatpush2.msra.mxu0 0.0
        %2401 = vmatprep.subr.mxu0 0.0
        %2402 = vmatpush2.msra.mxu0 0.0
        %2403 = vmatprep.subr.mxu0 0.0
        %2404 = vmatpush2.msra.mxu0 0.0
        %2405 = vmatprep.subr.mxu0 0.0
        %2406 = vmatpush2.msra.mxu0 0.0
        %2407 = vmatprep.subr.mxu0 0.0
        %2408 = vmatpush2.msra.mxu0 0.0
        %2409 = vmatprep.subr.mxu0 0.0
        %2410 = vmatpush2.msra.mxu0 0.0
        %2411 = vmatprep.subr.mxu0 0.0
        %2412 = vmatpush2.msra.mxu0 0.0
        %2413 = vmatprep.subr.mxu0 0.0
        %2414 = vmatpush2.msra.mxu0 0.0
        %2415 = vmatprep.mubr.f32.mxu0 0.0
        %2416 = vmatmul.mubr.f32.gmra.mxu0 %v2346
        %v2417 = vpop.f32.mrf.mxu0
        %v2418 = vadd.f32 0.0, %v2417
        %v2419 = vpop.f32.mrf.mxu0
        %2420 = vmatprep.mubr.f32.mxu0 0.0
        %2421 = vmatmul.mubr.f32.gmra.mxu0 %v2349
        %v2422 = vpop.f32.mrf.mxu0
        %v2423 = vadd.f32 0.0, %v2422
        %v2424 = vpop.f32.mrf.mxu0
        %2425 = vdwg.mxu0
        %2426 = vrot.lane.b32.xlu0 %v2016, 96
        %v2427 = vpop.permute.xlu0 %2426
        %2428 = vrot.lane.b32.xlu0 %v2020, 96
        %v2429 = vpop.permute.xlu0 %2428
        %2430 = vrot.lane.b32.xlu0 %v2016, 32
        %v2431 = vpop.permute.xlu0 %2430
        %2432 = vrot.lane.b32.xlu0 %v2020, 32
        %v2433 = vpop.permute.xlu0 %2432
        %v2434 = vsel %vm673, %v2427, 0
        %v2436 = vsel %vm673, %v2429, 0
        %v2438 = vsel %vm673, %v2431, 0
        %v2440 = vsel %vm673, %v2433, 0
        %2442 = vmatprep.subr.mxu0 0.0
        %2443 = vmatpush1.xpose.msra.mxu0 0.0
        %2444 = vmatprep.subr.mxu0 0.0
        %2445 = vmatpush1.xpose.msra.mxu0 0.0
        %2446 = vmatprep.subr.mxu0 0.0
        %2447 = vmatpush1.xpose.msra.mxu0 0.0
        %2448 = vmatprep.subr.mxu0 0.0
        %2449 = vmatpush1.xpose.msra.mxu0 0.0
        %2450 = vmatprep.subr.mxu0 0.0
        %2451 = vmatpush1.xpose.msra.mxu0 0.0
        %2452 = vmatprep.subr.mxu0 0.0
        %2453 = vmatpush1.xpose.msra.mxu0 0.0
        %2454 = vmatprep.subr.mxu0 0.0
        %2455 = vmatpush1.xpose.msra.mxu0 0.0
        %2456 = vmatprep.subr.mxu0 0.0
        %2457 = vmatpush1.xpose.msra.mxu0 0.0
        %2458 = vmatprep.subr.mxu0 0.0
        %2459 = vmatpush1.xpose.msra.mxu0 0.0
        %2460 = vmatprep.subr.mxu0 0.0
        %2461 = vmatpush1.xpose.msra.mxu0 0.0
        %2462 = vmatprep.subr.mxu0 0.0
        %2463 = vmatpush1.xpose.msra.mxu0 0.0
        %2464 = vmatprep.subr.mxu0 0.0
        %2465 = vmatpush1.xpose.msra.mxu0 0.0
        %2466 = vmatprep.subr.mxu0 0.0
        %2467 = vmatpush1.xpose.msra.mxu0 0.0
        %2468 = vmatprep.subr.mxu0 0.0
        %2469 = vmatpush1.xpose.msra.mxu0 0.0
        %2470 = vmatprep.subr.mxu0 0.0
        %2471 = vmatpush1.xpose.msra.mxu0 %v2440
        %2472 = vmatprep.subr.mxu0 0.0
        %2473 = vmatpush1.xpose.msra.mxu0 %v2438
        %2474 = vmatprep.subr.mxu0 0.0
        %2475 = vmatpush2.xpose.msra.mxu0 0.0
        %2476 = vmatprep.subr.mxu0 0.0
        %2477 = vmatpush2.xpose.msra.mxu0 0.0
        %2478 = vmatprep.subr.mxu0 0.0
        %2479 = vmatpush2.xpose.msra.mxu0 0.0
        %2480 = vmatprep.subr.mxu0 0.0
        %2481 = vmatpush2.xpose.msra.mxu0 0.0
        %2482 = vmatprep.subr.mxu0 0.0
        %2483 = vmatpush2.xpose.msra.mxu0 0.0
        %2484 = vmatprep.subr.mxu0 0.0
        %2485 = vmatpush2.xpose.msra.mxu0 0.0
        %2486 = vmatprep.subr.mxu0 0.0
        %2487 = vmatpush2.xpose.msra.mxu0 0.0
        %2488 = vmatprep.subr.mxu0 0.0
        %2489 = vmatpush2.xpose.msra.mxu0 0.0
        %2490 = vmatprep.subr.mxu0 0.0
        %2491 = vmatpush2.xpose.msra.mxu0 0.0
        %2492 = vmatprep.subr.mxu0 0.0
        %2493 = vmatpush2.xpose.msra.mxu0 0.0
        %2494 = vmatprep.subr.mxu0 0.0
        %2495 = vmatpush2.xpose.msra.mxu0 0.0
        %2496 = vmatprep.subr.mxu0 0.0
        %2497 = vmatpush2.xpose.msra.mxu0 0.0
        %2498 = vmatprep.subr.mxu0 0.0
        %2499 = vmatpush2.xpose.msra.mxu0 0.0
        %2500 = vmatprep.subr.mxu0 0.0
        %2501 = vmatpush2.xpose.msra.mxu0 0.0
        %2502 = vmatprep.subr.mxu0 0.0
        %2503 = vmatpush2.xpose.msra.mxu0 0.0
        %2504 = vmatprep.subr.mxu0 0.0
        %2505 = vmatpush2.xpose.msra.mxu0 0.0
        %2506 = vmatprep.mubr.f32.mxu0 0.0
        %2507 = vmatmul.mubr.f32.gmra.mxu0 %v2434
        %v2508 = vpop.f32.mrf.mxu0
        %v2509 = vadd.f32 0.0, %v2508
        %v2510 = vpop.f32.mrf.mxu0
        %2511 = vmatprep.mubr.f32.mxu0 0.0
        %2512 = vmatmul.mubr.f32.gmra.mxu0 %v2436
        %v2513 = vpop.f32.mrf.mxu0
        %v2514 = vadd.f32 0.0, %v2513
        %v2515 = vpop.f32.mrf.mxu0
        %2516 = vdwg.mxu0
        %v2517 = vmul.f32 %v2509, 0.25
        %v2518 = vmul.f32 %v2514, 0.25
        %v2519 = vadd.f32 %v2517, %v317
        %v2520 = vadd.f32 %v2518, %v317
        %v2521 = vsel %vm673, %v2519, -inf
        %2522 = vmax.xlane.f32.xlu0 %v2521
        %v2523 = vpop.xlane.xlu0 %2522
        %v2524 = vsel %vm673, %v2520, -inf
        %2525 = vmax.xlane.f32.xlu0 %v2524
        %v2526 = vpop.xlane.xlu0 %2525
        %v2527 = vsub.f32 %v2519, %v2523
        %v2528 = vsub.f32 %v2520, %v2526
        %v2529 = vmul.f32 %v2527, 1.442695
        %v2530 = vpow.pop %v2529
        %v2531 = vmul.f32 %v2528, 1.442695
        %v2532 = vpow.pop %v2531
        %v2533 = vsel %vm673, %v2530, 0.0
        %2534 = vadd.xlane.f32.xlu0 %v2533
        %v2535 = vpop.xlane.xlu0 %2534
        %v2536 = vsel %vm673, %v2532, 0.0
        %2537 = vadd.xlane.f32.xlu0 %v2536
        %v2538 = vpop.xlane.xlu0 %2537
        %v2539 = vrcp.pop %v2535
        %v2540 = vrcp.pop %v2538
        %v2541 = vmul.f32 %v2530, %v2539
        %v2542 = vmul.f32 %v2532, %v2540
        %2543 = vrot.lane.b32.xlu0 %v2018, 96
        %v2544 = vpop.permute.xlu0 %2543
        %2545 = vrot.lane.b32.xlu0 %v2022, 96
        %v2546 = vpop.permute.xlu0 %2545
        %v2550 = vsel %vm673, %v2541, 0
        %v2553 = vsel %vm673, %v2542, 0
        %2555 = vmatprep.subr.mxu0 0.0
        %2556 = vmatpush1.msra.mxu0 0.0
        %2557 = vmatprep.subr.mxu0 0.0
        %2558 = vmatpush1.msra.mxu0 0.0
        %2559 = vmatprep.subr.mxu0 0.0
        %2560 = vmatpush1.msra.mxu0 0.0
        %2561 = vmatprep.subr.mxu0 0.0
        %2562 = vmatpush1.msra.mxu0 0.0
        %2563 = vmatprep.subr.mxu0 0.0
        %2564 = vmatpush1.msra.mxu0 0.0
        %2565 = vmatprep.subr.mxu0 0.0
        %2566 = vmatpush1.msra.mxu0 0.0
        %2567 = vmatprep.subr.mxu0 0.0
        %2568 = vmatpush1.msra.mxu0 0.0
        %2569 = vmatprep.subr.mxu0 0.0
        %2570 = vmatpush1.msra.mxu0 0.0
        %2571 = vmatprep.subr.mxu0 0.0
        %2572 = vmatpush1.msra.mxu0 0.0
        %2573 = vmatprep.subr.mxu0 0.0
        %2574 = vmatpush1.msra.mxu0 0.0
        %2575 = vmatprep.subr.mxu0 0.0
        %2576 = vmatpush1.msra.mxu0 0.0
        %2577 = vmatprep.subr.mxu0 0.0
        %2578 = vmatpush1.msra.mxu0 0.0
        %2579 = vmatprep.subr.mxu0 0.0
        %2580 = vmatpush1.msra.mxu0 0.0
        %2581 = vmatprep.subr.mxu0 0.0
        %2582 = vmatpush1.msra.mxu0 0.0
        %2583 = vmatprep.subr.mxu0 0.0
        %2584 = vmatpush1.msra.mxu0 %v2546
        %2585 = vmatprep.subr.mxu0 0.0
        %2586 = vmatpush1.msra.mxu0 %v2544
        %2587 = vmatprep.subr.mxu0 0.0
        %2588 = vmatpush2.msra.mxu0 0.0
        %2589 = vmatprep.subr.mxu0 0.0
        %2590 = vmatpush2.msra.mxu0 0.0
        %2591 = vmatprep.subr.mxu0 0.0
        %2592 = vmatpush2.msra.mxu0 0.0
        %2593 = vmatprep.subr.mxu0 0.0
        %2594 = vmatpush2.msra.mxu0 0.0
        %2595 = vmatprep.subr.mxu0 0.0
        %2596 = vmatpush2.msra.mxu0 0.0
        %2597 = vmatprep.subr.mxu0 0.0
        %2598 = vmatpush2.msra.mxu0 0.0
        %2599 = vmatprep.subr.mxu0 0.0
        %2600 = vmatpush2.msra.mxu0 0.0
        %2601 = vmatprep.subr.mxu0 0.0
        %2602 = vmatpush2.msra.mxu0 0.0
        %2603 = vmatprep.subr.mxu0 0.0
        %2604 = vmatpush2.msra.mxu0 0.0
        %2605 = vmatprep.subr.mxu0 0.0
        %2606 = vmatpush2.msra.mxu0 0.0
        %2607 = vmatprep.subr.mxu0 0.0
        %2608 = vmatpush2.msra.mxu0 0.0
        %2609 = vmatprep.subr.mxu0 0.0
        %2610 = vmatpush2.msra.mxu0 0.0
        %2611 = vmatprep.subr.mxu0 0.0
        %2612 = vmatpush2.msra.mxu0 0.0
        %2613 = vmatprep.subr.mxu0 0.0
        %2614 = vmatpush2.msra.mxu0 0.0
        %2615 = vmatprep.subr.mxu0 0.0
        %2616 = vmatpush2.msra.mxu0 0.0
        %2617 = vmatprep.subr.mxu0 0.0
        %2618 = vmatpush2.msra.mxu0 0.0
        %2619 = vmatprep.mubr.f32.mxu0 0.0
        %2620 = vmatmul.mubr.f32.gmra.mxu0 %v2550
        %v2621 = vpop.f32.mrf.mxu0
        %v2622 = vadd.f32 0.0, %v2621
        %v2623 = vpop.f32.mrf.mxu0
        %2624 = vmatprep.mubr.f32.mxu0 0.0
        %2625 = vmatmul.mubr.f32.gmra.mxu0 %v2553
        %v2626 = vpop.f32.mrf.mxu0
        %v2627 = vadd.f32 0.0, %v2626
        %v2628 = vpop.f32.mrf.mxu0
        %2629 = vdwg.mxu0
        %2630 = vrot.lane.b32.xlu0 %v2016, 80
        %v2631 = vpop.permute.xlu0 %2630
        %2632 = vrot.lane.b32.xlu0 %v2020, 80
        %v2633 = vpop.permute.xlu0 %2632
        %2634 = vrot.lane.b32.xlu0 %v2016, 16
        %v2635 = vpop.permute.xlu0 %2634
        %2636 = vrot.lane.b32.xlu0 %v2020, 16
        %v2637 = vpop.permute.xlu0 %2636
        %v2638 = vsel %vm673, %v2631, 0
        %v2640 = vsel %vm673, %v2633, 0
        %v2642 = vsel %vm673, %v2635, 0
        %v2644 = vsel %vm673, %v2637, 0
        %2646 = vmatprep.subr.mxu0 0.0
        %2647 = vmatpush1.xpose.msra.mxu0 0.0
        %2648 = vmatprep.subr.mxu0 0.0
        %2649 = vmatpush1.xpose.msra.mxu0 0.0
        %2650 = vmatprep.subr.mxu0 0.0
        %2651 = vmatpush1.xpose.msra.mxu0 0.0
        %2652 = vmatprep.subr.mxu0 0.0
        %2653 = vmatpush1.xpose.msra.mxu0 0.0
        %2654 = vmatprep.subr.mxu0 0.0
        %2655 = vmatpush1.xpose.msra.mxu0 0.0
        %2656 = vmatprep.subr.mxu0 0.0
        %2657 = vmatpush1.xpose.msra.mxu0 0.0
        %2658 = vmatprep.subr.mxu0 0.0
        %2659 = vmatpush1.xpose.msra.mxu0 0.0
        %2660 = vmatprep.subr.mxu0 0.0
        %2661 = vmatpush1.xpose.msra.mxu0 0.0
        %2662 = vmatprep.subr.mxu0 0.0
        %2663 = vmatpush1.xpose.msra.mxu0 0.0
        %2664 = vmatprep.subr.mxu0 0.0
        %2665 = vmatpush1.xpose.msra.mxu0 0.0
        %2666 = vmatprep.subr.mxu0 0.0
        %2667 = vmatpush1.xpose.msra.mxu0 0.0
        %2668 = vmatprep.subr.mxu0 0.0
        %2669 = vmatpush1.xpose.msra.mxu0 0.0
        %2670 = vmatprep.subr.mxu0 0.0
        %2671 = vmatpush1.xpose.msra.mxu0 0.0
        %2672 = vmatprep.subr.mxu0 0.0
        %2673 = vmatpush1.xpose.msra.mxu0 0.0
        %2674 = vmatprep.subr.mxu0 0.0
        %2675 = vmatpush1.xpose.msra.mxu0 %v2644
        %2676 = vmatprep.subr.mxu0 0.0
        %2677 = vmatpush1.xpose.msra.mxu0 %v2642
        %2678 = vmatprep.subr.mxu0 0.0
        %2679 = vmatpush2.xpose.msra.mxu0 0.0
        %2680 = vmatprep.subr.mxu0 0.0
        %2681 = vmatpush2.xpose.msra.mxu0 0.0
        %2682 = vmatprep.subr.mxu0 0.0
        %2683 = vmatpush2.xpose.msra.mxu0 0.0
        %2684 = vmatprep.subr.mxu0 0.0
        %2685 = vmatpush2.xpose.msra.mxu0 0.0
        %2686 = vmatprep.subr.mxu0 0.0
        %2687 = vmatpush2.xpose.msra.mxu0 0.0
        %2688 = vmatprep.subr.mxu0 0.0
        %2689 = vmatpush2.xpose.msra.mxu0 0.0
        %2690 = vmatprep.subr.mxu0 0.0
        %2691 = vmatpush2.xpose.msra.mxu0 0.0
        %2692 = vmatprep.subr.mxu0 0.0
        %2693 = vmatpush2.xpose.msra.mxu0 0.0
        %2694 = vmatprep.subr.mxu0 0.0
        %2695 = vmatpush2.xpose.msra.mxu0 0.0
        %2696 = vmatprep.subr.mxu0 0.0
        %2697 = vmatpush2.xpose.msra.mxu0 0.0
        %2698 = vmatprep.subr.mxu0 0.0
        %2699 = vmatpush2.xpose.msra.mxu0 0.0
        %2700 = vmatprep.subr.mxu0 0.0
        %2701 = vmatpush2.xpose.msra.mxu0 0.0
        %2702 = vmatprep.subr.mxu0 0.0
        %2703 = vmatpush2.xpose.msra.mxu0 0.0
        %2704 = vmatprep.subr.mxu0 0.0
        %2705 = vmatpush2.xpose.msra.mxu0 0.0
        %2706 = vmatprep.subr.mxu0 0.0
        %2707 = vmatpush2.xpose.msra.mxu0 0.0
        %2708 = vmatprep.subr.mxu0 0.0
        %2709 = vmatpush2.xpose.msra.mxu0 0.0
        %2710 = vmatprep.mubr.f32.mxu0 0.0
        %2711 = vmatmul.mubr.f32.gmra.mxu0 %v2638
        %v2712 = vpop.f32.mrf.mxu0
        %v2713 = vadd.f32 0.0, %v2712
        %v2714 = vpop.f32.mrf.mxu0
        %2715 = vmatprep.mubr.f32.mxu0 0.0
        %2716 = vmatmul.mubr.f32.gmra.mxu0 %v2640
        %v2717 = vpop.f32.mrf.mxu0
        %v2718 = vadd.f32 0.0, %v2717
        %v2719 = vpop.f32.mrf.mxu0
        %2720 = vdwg.mxu0
        %v2721 = vmul.f32 %v2713, 0.25
        %v2722 = vmul.f32 %v2718, 0.25
        %v2723 = vadd.f32 %v2721, %v317
        %v2724 = vadd.f32 %v2722, %v317
        %v2725 = vsel %vm673, %v2723, -inf
        %2726 = vmax.xlane.f32.xlu0 %v2725
        %v2727 = vpop.xlane.xlu0 %2726
        %v2728 = vsel %vm673, %v2724, -inf
        %2729 = vmax.xlane.f32.xlu0 %v2728
        %v2730 = vpop.xlane.xlu0 %2729
        %v2731 = vsub.f32 %v2723, %v2727
        %v2732 = vsub.f32 %v2724, %v2730
        %v2733 = vmul.f32 %v2731, 1.442695
        %v2734 = vpow.pop %v2733
        %v2735 = vmul.f32 %v2732, 1.442695
        %v2736 = vpow.pop %v2735
        %v2737 = vsel %vm673, %v2734, 0.0
        %2738 = vadd.xlane.f32.xlu0 %v2737
        %v2739 = vpop.xlane.xlu0 %2738
        %v2740 = vsel %vm673, %v2736, 0.0
        %2741 = vadd.xlane.f32.xlu0 %v2740
        %v2742 = vpop.xlane.xlu0 %2741
        %v2743 = vrcp.pop %v2739
        %v2744 = vrcp.pop %v2742
        %v2745 = vmul.f32 %v2734, %v2743
        %v2746 = vmul.f32 %v2736, %v2744
        %2747 = vrot.lane.b32.xlu0 %v2018, 80
        %v2748 = vpop.permute.xlu0 %2747
        %2749 = vrot.lane.b32.xlu0 %v2022, 80
        %v2750 = vpop.permute.xlu0 %2749
        %v2754 = vsel %vm673, %v2745, 0
        %v2757 = vsel %vm673, %v2746, 0
        %2759 = vmatprep.subr.mxu0 0.0
        %2760 = vmatpush1.msra.mxu0 0.0
        %2761 = vmatprep.subr.mxu0 0.0
        %2762 = vmatpush1.msra.mxu0 0.0
        %2763 = vmatprep.subr.mxu0 0.0
        %2764 = vmatpush1.msra.mxu0 0.0
        %2765 = vmatprep.subr.mxu0 0.0
        %2766 = vmatpush1.msra.mxu0 0.0
        %2767 = vmatprep.subr.mxu0 0.0
        %2768 = vmatpush1.msra.mxu0 0.0
        %2769 = vmatprep.subr.mxu0 0.0
        %2770 = vmatpush1.msra.mxu0 0.0
        %2771 = vmatprep.subr.mxu0 0.0
        %2772 = vmatpush1.msra.mxu0 0.0
        %2773 = vmatprep.subr.mxu0 0.0
        %2774 = vmatpush1.msra.mxu0 0.0
        %2775 = vmatprep.subr.mxu0 0.0
        %2776 = vmatpush1.msra.mxu0 0.0
        %2777 = vmatprep.subr.mxu0 0.0
        %2778 = vmatpush1.msra.mxu0 0.0
        %2779 = vmatprep.subr.mxu0 0.0
        %2780 = vmatpush1.msra.mxu0 0.0
        %2781 = vmatprep.subr.mxu0 0.0
        %2782 = vmatpush1.msra.mxu0 0.0
        %2783 = vmatprep.subr.mxu0 0.0
        %2784 = vmatpush1.msra.mxu0 0.0
        %2785 = vmatprep.subr.mxu0 0.0
        %2786 = vmatpush1.msra.mxu0 0.0
        %2787 = vmatprep.subr.mxu0 0.0
        %2788 = vmatpush1.msra.mxu0 %v2750
        %2789 = vmatprep.subr.mxu0 0.0
        %2790 = vmatpush1.msra.mxu0 %v2748
        %2791 = vmatprep.subr.mxu0 0.0
        %2792 = vmatpush2.msra.mxu0 0.0
        %2793 = vmatprep.subr.mxu0 0.0
        %2794 = vmatpush2.msra.mxu0 0.0
        %2795 = vmatprep.subr.mxu0 0.0
        %2796 = vmatpush2.msra.mxu0 0.0
        %2797 = vmatprep.subr.mxu0 0.0
        %2798 = vmatpush2.msra.mxu0 0.0
        %2799 = vmatprep.subr.mxu0 0.0
        %2800 = vmatpush2.msra.mxu0 0.0
        %2801 = vmatprep.subr.mxu0 0.0
        %2802 = vmatpush2.msra.mxu0 0.0
        %2803 = vmatprep.subr.mxu0 0.0
        %2804 = vmatpush2.msra.mxu0 0.0
        %2805 = vmatprep.subr.mxu0 0.0
        %2806 = vmatpush2.msra.mxu0 0.0
        %2807 = vmatprep.subr.mxu0 0.0
        %2808 = vmatpush2.msra.mxu0 0.0
        %2809 = vmatprep.subr.mxu0 0.0
        %2810 = vmatpush2.msra.mxu0 0.0
        %2811 = vmatprep.subr.mxu0 0.0
        %2812 = vmatpush2.msra.mxu0 0.0
        %2813 = vmatprep.subr.mxu0 0.0
        %2814 = vmatpush2.msra.mxu0 0.0
        %2815 = vmatprep.subr.mxu0 0.0
        %2816 = vmatpush2.msra.mxu0 0.0
        %2817 = vmatprep.subr.mxu0 0.0
        %2818 = vmatpush2.msra.mxu0 0.0
        %2819 = vmatprep.subr.mxu0 0.0
        %2820 = vmatpush2.msra.mxu0 0.0
        %2821 = vmatprep.subr.mxu0 0.0
        %2822 = vmatpush2.msra.mxu0 0.0
        %2823 = vmatprep.mubr.f32.mxu0 0.0
        %2824 = vmatmul.mubr.f32.gmra.mxu0 %v2754
        %v2825 = vpop.f32.mrf.mxu0
        %v2826 = vadd.f32 0.0, %v2825
        %v2827 = vpop.f32.mrf.mxu0
        %2828 = vmatprep.mubr.f32.mxu0 0.0
        %2829 = vmatmul.mubr.f32.gmra.mxu0 %v2757
        %v2830 = vpop.f32.mrf.mxu0
        %v2831 = vadd.f32 0.0, %v2830
        %v2832 = vpop.f32.mrf.mxu0
        %2833 = vdwg.mxu0
        %2836 = vrot.lane.b32.xlu0 %v2418, 16
        %v2837 = vpop.permute.xlu0 %2836
        %2838 = vrot.lane.b32.xlu0 %v2423, 16
        %v2839 = vpop.permute.xlu0 %2838
        %2844 = vrot.lane.b32.xlu0 %v2622, 32
        %v2845 = vpop.permute.xlu0 %2844
        %2846 = vrot.lane.b32.xlu0 %v2627, 32
        %v2847 = vpop.permute.xlu0 %2846
        %2852 = vrot.lane.b32.xlu0 %v2826, 48
        %v2853 = vpop.permute.xlu0 %2852
        %2854 = vrot.lane.b32.xlu0 %v2831, 48
        %v2855 = vpop.permute.xlu0 %2854
        %v2858 = vsel %vm673, %v2212, %v2837
        %v2859 = vsel %vm673, %v2217, %v2839
        %v2860 = vsel %vm1504, %v2858, %v2845
        %v2861 = vsel %vm1504, %v2859, %v2847
        %v2862 = vsel %vm1507, %v2860, %v2853
        %v2863 = vsel %vm1507, %v2861, %v2855
        %v2864 = vpack.c.bf16 %v2863, %v2862
        %s2865 = scalar_lea.vmem %s5, 32
        %v2866 = vld [vmem:[%s2865] sm:$0xf]
        %v2867 = vld [vmem:[%s2865 + $0x4] sm:$0xf]
        %v2868 = vld [vmem:[%s2865 + $0x8] sm:$0xf]
        %v2869 = vld [vmem:[%s2865 + $0xc] sm:$0xf]
        %v2870 = vld [vmem:[%s2865 + $0x10] sm:$0xf]
        %v2871 = vld [vmem:[%s2865 + $0x14] sm:$0xf]
        %v2872 = vld [vmem:[%s2865 + $0x18] sm:$0xf]
        %v2873 = vld [vmem:[%s2865 + $0x1c] sm:$0xf]
        %v2874 = vlaneseq
        %v2875 = vshrl.u32 %v2874, 7
        %v2876 = vsub.s32 1, %v2875
        %v2877 = vrot.slane %v1918, %v2876
        %v2886 = vunpack.c.l.b16 %v2866
        %v2887 = vunpack.c.l.b16 %v2867
        %v2888 = vunpack.c.l.b16 %v2868
        %v2889 = vunpack.c.l.b16 %v2869
        %v2890 = vunpack.c.l.b16 %v2870
        %v2891 = vunpack.c.l.b16 %v2871
        %v2892 = vunpack.c.l.b16 %v2872
        %v2893 = vunpack.c.l.b16 %v2873
        %v2894 = vpack.c.b16 %v2887, %v2886
        %v2895 = vpack.c.b16 %v2889, %v2888
        %v2896 = vpack.c.b16 %v2891, %v2890
        %v2897 = vpack.c.b16 %v2893, %v2892
        %v2903 = vsel %vm620, %v2864, 0
        %2905 = vmatprep.subr.bf16.mxu0 0
        %2906 = vmatpush1.bf16.msra.mxu0 0
        %2907 = vmatprep.subr.bf16.mxu0 0
        %2908 = vmatpush1.bf16.msra.mxu0 0
        %2909 = vmatprep.subr.bf16.mxu0 0
        %2910 = vmatpush1.bf16.msra.mxu0 0
        %2911 = vmatprep.subr.bf16.mxu0 0
        %2912 = vmatpush1.bf16.msra.mxu0 0
        %2913 = vmatprep.subr.bf16.mxu0 0
        %2914 = vmatpush1.bf16.msra.mxu0 %v2897
        %2915 = vmatprep.subr.bf16.mxu0 0
        %2916 = vmatpush1.bf16.msra.mxu0 %v2896
        %2917 = vmatprep.subr.bf16.mxu0 0
        %2918 = vmatpush1.bf16.msra.mxu0 %v2895
        %2919 = vmatprep.subr.bf16.mxu0 0
        %2920 = vmatpush1.bf16.msra.mxu0 %v2894
        %2921 = vmatprep.subr.bf16.mxu0 0
        %2922 = vmatpush2.bf16.msra.mxu0 0
        %2923 = vmatprep.subr.bf16.mxu0 0
        %2924 = vmatpush2.bf16.msra.mxu0 0
        %2925 = vmatprep.subr.bf16.mxu0 0
        %2926 = vmatpush2.bf16.msra.mxu0 0
        %2927 = vmatprep.subr.bf16.mxu0 0
        %2928 = vmatpush2.bf16.msra.mxu0 0
        %2929 = vmatprep.subr.bf16.mxu0 0
        %2930 = vmatpush2.bf16.msra.mxu0 0
        %2931 = vmatprep.subr.bf16.mxu0 0
        %2932 = vmatpush2.bf16.msra.mxu0 0
        %2933 = vmatprep.subr.bf16.mxu0 0
        %2934 = vmatpush2.bf16.msra.mxu0 0
        %2935 = vmatprep.subr.bf16.mxu0 0
        %2936 = vmatpush2.bf16.msra.mxu0 0
        %2937 = vmatprep.mubr.bf16.mxu0 0
        %2938 = vmatmul.mubr.bf16.gmra.mxu0 %v2903
        %v2939 = vpop.f32.mrf.mxu0
        %v2940 = vadd.f32 %v2877, %v2939
        %v2941 = vpop.f32.mrf.mxu0
        %v2942 = vpop.f32.mrf.mxu0
        %v2943 = vadd.f32 %v2877, %v2942
        %v2944 = vpop.f32.mrf.mxu0
        %2945 = vdwg.mxu0
        %v2946 = vadd.f32 %v1915, %v2940
        %v2947 = vadd.f32 %v1916, %v2943
        %v2948 = vsel %vm620, %v2946, 0.0
        %2949 = vadd.xlane.f32.xlu0 %v2948
        %v2950 = vpop.xlane.xlu0 %2949
        %v2951 = vsel %vm620, %v2947, 0.0
        %2952 = vadd.xlane.f32.xlu0 %v2951
        %v2953 = vpop.xlane.xlu0 %2952
        %v2954 = vmul.f32 %v2950, %v1599
        %v2955 = vmul.f32 %v2953, %v1599
        %v2956 = vsub.f32 %v2946, %v2954
        %v2957 = vsub.f32 %v2947, %v2955
        %v2958 = vmul.f32 %v2956, %v2956
        %v2959 = vmul.f32 %v2957, %v2957
        %v2960 = vsel %vm620, %v2958, 0.0
        %2961 = vadd.xlane.f32.xlu0 %v2960
        %v2962 = vpop.xlane.xlu0 %2961
        %v2963 = vsel %vm620, %v2959, 0.0
        %2964 = vadd.xlane.f32.xlu0 %v2963
        %v2965 = vpop.xlane.xlu0 %2964
        %v2966 = vmul.f32 %v2962, %v1599
        %v2967 = vmul.f32 %v2965, %v1599
        %v2968 = vadd.f32 %v2966, 1e-05
        %v2969 = vadd.f32 %v2967, 1e-05
        %v2970 = vrsqrt.pop %v2968
        %v2971 = vrsqrt.pop %v2969
        %v2972 = vmul.f32 %v2956, %v2970
        %v2973 = vmul.f32 %v2957, %v2971
        %v2974 = vlaneseq
        %v2975 = vshrl.u32 %v2974, 7
        %v2976 = vsub.s32 2, %v2975
        %v2977 = vrot.slane %v1918, %v2976
        %v2978 = vmul.f32 %v2972, %v2977
        %v2979 = vmul.f32 %v2973, %v2977
        %v2980 = vlaneseq
        %v2981 = vshrl.u32 %v2980, 7
        %v2982 = vsub.s32 3, %v2981
        %v2983 = vrot.slane %v1918, %v2982
        %v2984 = vadd.f32 %v2978, %v2983
        %v2985 = vadd.f32 %v2979, %v2983
        %v2986 = vpack.c.bf16 %v2985, %v2984
        %s2987 = scalar_lea.vmem %s6, 32
        %v2988 = vld [vmem:[%s2987] sm:$0xf]
        %v2989 = vld [vmem:[%s2987 + $0x4] sm:$0xf]
        %v2990 = vld [vmem:[%s2987 + $0x8] sm:$0xf]
        %v2991 = vld [vmem:[%s2987 + $0xc] sm:$0xf]
        %v2992 = vld [vmem:[%s2987 + $0x10] sm:$0xf]
        %v2993 = vld [vmem:[%s2987 + $0x14] sm:$0xf]
        %v2994 = vld [vmem:[%s2987 + $0x18] sm:$0xf]
        %v2995 = vld [vmem:[%s2987 + $0x1c] sm:$0xf]
        %v2996 = vlaneseq
        %v2997 = vshrl.u32 %v2996, 7
        %v2998 = vsub.s32 4, %v2997
        %v2999 = vrot.slane %v1918, %v2998
        %v3008 = vunpack.c.l.b16 %v2988
        %v3009 = vunpack.c.l.b16 %v2989
        %v3010 = vunpack.c.l.b16 %v2990
        %v3011 = vunpack.c.l.b16 %v2991
        %v3012 = vunpack.c.l.b16 %v2992
        %v3013 = vunpack.c.l.b16 %v2993
        %v3014 = vunpack.c.l.b16 %v2994
        %v3015 = vunpack.c.l.b16 %v2995
        %v3016 = vpack.c.b16 %v3009, %v3008
        %v3017 = vpack.c.b16 %v3011, %v3010
        %v3018 = vpack.c.b16 %v3013, %v3012
        %v3019 = vpack.c.b16 %v3015, %v3014
        %v3025 = vsel %vm620, %v2986, 0
        %3027 = vmatprep.subr.bf16.mxu0 0
        %3028 = vmatpush1.bf16.msra.mxu0 0
        %3029 = vmatprep.subr.bf16.mxu0 0
        %3030 = vmatpush1.bf16.msra.mxu0 0
        %3031 = vmatprep.subr.bf16.mxu0 0
        %3032 = vmatpush1.bf16.msra.mxu0 0
        %3033 = vmatprep.subr.bf16.mxu0 0
        %3034 = vmatpush1.bf16.msra.mxu0 0
        %3035 = vmatprep.subr.bf16.mxu0 0
        %3036 = vmatpush1.bf16.msra.mxu0 %v3019
        %3037 = vmatprep.subr.bf16.mxu0 0
        %3038 = vmatpush1.bf16.msra.mxu0 %v3018
        %3039 = vmatprep.subr.bf16.mxu0 0
        %3040 = vmatpush1.bf16.msra.mxu0 %v3017
        %3041 = vmatprep.subr.bf16.mxu0 0
        %3042 = vmatpush1.bf16.msra.mxu0 %v3016
        %3043 = vmatprep.subr.bf16.mxu0 0
        %3044 = vmatpush2.bf16.msra.mxu0 0
        %3045 = vmatprep.subr.bf16.mxu0 0
        %3046 = vmatpush2.bf16.msra.mxu0 0
        %3047 = vmatprep.subr.bf16.mxu0 0
        %3048 = vmatpush2.bf16.msra.mxu0 0
        %3049 = vmatprep.subr.bf16.mxu0 0
        %3050 = vmatpush2.bf16.msra.mxu0 0
        %3051 = vmatprep.subr.bf16.mxu0 0
        %3052 = vmatpush2.bf16.msra.mxu0 0
        %3053 = vmatprep.subr.bf16.mxu0 0
        %3054 = vmatpush2.bf16.msra.mxu0 0
        %3055 = vmatprep.subr.bf16.mxu0 0
        %3056 = vmatpush2.bf16.msra.mxu0 0
        %3057 = vmatprep.subr.bf16.mxu0 0
        %3058 = vmatpush2.bf16.msra.mxu0 0
        %3059 = vmatprep.mubr.bf16.mxu0 0
        %3060 = vmatmul.mubr.bf16.gmra.mxu0 %v3025
        %v3061 = vpop.f32.mrf.mxu0
        %v3062 = vadd.f32 %v2999, %v3061
        %v3063 = vpop.f32.mrf.mxu0
        %v3064 = vpop.f32.mrf.mxu0
        %v3065 = vadd.f32 %v2999, %v3064
        %v3066 = vpop.f32.mrf.mxu0
        %3067 = vdwg.mxu0
        %v3068 = vmul.f32 %v3062, 0.5
        %v3069 = vmul.f32 %v3065, 0.5
        %v3070 = vmul.f32 %v3062, 0.70710677
        %v3071 = vmul.f32 %v3065, 0.70710677
        %v3072 = vand.u32 2147483647, %v3070
        %v3073 = vand.u32 2147483647, %v3071
        %v3074 = vmul.f32 %v3072, 0.3275911
        %v3075 = vmul.f32 %v3073, 0.3275911
        %v3076 = vadd.f32 %v3074, 1.0
        %v3077 = vadd.f32 %v3075, 1.0
        %v3078 = vrcp.pop %v3076
        %v3079 = vmul.f32 1.0, %v3078
        %v3080 = vrcp.pop %v3077
        %v3081 = vmul.f32 1.0, %v3080
        %v3082 = vmul.f32 %v3079, 1.0614054
        %v3083 = vmul.f32 %v3081, 1.0614054
        %v3084 = vadd.f32 %v3082, -1.4531521
        %v3085 = vadd.f32 %v3083, -1.4531521
        %v3086 = vmul.f32 %v3084, %v3079
        %v3087 = vmul.f32 %v3085, %v3081
        %v3088 = vadd.f32 %v3086, 1.4214138
        %v3089 = vadd.f32 %v3087, 1.4214138
        %v3090 = vmul.f32 %v3088, %v3079
        %v3091 = vmul.f32 %v3089, %v3081
        %v3092 = vadd.f32 %v3090, -0.28449672
        %v3093 = vadd.f32 %v3091, -0.28449672
        %v3094 = vmul.f32 %v3092, %v3079
        %v3095 = vmul.f32 %v3093, %v3081
        %v3096 = vadd.f32 %v3094, 0.2548296
        %v3097 = vadd.f32 %v3095, 0.2548296
        %v3098 = vmul.f32 %v3096, %v3079
        %v3099 = vmul.f32 %v3097, %v3081
        %v3100 = vsub.f32 0.0, %v3072
        %v3101 = vsub.f32 0.0, %v3073
        %v3102 = vmul.f32 %v3100, %v3072
        %v3103 = vmul.f32 %v3101, %v3073
        %v3104 = vmul.f32 %v3102, 1.442695
        %v3105 = vpow.pop %v3104
        %v3106 = vmul.f32 %v3103, 1.442695
        %v3107 = vpow.pop %v3106
        %v3108 = vmul.f32 %v3098, %v3105
        %v3109 = vmul.f32 %v3099, %v3107
        %v3110 = vsub.f32 1.0, %v3108
        %v3111 = vsub.f32 1.0, %v3109
        %vm3112 = vcmp.ge.f32.partialorder %v3070, 0.0
        %vm3113 = vcmp.ge.f32.partialorder %v3071, 0.0
        %v3114 = vsub.f32 0.0, %v3110
        %v3115 = vsub.f32 0.0, %v3111
        %v3116 = vsel %vm3112, %v3110, %v3114
        %v3117 = vsel %vm3113, %v3111, %v3115
        %v3118 = vadd.f32 %v3116, 1.0
        %v3119 = vadd.f32 %v3117, 1.0
        %v3120 = vmul.f32 %v3068, %v3118
        %v3121 = vmul.f32 %v3069, %v3119
        %v3122 = vpack.c.bf16 %v3121, %v3120
        %s3123 = scalar_lea.vmem %s7, 64
        %v3124 = vld [vmem:[%s3123] sm:$0xf]
        %v3125 = vld [vmem:[%s3123 + $0x4] sm:$0xf]
        %v3126 = vld [vmem:[%s3123 + $0x8] sm:$0xf]
        %v3127 = vld [vmem:[%s3123 + $0xc] sm:$0xf]
        %v3128 = vld [vmem:[%s3123 + $0x10] sm:$0xf]
        %v3129 = vld [vmem:[%s3123 + $0x14] sm:$0xf]
        %v3130 = vld [vmem:[%s3123 + $0x18] sm:$0xf]
        %v3131 = vld [vmem:[%s3123 + $0x1c] sm:$0xf]
        %v3132 = vld [vmem:[%s3123 + $0x20] sm:$0xf]
        %v3133 = vld [vmem:[%s3123 + $0x24] sm:$0xf]
        %v3134 = vld [vmem:[%s3123 + $0x28] sm:$0xf]
        %v3135 = vld [vmem:[%s3123 + $0x2c] sm:$0xf]
        %v3136 = vld [vmem:[%s3123 + $0x30] sm:$0xf]
        %v3137 = vld [vmem:[%s3123 + $0x34] sm:$0xf]
        %v3138 = vld [vmem:[%s3123 + $0x38] sm:$0xf]
        %v3139 = vld [vmem:[%s3123 + $0x3c] sm:$0xf]
        %v3140 = vlaneseq
        %v3141 = vshrl.u32 %v3140, 7
        %v3142 = vsub.s32 5, %v3141
        %v3143 = vrot.slane %v1918, %v3142
        %v3160 = vunpack.c.l.b16 %v3124
        %v3161 = vunpack.c.l.b16 %v3125
        %v3162 = vunpack.c.l.b16 %v3126
        %v3163 = vunpack.c.l.b16 %v3127
        %v3164 = vunpack.c.l.b16 %v3128
        %v3165 = vunpack.c.l.b16 %v3129
        %v3166 = vunpack.c.l.b16 %v3130
        %v3167 = vunpack.c.l.b16 %v3131
        %v3168 = vunpack.c.l.b16 %v3132
        %v3169 = vunpack.c.l.b16 %v3133
        %v3170 = vunpack.c.l.b16 %v3134
        %v3171 = vunpack.c.l.b16 %v3135
        %v3172 = vunpack.c.l.b16 %v3136
        %v3173 = vunpack.c.l.b16 %v3137
        %v3174 = vunpack.c.l.b16 %v3138
        %v3175 = vunpack.c.l.b16 %v3139
        %v3176 = vpack.c.b16 %v3161, %v3160
        %v3177 = vpack.c.b16 %v3163, %v3162
        %v3178 = vpack.c.b16 %v3165, %v3164
        %v3179 = vpack.c.b16 %v3167, %v3166
        %v3180 = vpack.c.b16 %v3169, %v3168
        %v3181 = vpack.c.b16 %v3171, %v3170
        %v3182 = vpack.c.b16 %v3173, %v3172
        %v3183 = vpack.c.b16 %v3175, %v3174
        %3192 = vmatprep.subr.bf16.mxu0 0
        %3193 = vmatpush1.bf16.msra.mxu0 %v3183
        %3194 = vmatprep.subr.bf16.mxu0 0
        %3195 = vmatpush1.bf16.msra.mxu0 %v3182
        %3196 = vmatprep.subr.bf16.mxu0 0
        %3197 = vmatpush1.bf16.msra.mxu0 %v3181
        %3198 = vmatprep.subr.bf16.mxu0 0
        %3199 = vmatpush1.bf16.msra.mxu0 %v3180
        %3200 = vmatprep.subr.bf16.mxu0 0
        %3201 = vmatpush1.bf16.msra.mxu0 %v3179
        %3202 = vmatprep.subr.bf16.mxu0 0
        %3203 = vmatpush1.bf16.msra.mxu0 %v3178
        %3204 = vmatprep.subr.bf16.mxu0 0
        %3205 = vmatpush1.bf16.msra.mxu0 %v3177
        %3206 = vmatprep.subr.bf16.mxu0 0
        %3207 = vmatpush1.bf16.msra.mxu0 %v3176
        %3208 = vmatprep.subr.bf16.mxu0 0
        %3209 = vmatpush2.bf16.msra.mxu0 0
        %3210 = vmatprep.subr.bf16.mxu0 0
        %3211 = vmatpush2.bf16.msra.mxu0 0
        %3212 = vmatprep.subr.bf16.mxu0 0
        %3213 = vmatpush2.bf16.msra.mxu0 0
        %3214 = vmatprep.subr.bf16.mxu0 0
        %3215 = vmatpush2.bf16.msra.mxu0 0
        %3216 = vmatprep.subr.bf16.mxu0 0
        %3217 = vmatpush2.bf16.msra.mxu0 0
        %3218 = vmatprep.subr.bf16.mxu0 0
        %3219 = vmatpush2.bf16.msra.mxu0 0
        %3220 = vmatprep.subr.bf16.mxu0 0
        %3221 = vmatpush2.bf16.msra.mxu0 0
        %3222 = vmatprep.subr.bf16.mxu0 0
        %3223 = vmatpush2.bf16.msra.mxu0 0
        %3224 = vmatprep.mubr.bf16.mxu0 0
        %3225 = vmatmul.mubr.bf16.gmra.mxu0 %v3122
        %v3226 = vpop.f32.mrf.mxu0
        %v3227 = vadd.f32 %v3143, %v3226
        %v3228 = vpop.f32.mrf.mxu0
        %v3229 = vpop.f32.mrf.mxu0
        %v3230 = vpop.f32.mrf.mxu0
        %3231 = vdwg.mxu0
        %v3232 = vadd.f32 %v2984, %v3227
        %v3233 = vsel %vm620, %v3232, 0.0
        %3234 = vadd.xlane.f32.xlu0 %v3233
        %v3235 = vpop.xlane.xlu0 %3234
        %v3236 = vmul.f32 %v3235, %v1599
        %v3237 = vsub.f32 %v3232, %v3236
        %v3238 = vmul.f32 %v3237, %v3237
        %v3239 = vsel %vm620, %v3238, 0.0
        %3240 = vadd.xlane.f32.xlu0 %v3239
        %v3241 = vpop.xlane.xlu0 %3240
        %v3242 = vmul.f32 %v3241, %v1599
        %v3243 = vadd.f32 %v3242, 1e-05
        %v3244 = vrsqrt.pop %v3243
        %v3245 = vmul.f32 %v3237, %v3244
        %v3246 = vlaneseq
        %v3247 = vshrl.u32 %v3246, 7
        %v3248 = vsub.s32 6, %v3247
        %v3249 = vrot.slane %v1918, %v3248
        %v3250 = vmul.f32 %v3245, %v3249
        %v3251 = vlaneseq
        %v3252 = vshrl.u32 %v3251, 7
        %v3253 = vsub.s32 7, %v3252
        %v3254 = vrot.slane %v1918, %v3253
        %v3255 = vadd.f32 %v3250, %v3254
        %s3256 = scalar_lea.vmem %s8, 32
        %v3257 = vld [vmem:[%s3256] ss:$0 sm:$0xff]
        %v3258 = vld [vmem:[%s3256 + $0x1] ss:$0 sm:$0xff]
        %vm3259 = vcmask 516096
        %v3260 = vsel %vm3259, %v3255, 0.0
        %3261 = vadd.xlane.f32.xlu0 %v3260
        %v3262 = vpop.xlane.xlu0 %3261
        %v3263 = vmul.f32 %v3262, %v1599
        %v3264 = vsub.f32 %v3255, %v3263
        %v3265 = vmul.f32 %v3264, %v3264
        %v3266 = vsel %vm3259, %v3265, 0.0
        %3267 = vadd.xlane.f32.xlu0 %v3266
        %v3268 = vpop.xlane.xlu0 %3267
        %v3269 = vmul.f32 %v3268, %v1599
        %v3270 = vadd.f32 %v3269, 1e-05
        %v3271 = vrsqrt.pop %v3270
        %v3272 = vmul.f32 %v3264, %v3271
        %v3273 = vmul.f32 %v3272, %v3257
        %v3274 = vadd.f32 %v3273, %v3258
        %3275 = vst.msk [vmem:[%s304] sm:$0x1] %vm3259, %v3274
        %s3276 = sand.u32 %s210, 1
        %s3277 = scalar_lea.sflag [#allocation5], %s3276
        %s3278 = sand.u32 %s210, 1
        %s3279 = scalar_lea.vmem [#allocation4], %s3278
        // Predicated region
        $region53: #{style_classification_forward.1} parent=51 // pred_check
          %p3280 = pneg %p220
        $region54: #{style_classification_forward.1} parent=51 // pred_check_branch
          %3282 = sbr.rel (%p3280) target = $region56
        $region55: #{style_classification_forward.1} parent=51 // pred_region
          %s3284 = ssub.s32 16, 16
          %3285 = vsyncadd %s3277, %s3284
          %s3286 = smul.addr %s29, 16
          %s3287 = scalar_lea.hbm %s9, %s3286
          %s3289 = sshll.u32 %s3279, 4
          %s3290 = int_to_ptr.vmem [resolvable:$true] %s3289
          %3292 = dma.vmem_to_hbm [thread:$0]  %s3290, 16, %s3287, %s3277
        $region56: #{style_classification_forward.1} parent=51 // pred_fallthru
          _
      $region52: #{style_classification_forward.1} parent=5 // pred_fallthru
        _
      %p3293 = scmp.le.s32.totalorder 2, %s24
      // Predicated region
      $region57: #{style_classification_forward.1} parent=5 // pred_check
        %p3294 = pneg %p3293
      $region58: #{style_classification_forward.1} parent=5 // pred_check_branch
        %3296 = sbr.rel (%p3294) target = $region60
      $region59: #{style_classification_forward.1} parent=5 // pred_region
        %s3297 = ssub.s32 %s24, 2
        // Predicated region
        $region61: #{style_classification_forward.1} parent=59 // pred_check
          %p3298 = pneg %p226
        $region62: #{style_classification_forward.1} parent=59 // pred_check_branch
          %3300 = sbr.rel (%p3298) target = $region64
        $region63: #{style_classification_forward.1} parent=59 // pred_region
          %s3301 = sand.u32 %s211, 1
          %s3302 = scalar_lea.sflag [#allocation5], %s3301
          %s3303 = sand.u32 %s211, 1
          %s3304 = scalar_lea.vmem [#allocation4], %s3303
          %3305 = dma.done %s3302, 16
        $region64: #{style_classification_forward.1} parent=59 // pred_fallthru
          _
      $region60: #{style_classification_forward.1} parent=5 // pred_fallthru
        _
    $region6: #{style_classification_forward.1} parent=1 // loop_footer
      %s28 = sadd.s32 1, %s24
    $region7: #{style_classification_forward.1} parent=1 // loop_footer_branch
      %23 = sbr.rel target = $region3
    $region8: #{style_classification_forward.1} parent=1 // loop_exit
      _
    %3306 = vsyncpa [#allocation5], 1
    %s3307 = scalar_lea.sflag [#allocation5], 1
    %3308 = vsyncpa %s3307, 1

</llo_original>
